<compile_context>
chip_gen: v6e
topology: v6e:2x2x1
jax: 0.10.0
libtpu: 0.0.40
codegen_flags: <defaults>
</compile_context>

<pallas_src>
import math
import numpy as np
import jax
import jax.numpy as jnp
from jax.experimental import pallas as pl
from jax.experimental.pallas import tpu as pltpu

# ---- model / problem sizes (small, consistent with the module) ----
D_MODEL = 32
D_FF = 64
HEADS = 4
SEQ = 8                       # power of two (row_s uses a bitmask)
BATCH = 2
D2 = D_MODEL // 2             # 16  (right_conv / sep_conv out channels)
D4 = D_MODEL * 4              # 128 (left_conv out channels)
DK = D_MODEL // HEADS         # 8
EPS = 1e-6                    # Norm eps (matches the torch Norm impl)
ROWS = BATCH * SEQ            # 16 flattened (batch, seq) rows

# ---- packed-parameter layout -----------------------------------------------
# w_d (32, 768): lane-concat of every weight with input dim d_model
C_GLU = 0                     # [g1_w | g2_w]                   cols   0: 64
C_LC = 64                     # left_conv                       cols  64:192
C_RC = 192                    # 3 conv taps, each padded to D4  cols 192:576
C_QKV = 576                   # [q_w | k_w | v_w]               cols 576:672
C_O = 672                     # attention output projection     cols 672:704
C_F1 = 704                    # ff linear 1                     cols 704:768
W_D_COLS = 768

# vec (32, 128): one row per bias / norm parameter / depthwise tap
(V_NG_A, V_NG_B, V_GLU_B, V_NC1_A, V_NC1_B, V_LC_B, V_RC_B, V_NC2_A, V_NC2_B,
 V_DW_B, V_PW_B, V_NA_A, V_NA_B, V_QKV_B, V_O_B, V_NF_A, V_NF_B, V_F1_B,
 V_F2_B, V_DW_W) = range(20)           # V_DW_W .. V_DW_W+8 are the 9 dw taps
VEC_ROWS = 32
VEC_COLS = 128


def _layer_norm(x, alpha, bias):
    # torch Norm: alpha * (x - mean) / (std + eps) + bias, std UNBIASED (N-1)
    mu = jnp.mean(x, axis=-1, keepdims=True)
    var = jnp.sum((x - mu) ** 2, axis=-1, keepdims=True) / (x.shape[-1] - 1)
    return alpha * (x - mu) / (jnp.sqrt(var) + EPS) + bias


def encoder_layer_kernel(x_ref, cmask_ref, abias_ref,
                         w_d_ref, w_misc_ref, vec_ref, out_ref):
    x = x_ref[...]                 # (ROWS, D)
    cmask = cmask_ref[...]         # (ROWS, 1)   conv mask, one scalar per row
    abias = abias_ref[...]         # (ROWS, ROWS) block-diag additive attn bias

    def vrow(i, w):                # (1, w) row of the packed vector slab
        return vec_ref[i:i + 1, 0:w]

    # sequence position of each flattened row (SEQ is a power of two)
    row_s = jax.lax.broadcasted_iota(jnp.int32, (ROWS, 1), 0) & (SEQ - 1)

    # ---------------- GLU block ----------------
    residual = x
    xn = _layer_norm(x, vrow(V_NG_A, D_MODEL), vrow(V_NG_B, D_MODEL))
    vg = (jnp.dot(xn, w_d_ref[:, C_GLU:C_GLU + 2 * D_MODEL],
                  preferred_element_type=jnp.float32)
          + vrow(V_GLU_B, 2 * D_MODEL))
    x = residual + vg[:, 0:D_MODEL] * jax.nn.sigmoid(vg[:, D_MODEL:2 * D_MODEL])

    # ---------------- conv block ----------------
    residual = x
    xn = _layer_norm(x, vrow(V_NC1_A, D_MODEL), vrow(V_NC1_B, D_MODEL))
    xm = jnp.where(cmask == 0, 0.0, xn)                      # masked_fill

    # left branch: Linear(D -> 4D) + ReLU (dropout = identity)
    left = jnp.maximum(
        jnp.dot(xm, w_d_ref[:, C_LC:C_LC + D4],
                preferred_element_type=jnp.float32) + vrow(V_LC_B, D4), 0.0)

    # right branch: Conv1d(D, D/2, k=3, pad=1) over the sequence axis + ReLU.
    # One matmul against all three taps (each zero-padded to D4 output lanes,
    # which realizes F.pad(right, (0, 4D - D/2)) for free), then sublane rolls
    # plus boundary masks implement the shifted taps / zero padding.
    y = jnp.dot(xm, w_d_ref[:, C_RC:C_RC + 3 * D4],
                preferred_element_type=jnp.float32)          # (ROWS, 3*D4)
    y_prev = pltpu.roll(y[:, 0:D4], 1, 0)                    # tap0 applied to x[s-1]
    y_next = pltpu.roll(y[:, 2 * D4:3 * D4], ROWS - 1, 0)    # tap2 applied to x[s+1]
    right = (jnp.where(row_s > 0, y_prev, 0.0)
             + y[:, D4:2 * D4]
             + jnp.where(row_s < SEQ - 1, y_next, 0.0)
             + vrow(V_RC_B, D4))
    right = jnp.maximum(right, 0.0)

    hidden = _layer_norm(left + right, vrow(V_NC2_A, D4), vrow(V_NC2_B, D4))
    hidden = jnp.where(cmask == 0, 0.0, hidden)

    # SeparableConv1D(4D -> D/2, k=9, pad=4): depthwise along seq (rolls +
    # boundary masks), then pointwise matmul whose weight is zero-padded to D
    # output lanes so F.pad(hidden, (0, D/2)) is free.
    acc = jnp.zeros((ROWS, D4), jnp.float32)
    for k in range(9):                                       # static unroll
        off = k - 4
        dwk = vec_ref[V_DW_W + k:V_DW_W + k + 1, 0:D4]
        if off == 0:
            acc = acc + hidden * dwk
        else:
            sh = pltpu.roll(hidden, (-off) % ROWS, 0)        # row r <- hidden[r+off]
            valid = (row_s + off >= 0) & (row_s + off < SEQ)
            acc = acc + jnp.where(valid, sh, 0.0) * dwk
    dw_out = acc + vrow(V_DW_B, D4)
    pw_out = (jnp.dot(dw_out, w_misc_ref[0:D4, :],
                      preferred_element_type=jnp.float32)
              + vrow(V_PW_B, D_MODEL))
    x = residual + pw_out

    # ---------------- attention block ----------------
    residual = x
    xn = _layer_norm(x, vrow(V_NA_A, D_MODEL), vrow(V_NA_B, D_MODEL))
    qkv = (jnp.dot(xn, w_d_ref[:, C_QKV:C_QKV + 3 * D_MODEL],
                   preferred_element_type=jnp.float32)
           + vrow(V_QKV_B, 3 * D_MODEL))
    scale = 1.0 / math.sqrt(DK)
    attn = jnp.zeros((ROWS, D_MODEL), jnp.float32)
    for h in range(HEADS):                                   # static unroll
        qh = qkv[:, h * DK:(h + 1) * DK]
        kh = qkv[:, D_MODEL + h * DK:D_MODEL + (h + 1) * DK]
        vh = qkv[:, 2 * D_MODEL + h * DK:2 * D_MODEL + (h + 1) * DK]
        # block-diagonal additive bias keeps the two batches independent while
        # one (ROWS x ROWS) matmul serves the whole head.
        sc = jnp.dot(qh, kh.T, preferred_element_type=jnp.float32) * scale + abias
        sc = sc - jnp.max(sc, axis=-1, keepdims=True)
        e = jnp.exp(sc)
        p = e * pl.reciprocal(jnp.sum(e, axis=-1, keepdims=True), approx=True)
        oh = jnp.dot(p, vh, preferred_element_type=jnp.float32)
        # accumulate the output projection per head (no lane concat of heads)
        attn = attn + jnp.dot(oh, w_d_ref[h * DK:(h + 1) * DK, C_O:C_O + D_MODEL],
                              preferred_element_type=jnp.float32)
    x = residual + attn + vrow(V_O_B, D_MODEL)

    # ---------------- feed-forward block ----------------
    residual = x
    xn = _layer_norm(x, vrow(V_NF_A, D_MODEL), vrow(V_NF_B, D_MODEL))
    h1 = jnp.maximum(
        jnp.dot(xn, w_d_ref[:, C_F1:C_F1 + D_FF],
                preferred_element_type=jnp.float32) + vrow(V_F1_B, D_FF), 0.0)
    h2 = (jnp.dot(h1, w_misc_ref[D4:D4 + D_FF, :],
                  preferred_element_type=jnp.float32) + vrow(V_F2_B, D_MODEL))
    out_ref[...] = residual + h2


# ---------------- host-side parameter packing ----------------
def pack_params(p):
    zcol = lambda r, c: jnp.zeros((r, c), jnp.float32)

    rc_pad = [jnp.concatenate([p[f"rc_w{k}"], zcol(D_MODEL, D4 - D2)], axis=1)
              for k in range(3)]                              # (32, 128) each
    w_d = jnp.concatenate(
        [p["g1_w"], p["g2_w"], p["lc_w"]] + rc_pad
        + [p["q_w"], p["k_w"], p["v_w"], p["o_w"], p["f1_w"]], axis=1)
    assert w_d.shape == (D_MODEL, W_D_COLS)

    pw_pad = jnp.concatenate([p["pw_w"], zcol(D4, D_MODEL - D2)], axis=1)
    w_misc = jnp.concatenate([pw_pad, p["f2_w"]], axis=0)     # (192, 32)

    def row(v):
        v = v.reshape(1, -1)
        pad = VEC_COLS - v.shape[1]
        return jnp.concatenate([v, zcol(1, pad)], axis=1) if pad else v

    rows = [row(p["ng_a"]), row(p["ng_b"]),
            row(jnp.concatenate([p["g1_b"], p["g2_b"]], axis=1)),
            row(p["nc1_a"]), row(p["nc1_b"]),
            row(p["lc_b"]), row(p["rc_b"]),
            row(p["nc2_a"]), row(p["nc2_b"]),
            row(p["dw_b"]), row(p["pw_b"]),
            row(p["na_a"]), row(p["na_b"]),
            row(jnp.concatenate([p["q_b"], p["k_b"], p["v_b"]], axis=1)),
            row(p["o_b"]),
            row(p["nf_a"]), row(p["nf_b"]),
            row(p["f1_b"]), row(p["f2_b"])]
    rows += [row(p["dw_w"][k:k + 1, :]) for k in range(9)]
    rows += [zcol(1, VEC_COLS)] * (VEC_ROWS - len(rows))
    vec = jnp.concatenate(rows, axis=0)                       # (32, 128)
    return w_d, w_misc, vec


def encoder_layer(x, mask, params):
    B, S, D = x.shape
    R = B * S
    x_flat = x.reshape(R, D)
    key_mask = mask[:, -1, :]                                 # (B, S), torch mask[:, -1, :]
    cmask = key_mask.reshape(R, 1)
    # block-diagonal additive attention bias: -1e9 off-batch / masked keys
    bids = jnp.arange(R, dtype=jnp.int32) // S
    valid = (bids[:, None] == bids[None, :]) & (key_mask.reshape(R)[None, :] != 0)
    abias = jnp.where(valid, 0.0, -1e9).astype(jnp.float32)   # (R, R)

    w_d, w_misc, vec = pack_params(params)

    out_flat = pl.pallas_call(
        encoder_layer_kernel,
        out_shape=jax.ShapeDtypeStruct((R, D), jnp.float32),
    )(x_flat, cmask, abias, w_d, w_misc, vec)
    return out_flat.reshape(B, S, D)


# ---------------- deterministic parameter construction ----------------
def make_params(key):
    keys = iter(jax.random.split(key, 64))

    def w(shape, scale=0.1):
        return (jax.random.normal(next(keys), shape, jnp.float32) * scale)

    p = {}
    p["ng_a"] = jnp.ones((1, D_MODEL), jnp.float32)
    p["ng_b"] = jnp.zeros((1, D_MODEL), jnp.float32)
    p["g1_w"] = w((D_MODEL, D_MODEL)); p["g1_b"] = w((1, D_MODEL), 0.01)
    p["g2_w"] = w((D_MODEL, D_MODEL)); p["g2_b"] = w((1, D_MODEL), 0.01)
    p["nc1_a"] = jnp.ones((1, D_MODEL), jnp.float32)
    p["nc1_b"] = jnp.zeros((1, D_MODEL), jnp.float32)
    p["nc2_a"] = jnp.ones((1, D4), jnp.float32)
    p["nc2_b"] = jnp.zeros((1, D4), jnp.float32)
    p["lc_w"] = w((D_MODEL, D4)); p["lc_b"] = w((1, D4), 0.01)
    p["rc_w0"] = w((D_MODEL, D2)); p["rc_w1"] = w((D_MODEL, D2))
    p["rc_w2"] = w((D_MODEL, D2)); p["rc_b"] = w((1, D2), 0.01)
    p["dw_w"] = w((9, D4)); p["dw_b"] = w((1, D4), 0.01)
    p["pw_w"] = w((D4, D2)); p["pw_b"] = w((1, D2), 0.01)
    p["na_a"] = jnp.ones((1, D_MODEL), jnp.float32)
    p["na_b"] = jnp.zeros((1, D_MODEL), jnp.float32)
    for nm in ("q", "k", "v", "o"):
        p[nm + "_w"] = w((D_MODEL, D_MODEL))
        p[nm + "_b"] = w((1, D_MODEL), 0.01)
    p["nf_a"] = jnp.ones((1, D_MODEL), jnp.float32)
    p["nf_b"] = jnp.zeros((1, D_MODEL), jnp.float32)
    p["f1_w"] = w((D_MODEL, D_FF)); p["f1_b"] = w((1, D_FF), 0.01)
    p["f2_w"] = w((D_FF, D_MODEL)); p["f2_b"] = w((1, D_MODEL), 0.01)
    return p


# ---------------- pure-JAX reference (mirrors the torch forward) ----------------
def reference(x, mask, p):
    def norm(x, a, b):
        mu = jnp.mean(x, -1, keepdims=True)
        var = jnp.sum((x - mu) ** 2, -1, keepdims=True) / (x.shape[-1] - 1)
        return a * (x - mu) / (jnp.sqrt(var) + EPS) + b

    B, S, D = x.shape
    cm = jnp.transpose(mask[:, -1:, :], (0, 2, 1))            # (B, S, 1)

    residual = x
    xn = norm(x, p["ng_a"], p["ng_b"])
    x = residual + (xn @ p["g1_w"] + p["g1_b"]) * jax.nn.sigmoid(xn @ p["g2_w"] + p["g2_b"])

    residual = x
    xn = norm(x, p["nc1_a"], p["nc1_b"])
    xm = jnp.where(cm == 0, 0.0, xn)
    left = jax.nn.relu(xm @ p["lc_w"] + p["lc_b"])
    xp = jnp.pad(xm, ((0, 0), (1, 1), (0, 0)))
    right = (xp[:, 0:S] @ p["rc_w0"] + xp[:, 1:S + 1] @ p["rc_w1"]
             + xp[:, 2:S + 2] @ p["rc_w2"] + p["rc_b"])
    right = jax.nn.relu(right)
    right = jnp.pad(right, ((0, 0), (0, 0), (0, D4 - D2)))
    hidden = norm(left + right, p["nc2_a"], p["nc2_b"])
    hidden = jnp.where(cm == 0, 0.0, hidden)
    hp = jnp.pad(hidden, ((0, 0), (4, 4), (0, 0)))
    acc = jnp.zeros((B, S, D4), jnp.float32)
    for kk in range(9):
        acc = acc + hp[:, kk:kk + S, :] * p["dw_w"][kk][None, None, :]
    dw_out = acc + p["dw_b"]
    pw_out = dw_out @ p["pw_w"] + p["pw_b"]
    hidden = jnp.pad(pw_out, ((0, 0), (0, 0), (0, D - D2)))
    x = residual + hidden

    residual = x
    xn = norm(x, p["na_a"], p["na_b"])
    q = (xn @ p["q_w"] + p["q_b"]).reshape(B, S, HEADS, DK).transpose(0, 2, 1, 3)
    k = (xn @ p["k_w"] + p["k_b"]).reshape(B, S, HEADS, DK).transpose(0, 2, 1, 3)
    v = (xn @ p["v_w"] + p["v_b"]).reshape(B, S, HEADS, DK).transpose(0, 2, 1, 3)
    sc = jnp.einsum("bhqd,bhkd->bhqk", q, k) / math.sqrt(DK)
    sc = jnp.where(mask[:, None, :, :] == 0, -1e9, sc)
    pa = jax.nn.softmax(sc, axis=-1)
    o = jnp.einsum("bhqk,bhkd->bhqd", pa, v).transpose(0, 2, 1, 3).reshape(B, S, D)
    x = residual + (o @ p["o_w"] + p["o_b"])

    residual = x
    xn = norm(x, p["nf_a"], p["nf_b"])
    h = jax.nn.relu(xn @ p["f1_w"] + p["f1_b"]) @ p["f2_w"] + p["f2_b"]
    return residual + h


if __name__ == "__main__":
    key = jax.random.PRNGKey(0)
    kx, kp = jax.random.split(key)
    x = jax.random.normal(kx, (BATCH, SEQ, D_MODEL), jnp.float32)
    mask_np = np.ones((BATCH, 1, SEQ), np.float32)
    mask_np[1, 0, -2:] = 0.0                  # exercise masking on one batch
    mask = jnp.asarray(mask_np)
    params = make_params(kp)

    out = jax.block_until_ready(encoder_layer(x, mask, params))
    ref = jax.block_until_ready(reference(x, mask, params))

    assert out.shape == (BATCH, SEQ, D_MODEL)
    assert np.all(np.isfinite(np.asarray(out)))
    np.testing.assert_allclose(np.asarray(out), np.asarray(ref), rtol=5e-2, atol=5e-2)

    print("KERNEL_OK")
</pallas_src>

<mosaic_0001>
module attributes {stable_mosaic.version = 11 : i64} {
  func.func @encoder_layer_kernel(%arg0: memref<16x32xf32, #tpu.memory_space<vmem>>, %arg1: memref<16x1xf32, #tpu.memory_space<vmem>>, %arg2: memref<16x16xf32, #tpu.memory_space<vmem>>, %arg3: memref<32x768xf32, #tpu.memory_space<vmem>>, %arg4: memref<192x32xf32, #tpu.memory_space<vmem>>, %arg5: memref<32x128xf32, #tpu.memory_space<vmem>>, %arg6: memref<16x32xf32, #tpu.memory_space<vmem>>) attributes {dimension_semantics = [], scalar_prefetch = 0 : i64, scratch_operands = 0 : i64, tpu.core_type = #tpu.core_type<tc>} {
    %c0 = arith.constant 0 : index
    %c0_0 = arith.constant 0 : index
    %0 = vector.load %arg0[%c0, %c0_0] : memref<16x32xf32, #tpu.memory_space<vmem>>, vector<16x32xf32>
    %c0_1 = arith.constant 0 : index
    %c0_2 = arith.constant 0 : index
    %1 = vector.load %arg1[%c0_1, %c0_2] : memref<16x1xf32, #tpu.memory_space<vmem>>, vector<16x1xf32>
    %c0_3 = arith.constant 0 : index
    %c0_4 = arith.constant 0 : index
    %2 = vector.load %arg2[%c0_3, %c0_4] : memref<16x16xf32, #tpu.memory_space<vmem>>, vector<16x16xf32>
    %3 = tpu.iota {dimensions = array<i32: 0>} : vector<16x1xi32>
    %c7_i32 = arith.constant 7 : i32
    %4 = vector.broadcast %c7_i32 : i32 to vector<16x1xi32>
    %5 = arith.andi %3, %4 : vector<16x1xi32>
    %c0_5 = arith.constant 0 : index
    %c0_6 = arith.constant 0 : index
    %6 = vector.load %arg5[%c0_5, %c0_6] : memref<32x128xf32, #tpu.memory_space<vmem>>, vector<1x32xf32>
    %c1 = arith.constant 1 : index
    %c0_7 = arith.constant 0 : index
    %7 = vector.load %arg5[%c1, %c0_7] : memref<32x128xf32, #tpu.memory_space<vmem>>, vector<1x32xf32>
    %cst = arith.constant dense<0.000000e+00> : vector<16xf32>
    %8 = vector.multi_reduction <add>, %0, %cst [1] : vector<16x32xf32> to vector<16xf32>
    %9 = vector.shape_cast %8 : vector<16xf32> to vector<16x1xf32>
    %cst_8 = arith.constant 3.200000e+01 : f32
    %10 = vector.broadcast %cst_8 : f32 to vector<16x1xf32>
    %11 = arith.divf %9, %10 : vector<16x1xf32>
    %12 = vector.broadcast %11 : vector<16x1xf32> to vector<16x32xf32>
    %13 = arith.subf %0, %12 : vector<16x32xf32>
    %14 = arith.mulf %13, %13 : vector<16x32xf32>
    %cst_9 = arith.constant dense<0.000000e+00> : vector<16xf32>
    %15 = vector.multi_reduction <add>, %14, %cst_9 [1] : vector<16x32xf32> to vector<16xf32>
    %16 = vector.shape_cast %15 : vector<16xf32> to vector<16x1xf32>
    %cst_10 = arith.constant 3.100000e+01 : f32
    %17 = vector.broadcast %cst_10 : f32 to vector<16x1xf32>
    %18 = arith.divf %16, %17 : vector<16x1xf32>
    %19 = vector.broadcast %11 : vector<16x1xf32> to vector<16x32xf32>
    %20 = arith.subf %0, %19 : vector<16x32xf32>
    %21 = vector.broadcast %6 : vector<1x32xf32> to vector<16x32xf32>
    %22 = arith.mulf %21, %20 : vector<16x32xf32>
    %23 = math.sqrt %18 : vector<16x1xf32>
    %cst_11 = arith.constant 9.99999997E-7 : f32
    %24 = vector.broadcast %cst_11 : f32 to vector<16x1xf32>
    %25 = arith.addf %23, %24 : vector<16x1xf32>
    %26 = vector.broadcast %25 : vector<16x1xf32> to vector<16x32xf32>
    %27 = arith.divf %22, %26 : vector<16x32xf32>
    %28 = vector.broadcast %7 : vector<1x32xf32> to vector<16x32xf32>
    %29 = arith.addf %27, %28 : vector<16x32xf32>
    %c0_12 = arith.constant 0 : index
    %c0_13 = arith.constant 0 : index
    %30 = vector.load %arg3[%c0_12, %c0_13] : memref<32x768xf32, #tpu.memory_space<vmem>>, vector<32x64xf32>
    %cst_14 = arith.constant dense<0.000000e+00> : vector<16x64xf32>
    %31 = tpu.matmul %29, %30, %cst_14 {dimension_numbers = #tpu.dot_dimension_numbers<[1], [0], [0], [1], [0, 0, 1, 1], [], []>} : vector<16x32xf32>, vector<32x64xf32>, vector<16x64xf32> -> vector<16x64xf32>
    %c2 = arith.constant 2 : index
    %c0_15 = arith.constant 0 : index
    %32 = vector.load %arg5[%c2, %c0_15] : memref<32x128xf32, #tpu.memory_space<vmem>>, vector<1x64xf32>
    %33 = vector.broadcast %32 : vector<1x64xf32> to vector<16x64xf32>
    %34 = arith.addf %31, %33 : vector<16x64xf32>
    %35 = vector.extract_strided_slice %34 {offsets = [0, 0], sizes = [16, 32], strides = [1, 1]} : vector<16x64xf32> to vector<16x32xf32>
    %36 = vector.extract_strided_slice %34 {offsets = [0, 32], sizes = [16, 32], strides = [1, 1]} : vector<16x64xf32> to vector<16x32xf32>
    %37 = arith.negf %36 : vector<16x32xf32>
    %38 = math.exp %37 : vector<16x32xf32>
    %cst_16 = arith.constant 1.000000e+00 : f32
    %39 = vector.broadcast %cst_16 : f32 to vector<16x32xf32>
    %40 = arith.addf %39, %38 : vector<16x32xf32>
    %41 = arith.divf %39, %40 : vector<16x32xf32>
    %42 = arith.mulf %35, %41 : vector<16x32xf32>
    %43 = arith.addf %0, %42 : vector<16x32xf32>
    %c3 = arith.constant 3 : index
    %c0_17 = arith.constant 0 : index
    %44 = vector.load %arg5[%c3, %c0_17] : memref<32x128xf32, #tpu.memory_space<vmem>>, vector<1x32xf32>
    %c4 = arith.constant 4 : index
    %c0_18 = arith.constant 0 : index
    %45 = vector.load %arg5[%c4, %c0_18] : memref<32x128xf32, #tpu.memory_space<vmem>>, vector<1x32xf32>
    %cst_19 = arith.constant dense<0.000000e+00> : vector<16xf32>
    %46 = vector.multi_reduction <add>, %43, %cst_19 [1] : vector<16x32xf32> to vector<16xf32>
    %47 = vector.shape_cast %46 : vector<16xf32> to vector<16x1xf32>
    %cst_20 = arith.constant 3.200000e+01 : f32
    %48 = vector.broadcast %cst_20 : f32 to vector<16x1xf32>
    %49 = arith.divf %47, %48 : vector<16x1xf32>
    %50 = vector.broadcast %49 : vector<16x1xf32> to vector<16x32xf32>
    %51 = arith.subf %43, %50 : vector<16x32xf32>
    %52 = arith.mulf %51, %51 : vector<16x32xf32>
    %cst_21 = arith.constant dense<0.000000e+00> : vector<16xf32>
    %53 = vector.multi_reduction <add>, %52, %cst_21 [1] : vector<16x32xf32> to vector<16xf32>
    %54 = vector.shape_cast %53 : vector<16xf32> to vector<16x1xf32>
    %cst_22 = arith.constant 3.100000e+01 : f32
    %55 = vector.broadcast %cst_22 : f32 to vector<16x1xf32>
    %56 = arith.divf %54, %55 : vector<16x1xf32>
    %57 = vector.broadcast %49 : vector<16x1xf32> to vector<16x32xf32>
    %58 = arith.subf %43, %57 : vector<16x32xf32>
    %59 = vector.broadcast %44 : vector<1x32xf32> to vector<16x32xf32>
    %60 = arith.mulf %59, %58 : vector<16x32xf32>
    %61 = math.sqrt %56 : vector<16x1xf32>
    %cst_23 = arith.constant 9.99999997E-7 : f32
    %62 = vector.broadcast %cst_23 : f32 to vector<16x1xf32>
    %63 = arith.addf %61, %62 : vector<16x1xf32>
    %64 = vector.broadcast %63 : vector<16x1xf32> to vector<16x32xf32>
    %65 = arith.divf %60, %64 : vector<16x32xf32>
    %66 = vector.broadcast %45 : vector<1x32xf32> to vector<16x32xf32>
    %67 = arith.addf %65, %66 : vector<16x32xf32>
    %cst_24 = arith.constant 0.000000e+00 : f32
    %68 = vector.broadcast %cst_24 : f32 to vector<16x1xf32>
    %69 = arith.cmpf oeq, %1, %68 : vector<16x1xf32>
    %cst_25 = arith.constant 0.000000e+00 : f32
    %70 = vector.shape_cast %69 : vector<16x1xi1> to vector<16x1xi1>
    %71 = vector.broadcast %70 : vector<16x1xi1> to vector<16x32xi1>
    %72 = vector.broadcast %cst_25 : f32 to vector<16x32xf32>
    %73 = arith.select %71, %72, %67 : vector<16x32xi1>, vector<16x32xf32>
    %c0_26 = arith.constant 0 : index
    %c64 = arith.constant 64 : index
    %74 = vector.load %arg3[%c0_26, %c64] : memref<32x768xf32, #tpu.memory_space<vmem>>, vector<32x128xf32>
    %cst_27 = arith.constant dense<0.000000e+00> : vector<16x128xf32>
    %75 = tpu.matmul %73, %74, %cst_27 {dimension_numbers = #tpu.dot_dimension_numbers<[1], [0], [0], [1], [0, 0, 1, 1], [], []>} : vector<16x32xf32>, vector<32x128xf32>, vector<16x128xf32> -> vector<16x128xf32>
    %c5 = arith.constant 5 : index
    %c0_28 = arith.constant 0 : index
    %76 = vector.load %arg5[%c5, %c0_28] : memref<32x128xf32, #tpu.memory_space<vmem>>, vector<1x128xf32>
    %77 = vector.broadcast %76 : vector<1x128xf32> to vector<16x128xf32>
    %78 = arith.addf %75, %77 : vector<16x128xf32>
    %cst_29 = arith.constant 0.000000e+00 : f32
    %79 = vector.broadcast %cst_29 : f32 to vector<16x128xf32>
    %80 = arith.maximumf %78, %79 : vector<16x128xf32>
    %c0_30 = arith.constant 0 : index
    %c192 = arith.constant 192 : index
    %81 = vector.load %arg3[%c0_30, %c192] : memref<32x768xf32, #tpu.memory_space<vmem>>, vector<32x384xf32>
    %cst_31 = arith.constant dense<0.000000e+00> : vector<16x384xf32>
    %82 = tpu.matmul %73, %81, %cst_31 {dimension_numbers = #tpu.dot_dimension_numbers<[1], [0], [0], [1], [0, 0, 1, 1], [], []>} : vector<16x32xf32>, vector<32x384xf32>, vector<16x384xf32> -> vector<16x384xf32>
    %83 = vector.extract_strided_slice %82 {offsets = [0, 0], sizes = [16, 128], strides = [1, 1]} : vector<16x384xf32> to vector<16x128xf32>
    %c1_i32 = arith.constant 1 : i32
    %84 = tpu.dynamic_rotate %83 by %c1_i32 dim 0 : vector<16x128xf32>, i32 -> vector<16x128xf32>
    %85 = vector.extract_strided_slice %82 {offsets = [0, 256], sizes = [16, 128], strides = [1, 1]} : vector<16x384xf32> to vector<16x128xf32>
    %c15_i32 = arith.constant 15 : i32
    %86 = tpu.dynamic_rotate %85 by %c15_i32 dim 0 : vector<16x128xf32>, i32 -> vector<16x128xf32>
    %c0_i32 = arith.constant 0 : i32
    %87 = vector.broadcast %c0_i32 : i32 to vector<16x1xi32>
    %88 = arith.cmpi sgt, %5, %87 : vector<16x1xi32>
    %cst_32 = arith.constant 0.000000e+00 : f32
    %89 = vector.shape_cast %88 : vector<16x1xi1> to vector<16x1xi1>
    %90 = vector.broadcast %89 : vector<16x1xi1> to vector<16x128xi1>
    %91 = vector.broadcast %cst_32 : f32 to vector<16x128xf32>
    %92 = arith.select %90, %84, %91 : vector<16x128xi1>, vector<16x128xf32>
    %93 = vector.extract_strided_slice %82 {offsets = [0, 128], sizes = [16, 128], strides = [1, 1]} : vector<16x384xf32> to vector<16x128xf32>
    %94 = arith.addf %92, %93 : vector<16x128xf32>
    %c7_i32_33 = arith.constant 7 : i32
    %95 = vector.broadcast %c7_i32_33 : i32 to vector<16x1xi32>
    %96 = arith.cmpi slt, %5, %95 : vector<16x1xi32>
    %cst_34 = arith.constant 0.000000e+00 : f32
    %97 = vector.shape_cast %96 : vector<16x1xi1> to vector<16x1xi1>
    %98 = vector.broadcast %97 : vector<16x1xi1> to vector<16x128xi1>
    %99 = vector.broadcast %cst_34 : f32 to vector<16x128xf32>
    %100 = arith.select %98, %86, %99 : vector<16x128xi1>, vector<16x128xf32>
    %101 = arith.addf %94, %100 : vector<16x128xf32>
    %c6 = arith.constant 6 : index
    %c0_35 = arith.constant 0 : index
    %102 = vector.load %arg5[%c6, %c0_35] : memref<32x128xf32, #tpu.memory_space<vmem>>, vector<1x128xf32>
    %103 = vector.broadcast %102 : vector<1x128xf32> to vector<16x128xf32>
    %104 = arith.addf %101, %103 : vector<16x128xf32>
    %cst_36 = arith.constant 0.000000e+00 : f32
    %105 = vector.broadcast %cst_36 : f32 to vector<16x128xf32>
    %106 = arith.maximumf %104, %105 : vector<16x128xf32>
    %107 = arith.addf %80, %106 : vector<16x128xf32>
    %c7 = arith.constant 7 : index
    %c0_37 = arith.constant 0 : index
    %108 = vector.load %arg5[%c7, %c0_37] : memref<32x128xf32, #tpu.memory_space<vmem>>, vector<1x128xf32>
    %c8 = arith.constant 8 : index
    %c0_38 = arith.constant 0 : index
    %109 = vector.load %arg5[%c8, %c0_38] : memref<32x128xf32, #tpu.memory_space<vmem>>, vector<1x128xf32>
    %cst_39 = arith.constant dense<0.000000e+00> : vector<16xf32>
    %110 = vector.multi_reduction <add>, %107, %cst_39 [1] : vector<16x128xf32> to vector<16xf32>
    %111 = vector.shape_cast %110 : vector<16xf32> to vector<16x1xf32>
    %cst_40 = arith.constant 1.280000e+02 : f32
    %112 = vector.broadcast %cst_40 : f32 to vector<16x1xf32>
    %113 = arith.divf %111, %112 : vector<16x1xf32>
    %114 = vector.broadcast %113 : vector<16x1xf32> to vector<16x128xf32>
    %115 = arith.subf %107, %114 : vector<16x128xf32>
    %116 = arith.mulf %115, %115 : vector<16x128xf32>
    %cst_41 = arith.constant dense<0.000000e+00> : vector<16xf32>
    %117 = vector.multi_reduction <add>, %116, %cst_41 [1] : vector<16x128xf32> to vector<16xf32>
    %118 = vector.shape_cast %117 : vector<16xf32> to vector<16x1xf32>
    %cst_42 = arith.constant 1.270000e+02 : f32
    %119 = vector.broadcast %cst_42 : f32 to vector<16x1xf32>
    %120 = arith.divf %118, %119 : vector<16x1xf32>
    %121 = vector.broadcast %113 : vector<16x1xf32> to vector<16x128xf32>
    %122 = arith.subf %107, %121 : vector<16x128xf32>
    %123 = vector.broadcast %108 : vector<1x128xf32> to vector<16x128xf32>
    %124 = arith.mulf %123, %122 : vector<16x128xf32>
    %125 = math.sqrt %120 : vector<16x1xf32>
    %cst_43 = arith.constant 9.99999997E-7 : f32
    %126 = vector.broadcast %cst_43 : f32 to vector<16x1xf32>
    %127 = arith.addf %125, %126 : vector<16x1xf32>
    %128 = vector.broadcast %127 : vector<16x1xf32> to vector<16x128xf32>
    %129 = arith.divf %124, %128 : vector<16x128xf32>
    %130 = vector.broadcast %109 : vector<1x128xf32> to vector<16x128xf32>
    %131 = arith.addf %129, %130 : vector<16x128xf32>
    %cst_44 = arith.constant 0.000000e+00 : f32
    %132 = vector.broadcast %cst_44 : f32 to vector<16x1xf32>
    %133 = arith.cmpf oeq, %1, %132 : vector<16x1xf32>
    %cst_45 = arith.constant 0.000000e+00 : f32
    %134 = vector.shape_cast %133 : vector<16x1xi1> to vector<16x1xi1>
    %135 = vector.broadcast %134 : vector<16x1xi1> to vector<16x128xi1>
    %136 = vector.broadcast %cst_45 : f32 to vector<16x128xf32>
    %137 = arith.select %135, %136, %131 : vector<16x128xi1>, vector<16x128xf32>
    %cst_46 = arith.constant 0.000000e+00 : f32
    %138 = vector.broadcast %cst_46 : f32 to vector<16x128xf32>
    %c19 = arith.constant 19 : index
    %c0_47 = arith.constant 0 : index
    %139 = vector.load %arg5[%c19, %c0_47] : memref<32x128xf32, #tpu.memory_space<vmem>>, vector<1x128xf32>
    %c4_i32 = arith.constant 4 : i32
    %140 = tpu.dynamic_rotate %137 by %c4_i32 dim 0 : vector<16x128xf32>, i32 -> vector<16x128xf32>
    %c-4_i32 = arith.constant -4 : i32
    %141 = vector.broadcast %c-4_i32 : i32 to vector<16x1xi32>
    %142 = arith.addi %5, %141 : vector<16x1xi32>
    %c0_i32_48 = arith.constant 0 : i32
    %143 = vector.broadcast %c0_i32_48 : i32 to vector<16x1xi32>
    %144 = arith.cmpi sge, %142, %143 : vector<16x1xi32>
    %c-4_i32_49 = arith.constant -4 : i32
    %145 = vector.broadcast %c-4_i32_49 : i32 to vector<16x1xi32>
    %146 = arith.addi %5, %145 : vector<16x1xi32>
    %c8_i32 = arith.constant 8 : i32
    %147 = vector.broadcast %c8_i32 : i32 to vector<16x1xi32>
    %148 = arith.cmpi slt, %146, %147 : vector<16x1xi32>
    %149 = arith.andi %144, %148 : vector<16x1xi1>
    %cst_50 = arith.constant 0.000000e+00 : f32
    %150 = vector.shape_cast %149 : vector<16x1xi1> to vector<16x1xi1>
    %151 = vector.broadcast %150 : vector<16x1xi1> to vector<16x128xi1>
    %152 = vector.broadcast %cst_50 : f32 to vector<16x128xf32>
    %153 = arith.select %151, %140, %152 : vector<16x128xi1>, vector<16x128xf32>
    %154 = vector.broadcast %139 : vector<1x128xf32> to vector<16x128xf32>
    %155 = arith.mulf %153, %154 : vector<16x128xf32>
    %156 = arith.addf %138, %155 : vector<16x128xf32>
    %c20 = arith.constant 20 : index
    %c0_51 = arith.constant 0 : index
    %157 = vector.load %arg5[%c20, %c0_51] : memref<32x128xf32, #tpu.memory_space<vmem>>, vector<1x128xf32>
    %c3_i32 = arith.constant 3 : i32
    %158 = tpu.dynamic_rotate %137 by %c3_i32 dim 0 : vector<16x128xf32>, i32 -> vector<16x128xf32>
    %c-3_i32 = arith.constant -3 : i32
    %159 = vector.broadcast %c-3_i32 : i32 to vector<16x1xi32>
    %160 = arith.addi %5, %159 : vector<16x1xi32>
    %c0_i32_52 = arith.constant 0 : i32
    %161 = vector.broadcast %c0_i32_52 : i32 to vector<16x1xi32>
    %162 = arith.cmpi sge, %160, %161 : vector<16x1xi32>
    %c-3_i32_53 = arith.constant -3 : i32
    %163 = vector.broadcast %c-3_i32_53 : i32 to vector<16x1xi32>
    %164 = arith.addi %5, %163 : vector<16x1xi32>
    %c8_i32_54 = arith.constant 8 : i32
    %165 = vector.broadcast %c8_i32_54 : i32 to vector<16x1xi32>
    %166 = arith.cmpi slt, %164, %165 : vector<16x1xi32>
    %167 = arith.andi %162, %166 : vector<16x1xi1>
    %cst_55 = arith.constant 0.000000e+00 : f32
    %168 = vector.shape_cast %167 : vector<16x1xi1> to vector<16x1xi1>
    %169 = vector.broadcast %168 : vector<16x1xi1> to vector<16x128xi1>
    %170 = vector.broadcast %cst_55 : f32 to vector<16x128xf32>
    %171 = arith.select %169, %158, %170 : vector<16x128xi1>, vector<16x128xf32>
    %172 = vector.broadcast %157 : vector<1x128xf32> to vector<16x128xf32>
    %173 = arith.mulf %171, %172 : vector<16x128xf32>
    %174 = arith.addf %156, %173 : vector<16x128xf32>
    %c21 = arith.constant 21 : index
    %c0_56 = arith.constant 0 : index
    %175 = vector.load %arg5[%c21, %c0_56] : memref<32x128xf32, #tpu.memory_space<vmem>>, vector<1x128xf32>
    %c2_i32 = arith.constant 2 : i32
    %176 = tpu.dynamic_rotate %137 by %c2_i32 dim 0 : vector<16x128xf32>, i32 -> vector<16x128xf32>
    %c-2_i32 = arith.constant -2 : i32
    %177 = vector.broadcast %c-2_i32 : i32 to vector<16x1xi32>
    %178 = arith.addi %5, %177 : vector<16x1xi32>
    %c0_i32_57 = arith.constant 0 : i32
    %179 = vector.broadcast %c0_i32_57 : i32 to vector<16x1xi32>
    %180 = arith.cmpi sge, %178, %179 : vector<16x1xi32>
    %c-2_i32_58 = arith.constant -2 : i32
    %181 = vector.broadcast %c-2_i32_58 : i32 to vector<16x1xi32>
    %182 = arith.addi %5, %181 : vector<16x1xi32>
    %c8_i32_59 = arith.constant 8 : i32
    %183 = vector.broadcast %c8_i32_59 : i32 to vector<16x1xi32>
    %184 = arith.cmpi slt, %182, %183 : vector<16x1xi32>
    %185 = arith.andi %180, %184 : vector<16x1xi1>
    %cst_60 = arith.constant 0.000000e+00 : f32
    %186 = vector.shape_cast %185 : vector<16x1xi1> to vector<16x1xi1>
    %187 = vector.broadcast %186 : vector<16x1xi1> to vector<16x128xi1>
    %188 = vector.broadcast %cst_60 : f32 to vector<16x128xf32>
    %189 = arith.select %187, %176, %188 : vector<16x128xi1>, vector<16x128xf32>
    %190 = vector.broadcast %175 : vector<1x128xf32> to vector<16x128xf32>
    %191 = arith.mulf %189, %190 : vector<16x128xf32>
    %192 = arith.addf %174, %191 : vector<16x128xf32>
    %c22 = arith.constant 22 : index
    %c0_61 = arith.constant 0 : index
    %193 = vector.load %arg5[%c22, %c0_61] : memref<32x128xf32, #tpu.memory_space<vmem>>, vector<1x128xf32>
    %c1_i32_62 = arith.constant 1 : i32
    %194 = tpu.dynamic_rotate %137 by %c1_i32_62 dim 0 : vector<16x128xf32>, i32 -> vector<16x128xf32>
    %c-1_i32 = arith.constant -1 : i32
    %195 = vector.broadcast %c-1_i32 : i32 to vector<16x1xi32>
    %196 = arith.addi %5, %195 : vector<16x1xi32>
    %c0_i32_63 = arith.constant 0 : i32
    %197 = vector.broadcast %c0_i32_63 : i32 to vector<16x1xi32>
    %198 = arith.cmpi sge, %196, %197 : vector<16x1xi32>
    %c-1_i32_64 = arith.constant -1 : i32
    %199 = vector.broadcast %c-1_i32_64 : i32 to vector<16x1xi32>
    %200 = arith.addi %5, %199 : vector<16x1xi32>
    %c8_i32_65 = arith.constant 8 : i32
    %201 = vector.broadcast %c8_i32_65 : i32 to vector<16x1xi32>
    %202 = arith.cmpi slt, %200, %201 : vector<16x1xi32>
    %203 = arith.andi %198, %202 : vector<16x1xi1>
    %cst_66 = arith.constant 0.000000e+00 : f32
    %204 = vector.shape_cast %203 : vector<16x1xi1> to vector<16x1xi1>
    %205 = vector.broadcast %204 : vector<16x1xi1> to vector<16x128xi1>
    %206 = vector.broadcast %cst_66 : f32 to vector<16x128xf32>
    %207 = arith.select %205, %194, %206 : vector<16x128xi1>, vector<16x128xf32>
    %208 = vector.broadcast %193 : vector<1x128xf32> to vector<16x128xf32>
    %209 = arith.mulf %207, %208 : vector<16x128xf32>
    %210 = arith.addf %192, %209 : vector<16x128xf32>
    %c23 = arith.constant 23 : index
    %c0_67 = arith.constant 0 : index
    %211 = vector.load %arg5[%c23, %c0_67] : memref<32x128xf32, #tpu.memory_space<vmem>>, vector<1x128xf32>
    %212 = vector.broadcast %211 : vector<1x128xf32> to vector<16x128xf32>
    %213 = arith.mulf %137, %212 : vector<16x128xf32>
    %214 = arith.addf %210, %213 : vector<16x128xf32>
    %c24 = arith.constant 24 : index
    %c0_68 = arith.constant 0 : index
    %215 = vector.load %arg5[%c24, %c0_68] : memref<32x128xf32, #tpu.memory_space<vmem>>, vector<1x128xf32>
    %c15_i32_69 = arith.constant 15 : i32
    %216 = tpu.dynamic_rotate %137 by %c15_i32_69 dim 0 : vector<16x128xf32>, i32 -> vector<16x128xf32>
    %c1_i32_70 = arith.constant 1 : i32
    %217 = vector.broadcast %c1_i32_70 : i32 to vector<16x1xi32>
    %218 = arith.addi %5, %217 : vector<16x1xi32>
    %c0_i32_71 = arith.constant 0 : i32
    %219 = vector.broadcast %c0_i32_71 : i32 to vector<16x1xi32>
    %220 = arith.cmpi sge, %218, %219 : vector<16x1xi32>
    %c1_i32_72 = arith.constant 1 : i32
    %221 = vector.broadcast %c1_i32_72 : i32 to vector<16x1xi32>
    %222 = arith.addi %5, %221 : vector<16x1xi32>
    %c8_i32_73 = arith.constant 8 : i32
    %223 = vector.broadcast %c8_i32_73 : i32 to vector<16x1xi32>
    %224 = arith.cmpi slt, %222, %223 : vector<16x1xi32>
    %225 = arith.andi %220, %224 : vector<16x1xi1>
    %cst_74 = arith.constant 0.000000e+00 : f32
    %226 = vector.shape_cast %225 : vector<16x1xi1> to vector<16x1xi1>
    %227 = vector.broadcast %226 : vector<16x1xi1> to vector<16x128xi1>
    %228 = vector.broadcast %cst_74 : f32 to vector<16x128xf32>
    %229 = arith.select %227, %216, %228 : vector<16x128xi1>, vector<16x128xf32>
    %230 = vector.broadcast %215 : vector<1x128xf32> to vector<16x128xf32>
    %231 = arith.mulf %229, %230 : vector<16x128xf32>
    %232 = arith.addf %214, %231 : vector<16x128xf32>
    %c25 = arith.constant 25 : index
    %c0_75 = arith.constant 0 : index
    %233 = vector.load %arg5[%c25, %c0_75] : memref<32x128xf32, #tpu.memory_space<vmem>>, vector<1x128xf32>
    %c14_i32 = arith.constant 14 : i32
    %234 = tpu.dynamic_rotate %137 by %c14_i32 dim 0 : vector<16x128xf32>, i32 -> vector<16x128xf32>
    %c2_i32_76 = arith.constant 2 : i32
    %235 = vector.broadcast %c2_i32_76 : i32 to vector<16x1xi32>
    %236 = arith.addi %5, %235 : vector<16x1xi32>
    %c0_i32_77 = arith.constant 0 : i32
    %237 = vector.broadcast %c0_i32_77 : i32 to vector<16x1xi32>
    %238 = arith.cmpi sge, %236, %237 : vector<16x1xi32>
    %c2_i32_78 = arith.constant 2 : i32
    %239 = vector.broadcast %c2_i32_78 : i32 to vector<16x1xi32>
    %240 = arith.addi %5, %239 : vector<16x1xi32>
    %c8_i32_79 = arith.constant 8 : i32
    %241 = vector.broadcast %c8_i32_79 : i32 to vector<16x1xi32>
    %242 = arith.cmpi slt, %240, %241 : vector<16x1xi32>
    %243 = arith.andi %238, %242 : vector<16x1xi1>
    %cst_80 = arith.constant 0.000000e+00 : f32
    %244 = vector.shape_cast %243 : vector<16x1xi1> to vector<16x1xi1>
    %245 = vector.broadcast %244 : vector<16x1xi1> to vector<16x128xi1>
    %246 = vector.broadcast %cst_80 : f32 to vector<16x128xf32>
    %247 = arith.select %245, %234, %246 : vector<16x128xi1>, vector<16x128xf32>
    %248 = vector.broadcast %233 : vector<1x128xf32> to vector<16x128xf32>
    %249 = arith.mulf %247, %248 : vector<16x128xf32>
    %250 = arith.addf %232, %249 : vector<16x128xf32>
    %c26 = arith.constant 26 : index
    %c0_81 = arith.constant 0 : index
    %251 = vector.load %arg5[%c26, %c0_81] : memref<32x128xf32, #tpu.memory_space<vmem>>, vector<1x128xf32>
    %c13_i32 = arith.constant 13 : i32
    %252 = tpu.dynamic_rotate %137 by %c13_i32 dim 0 : vector<16x128xf32>, i32 -> vector<16x128xf32>
    %c3_i32_82 = arith.constant 3 : i32
    %253 = vector.broadcast %c3_i32_82 : i32 to vector<16x1xi32>
    %254 = arith.addi %5, %253 : vector<16x1xi32>
    %c0_i32_83 = arith.constant 0 : i32
    %255 = vector.broadcast %c0_i32_83 : i32 to vector<16x1xi32>
    %256 = arith.cmpi sge, %254, %255 : vector<16x1xi32>
    %c3_i32_84 = arith.constant 3 : i32
    %257 = vector.broadcast %c3_i32_84 : i32 to vector<16x1xi32>
    %258 = arith.addi %5, %257 : vector<16x1xi32>
    %c8_i32_85 = arith.constant 8 : i32
    %259 = vector.broadcast %c8_i32_85 : i32 to vector<16x1xi32>
    %260 = arith.cmpi slt, %258, %259 : vector<16x1xi32>
    %261 = arith.andi %256, %260 : vector<16x1xi1>
    %cst_86 = arith.constant 0.000000e+00 : f32
    %262 = vector.shape_cast %261 : vector<16x1xi1> to vector<16x1xi1>
    %263 = vector.broadcast %262 : vector<16x1xi1> to vector<16x128xi1>
    %264 = vector.broadcast %cst_86 : f32 to vector<16x128xf32>
    %265 = arith.select %263, %252, %264 : vector<16x128xi1>, vector<16x128xf32>
    %266 = vector.broadcast %251 : vector<1x128xf32> to vector<16x128xf32>
    %267 = arith.mulf %265, %266 : vector<16x128xf32>
    %268 = arith.addf %250, %267 : vector<16x128xf32>
    %c27 = arith.constant 27 : index
    %c0_87 = arith.constant 0 : index
    %269 = vector.load %arg5[%c27, %c0_87] : memref<32x128xf32, #tpu.memory_space<vmem>>, vector<1x128xf32>
    %c12_i32 = arith.constant 12 : i32
    %270 = tpu.dynamic_rotate %137 by %c12_i32 dim 0 : vector<16x128xf32>, i32 -> vector<16x128xf32>
    %c4_i32_88 = arith.constant 4 : i32
    %271 = vector.broadcast %c4_i32_88 : i32 to vector<16x1xi32>
    %272 = arith.addi %5, %271 : vector<16x1xi32>
    %c0_i32_89 = arith.constant 0 : i32
    %273 = vector.broadcast %c0_i32_89 : i32 to vector<16x1xi32>
    %274 = arith.cmpi sge, %272, %273 : vector<16x1xi32>
    %c4_i32_90 = arith.constant 4 : i32
    %275 = vector.broadcast %c4_i32_90 : i32 to vector<16x1xi32>
    %276 = arith.addi %5, %275 : vector<16x1xi32>
    %c8_i32_91 = arith.constant 8 : i32
    %277 = vector.broadcast %c8_i32_91 : i32 to vector<16x1xi32>
    %278 = arith.cmpi slt, %276, %277 : vector<16x1xi32>
    %279 = arith.andi %274, %278 : vector<16x1xi1>
    %cst_92 = arith.constant 0.000000e+00 : f32
    %280 = vector.shape_cast %279 : vector<16x1xi1> to vector<16x1xi1>
    %281 = vector.broadcast %280 : vector<16x1xi1> to vector<16x128xi1>
    %282 = vector.broadcast %cst_92 : f32 to vector<16x128xf32>
    %283 = arith.select %281, %270, %282 : vector<16x128xi1>, vector<16x128xf32>
    %284 = vector.broadcast %269 : vector<1x128xf32> to vector<16x128xf32>
    %285 = arith.mulf %283, %284 : vector<16x128xf32>
    %286 = arith.addf %268, %285 : vector<16x128xf32>
    %c9 = arith.constant 9 : index
    %c0_93 = arith.constant 0 : index
    %287 = vector.load %arg5[%c9, %c0_93] : memref<32x128xf32, #tpu.memory_space<vmem>>, vector<1x128xf32>
    %288 = vector.broadcast %287 : vector<1x128xf32> to vector<16x128xf32>
    %289 = arith.addf %286, %288 : vector<16x128xf32>
    %c0_94 = arith.constant 0 : index
    %c0_95 = arith.constant 0 : index
    %290 = vector.load %arg4[%c0_94, %c0_95] : memref<192x32xf32, #tpu.memory_space<vmem>>, vector<128x32xf32>
    %cst_96 = arith.constant dense<0.000000e+00> : vector<16x32xf32>
    %291 = tpu.matmul %289, %290, %cst_96 {dimension_numbers = #tpu.dot_dimension_numbers<[1], [0], [0], [1], [0, 0, 1, 1], [], []>} : vector<16x128xf32>, vector<128x32xf32>, vector<16x32xf32> -> vector<16x32xf32>
    %c10 = arith.constant 10 : index
    %c0_97 = arith.constant 0 : index
    %292 = vector.load %arg5[%c10, %c0_97] : memref<32x128xf32, #tpu.memory_space<vmem>>, vector<1x32xf32>
    %293 = vector.broadcast %292 : vector<1x32xf32> to vector<16x32xf32>
    %294 = arith.addf %291, %293 : vector<16x32xf32>
    %295 = arith.addf %43, %294 : vector<16x32xf32>
    %c11 = arith.constant 11 : index
    %c0_98 = arith.constant 0 : index
    %296 = vector.load %arg5[%c11, %c0_98] : memref<32x128xf32, #tpu.memory_space<vmem>>, vector<1x32xf32>
    %c12 = arith.constant 12 : index
    %c0_99 = arith.constant 0 : index
    %297 = vector.load %arg5[%c12, %c0_99] : memref<32x128xf32, #tpu.memory_space<vmem>>, vector<1x32xf32>
    %cst_100 = arith.constant dense<0.000000e+00> : vector<16xf32>
    %298 = vector.multi_reduction <add>, %295, %cst_100 [1] : vector<16x32xf32> to vector<16xf32>
    %299 = vector.shape_cast %298 : vector<16xf32> to vector<16x1xf32>
    %cst_101 = arith.constant 3.200000e+01 : f32
    %300 = vector.broadcast %cst_101 : f32 to vector<16x1xf32>
    %301 = arith.divf %299, %300 : vector<16x1xf32>
    %302 = vector.broadcast %301 : vector<16x1xf32> to vector<16x32xf32>
    %303 = arith.subf %295, %302 : vector<16x32xf32>
    %304 = arith.mulf %303, %303 : vector<16x32xf32>
    %cst_102 = arith.constant dense<0.000000e+00> : vector<16xf32>
    %305 = vector.multi_reduction <add>, %304, %cst_102 [1] : vector<16x32xf32> to vector<16xf32>
    %306 = vector.shape_cast %305 : vector<16xf32> to vector<16x1xf32>
    %cst_103 = arith.constant 3.100000e+01 : f32
    %307 = vector.broadcast %cst_103 : f32 to vector<16x1xf32>
    %308 = arith.divf %306, %307 : vector<16x1xf32>
    %309 = vector.broadcast %301 : vector<16x1xf32> to vector<16x32xf32>
    %310 = arith.subf %295, %309 : vector<16x32xf32>
    %311 = vector.broadcast %296 : vector<1x32xf32> to vector<16x32xf32>
    %312 = arith.mulf %311, %310 : vector<16x32xf32>
    %313 = math.sqrt %308 : vector<16x1xf32>
    %cst_104 = arith.constant 9.99999997E-7 : f32
    %314 = vector.broadcast %cst_104 : f32 to vector<16x1xf32>
    %315 = arith.addf %313, %314 : vector<16x1xf32>
    %316 = vector.broadcast %315 : vector<16x1xf32> to vector<16x32xf32>
    %317 = arith.divf %312, %316 : vector<16x32xf32>
    %318 = vector.broadcast %297 : vector<1x32xf32> to vector<16x32xf32>
    %319 = arith.addf %317, %318 : vector<16x32xf32>
    %c0_105 = arith.constant 0 : index
    %c576 = arith.constant 576 : index
    %320 = vector.load %arg3[%c0_105, %c576] : memref<32x768xf32, #tpu.memory_space<vmem>>, vector<32x96xf32>
    %cst_106 = arith.constant dense<0.000000e+00> : vector<16x96xf32>
    %321 = tpu.matmul %319, %320, %cst_106 {dimension_numbers = #tpu.dot_dimension_numbers<[1], [0], [0], [1], [0, 0, 1, 1], [], []>} : vector<16x32xf32>, vector<32x96xf32>, vector<16x96xf32> -> vector<16x96xf32>
    %c13 = arith.constant 13 : index
    %c0_107 = arith.constant 0 : index
    %322 = vector.load %arg5[%c13, %c0_107] : memref<32x128xf32, #tpu.memory_space<vmem>>, vector<1x96xf32>
    %323 = vector.broadcast %322 : vector<1x96xf32> to vector<16x96xf32>
    %324 = arith.addf %321, %323 : vector<16x96xf32>
    %cst_108 = arith.constant 0.000000e+00 : f32
    %325 = vector.broadcast %cst_108 : f32 to vector<16x32xf32>
    %326 = vector.extract_strided_slice %324 {offsets = [0, 0], sizes = [16, 8], strides = [1, 1]} : vector<16x96xf32> to vector<16x8xf32>
    %327 = vector.extract_strided_slice %324 {offsets = [0, 32], sizes = [16, 8], strides = [1, 1]} : vector<16x96xf32> to vector<16x8xf32>
    %328 = vector.extract_strided_slice %324 {offsets = [0, 64], sizes = [16, 8], strides = [1, 1]} : vector<16x96xf32> to vector<16x8xf32>
    %329 = tpu.transpose %327, [1, 0] : vector<16x8xf32> -> vector<8x16xf32>
    %cst_109 = arith.constant dense<0.000000e+00> : vector<16x16xf32>
    %330 = tpu.matmul %326, %329, %cst_109 {dimension_numbers = #tpu.dot_dimension_numbers<[1], [0], [0], [1], [0, 0, 1, 1], [], []>} : vector<16x8xf32>, vector<8x16xf32>, vector<16x16xf32> -> vector<16x16xf32>
    %cst_110 = arith.constant 0.353553385 : f32
    %331 = vector.broadcast %cst_110 : f32 to vector<16x16xf32>
    %332 = arith.mulf %330, %331 : vector<16x16xf32>
    %333 = arith.addf %332, %2 : vector<16x16xf32>
    %cst_111 = arith.constant dense<0xFF800000> : vector<16xf32>
    %334 = vector.multi_reduction <maximumf>, %333, %cst_111 [1] : vector<16x16xf32> to vector<16xf32>
    %335 = vector.shape_cast %334 : vector<16xf32> to vector<16x1xf32>
    %336 = vector.broadcast %335 : vector<16x1xf32> to vector<16x16xf32>
    %337 = arith.subf %333, %336 : vector<16x16xf32>
    %338 = math.exp %337 : vector<16x16xf32>
    %cst_112 = arith.constant dense<0.000000e+00> : vector<16xf32>
    %339 = vector.multi_reduction <add>, %338, %cst_112 [1] : vector<16x16xf32> to vector<16xf32>
    %340 = vector.shape_cast %339 : vector<16xf32> to vector<16x1xf32>
    %341 = tpu.reciprocal %340 {approx = true} : vector<16x1xf32> -> vector<16x1xf32>
    %342 = vector.broadcast %341 : vector<16x1xf32> to vector<16x16xf32>
    %343 = arith.mulf %338, %342 : vector<16x16xf32>
    %cst_113 = arith.constant dense<0.000000e+00> : vector<16x8xf32>
    %344 = tpu.matmul %343, %328, %cst_113 {dimension_numbers = #tpu.dot_dimension_numbers<[1], [0], [0], [1], [0, 0, 1, 1], [], []>} : vector<16x16xf32>, vector<16x8xf32>, vector<16x8xf32> -> vector<16x8xf32>
    %c0_114 = arith.constant 0 : index
    %c672 = arith.constant 672 : index
    %345 = vector.load %arg3[%c0_114, %c672] : memref<32x768xf32, #tpu.memory_space<vmem>>, vector<8x32xf32>
    %cst_115 = arith.constant dense<0.000000e+00> : vector<16x32xf32>
    %346 = tpu.matmul %344, %345, %cst_115 {dimension_numbers = #tpu.dot_dimension_numbers<[1], [0], [0], [1], [0, 0, 1, 1], [], []>} : vector<16x8xf32>, vector<8x32xf32>, vector<16x32xf32> -> vector<16x32xf32>
    %347 = arith.addf %325, %346 : vector<16x32xf32>
    %348 = vector.extract_strided_slice %324 {offsets = [0, 8], sizes = [16, 8], strides = [1, 1]} : vector<16x96xf32> to vector<16x8xf32>
    %349 = vector.extract_strided_slice %324 {offsets = [0, 40], sizes = [16, 8], strides = [1, 1]} : vector<16x96xf32> to vector<16x8xf32>
    %350 = vector.extract_strided_slice %324 {offsets = [0, 72], sizes = [16, 8], strides = [1, 1]} : vector<16x96xf32> to vector<16x8xf32>
    %351 = tpu.transpose %349, [1, 0] : vector<16x8xf32> -> vector<8x16xf32>
    %cst_116 = arith.constant dense<0.000000e+00> : vector<16x16xf32>
    %352 = tpu.matmul %348, %351, %cst_116 {dimension_numbers = #tpu.dot_dimension_numbers<[1], [0], [0], [1], [0, 0, 1, 1], [], []>} : vector<16x8xf32>, vector<8x16xf32>, vector<16x16xf32> -> vector<16x16xf32>
    %cst_117 = arith.constant 0.353553385 : f32
    %353 = vector.broadcast %cst_117 : f32 to vector<16x16xf32>
    %354 = arith.mulf %352, %353 : vector<16x16xf32>
    %355 = arith.addf %354, %2 : vector<16x16xf32>
    %cst_118 = arith.constant dense<0xFF800000> : vector<16xf32>
    %356 = vector.multi_reduction <maximumf>, %355, %cst_118 [1] : vector<16x16xf32> to vector<16xf32>
    %357 = vector.shape_cast %356 : vector<16xf32> to vector<16x1xf32>
    %358 = vector.broadcast %357 : vector<16x1xf32> to vector<16x16xf32>
    %359 = arith.subf %355, %358 : vector<16x16xf32>
    %360 = math.exp %359 : vector<16x16xf32>
    %cst_119 = arith.constant dense<0.000000e+00> : vector<16xf32>
    %361 = vector.multi_reduction <add>, %360, %cst_119 [1] : vector<16x16xf32> to vector<16xf32>
    %362 = vector.shape_cast %361 : vector<16xf32> to vector<16x1xf32>
    %363 = tpu.reciprocal %362 {approx = true} : vector<16x1xf32> -> vector<16x1xf32>
    %364 = vector.broadcast %363 : vector<16x1xf32> to vector<16x16xf32>
    %365 = arith.mulf %360, %364 : vector<16x16xf32>
    %cst_120 = arith.constant dense<0.000000e+00> : vector<16x8xf32>
    %366 = tpu.matmul %365, %350, %cst_120 {dimension_numbers = #tpu.dot_dimension_numbers<[1], [0], [0], [1], [0, 0, 1, 1], [], []>} : vector<16x16xf32>, vector<16x8xf32>, vector<16x8xf32> -> vector<16x8xf32>
    %c8_121 = arith.constant 8 : index
    %c672_122 = arith.constant 672 : index
    %367 = vector.load %arg3[%c8_121, %c672_122] : memref<32x768xf32, #tpu.memory_space<vmem>>, vector<8x32xf32>
    %cst_123 = arith.constant dense<0.000000e+00> : vector<16x32xf32>
    %368 = tpu.matmul %366, %367, %cst_123 {dimension_numbers = #tpu.dot_dimension_numbers<[1], [0], [0], [1], [0, 0, 1, 1], [], []>} : vector<16x8xf32>, vector<8x32xf32>, vector<16x32xf32> -> vector<16x32xf32>
    %369 = arith.addf %347, %368 : vector<16x32xf32>
    %370 = vector.extract_strided_slice %324 {offsets = [0, 16], sizes = [16, 8], strides = [1, 1]} : vector<16x96xf32> to vector<16x8xf32>
    %371 = vector.extract_strided_slice %324 {offsets = [0, 48], sizes = [16, 8], strides = [1, 1]} : vector<16x96xf32> to vector<16x8xf32>
    %372 = vector.extract_strided_slice %324 {offsets = [0, 80], sizes = [16, 8], strides = [1, 1]} : vector<16x96xf32> to vector<16x8xf32>
    %373 = tpu.transpose %371, [1, 0] : vector<16x8xf32> -> vector<8x16xf32>
    %cst_124 = arith.constant dense<0.000000e+00> : vector<16x16xf32>
    %374 = tpu.matmul %370, %373, %cst_124 {dimension_numbers = #tpu.dot_dimension_numbers<[1], [0], [0], [1], [0, 0, 1, 1], [], []>} : vector<16x8xf32>, vector<8x16xf32>, vector<16x16xf32> -> vector<16x16xf32>
    %cst_125 = arith.constant 0.353553385 : f32
    %375 = vector.broadcast %cst_125 : f32 to vector<16x16xf32>
    %376 = arith.mulf %374, %375 : vector<16x16xf32>
    %377 = arith.addf %376, %2 : vector<16x16xf32>
    %cst_126 = arith.constant dense<0xFF800000> : vector<16xf32>
    %378 = vector.multi_reduction <maximumf>, %377, %cst_126 [1] : vector<16x16xf32> to vector<16xf32>
    %379 = vector.shape_cast %378 : vector<16xf32> to vector<16x1xf32>
    %380 = vector.broadcast %379 : vector<16x1xf32> to vector<16x16xf32>
    %381 = arith.subf %377, %380 : vector<16x16xf32>
    %382 = math.exp %381 : vector<16x16xf32>
    %cst_127 = arith.constant dense<0.000000e+00> : vector<16xf32>
    %383 = vector.multi_reduction <add>, %382, %cst_127 [1] : vector<16x16xf32> to vector<16xf32>
    %384 = vector.shape_cast %383 : vector<16xf32> to vector<16x1xf32>
    %385 = tpu.reciprocal %384 {approx = true} : vector<16x1xf32> -> vector<16x1xf32>
    %386 = vector.broadcast %385 : vector<16x1xf32> to vector<16x16xf32>
    %387 = arith.mulf %382, %386 : vector<16x16xf32>
    %cst_128 = arith.constant dense<0.000000e+00> : vector<16x8xf32>
    %388 = tpu.matmul %387, %372, %cst_128 {dimension_numbers = #tpu.dot_dimension_numbers<[1], [0], [0], [1], [0, 0, 1, 1], [], []>} : vector<16x16xf32>, vector<16x8xf32>, vector<16x8xf32> -> vector<16x8xf32>
    %c16 = arith.constant 16 : index
    %c672_129 = arith.constant 672 : index
    %389 = vector.load %arg3[%c16, %c672_129] : memref<32x768xf32, #tpu.memory_space<vmem>>, vector<8x32xf32>
    %cst_130 = arith.constant dense<0.000000e+00> : vector<16x32xf32>
    %390 = tpu.matmul %388, %389, %cst_130 {dimension_numbers = #tpu.dot_dimension_numbers<[1], [0], [0], [1], [0, 0, 1, 1], [], []>} : vector<16x8xf32>, vector<8x32xf32>, vector<16x32xf32> -> vector<16x32xf32>
    %391 = arith.addf %369, %390 : vector<16x32xf32>
    %392 = vector.extract_strided_slice %324 {offsets = [0, 24], sizes = [16, 8], strides = [1, 1]} : vector<16x96xf32> to vector<16x8xf32>
    %393 = vector.extract_strided_slice %324 {offsets = [0, 56], sizes = [16, 8], strides = [1, 1]} : vector<16x96xf32> to vector<16x8xf32>
    %394 = vector.extract_strided_slice %324 {offsets = [0, 88], sizes = [16, 8], strides = [1, 1]} : vector<16x96xf32> to vector<16x8xf32>
    %395 = tpu.transpose %393, [1, 0] : vector<16x8xf32> -> vector<8x16xf32>
    %cst_131 = arith.constant dense<0.000000e+00> : vector<16x16xf32>
    %396 = tpu.matmul %392, %395, %cst_131 {dimension_numbers = #tpu.dot_dimension_numbers<[1], [0], [0], [1], [0, 0, 1, 1], [], []>} : vector<16x8xf32>, vector<8x16xf32>, vector<16x16xf32> -> vector<16x16xf32>
    %cst_132 = arith.constant 0.353553385 : f32
    %397 = vector.broadcast %cst_132 : f32 to vector<16x16xf32>
    %398 = arith.mulf %396, %397 : vector<16x16xf32>
    %399 = arith.addf %398, %2 : vector<16x16xf32>
    %cst_133 = arith.constant dense<0xFF800000> : vector<16xf32>
    %400 = vector.multi_reduction <maximumf>, %399, %cst_133 [1] : vector<16x16xf32> to vector<16xf32>
    %401 = vector.shape_cast %400 : vector<16xf32> to vector<16x1xf32>
    %402 = vector.broadcast %401 : vector<16x1xf32> to vector<16x16xf32>
    %403 = arith.subf %399, %402 : vector<16x16xf32>
    %404 = math.exp %403 : vector<16x16xf32>
    %cst_134 = arith.constant dense<0.000000e+00> : vector<16xf32>
    %405 = vector.multi_reduction <add>, %404, %cst_134 [1] : vector<16x16xf32> to vector<16xf32>
    %406 = vector.shape_cast %405 : vector<16xf32> to vector<16x1xf32>
    %407 = tpu.reciprocal %406 {approx = true} : vector<16x1xf32> -> vector<16x1xf32>
    %408 = vector.broadcast %407 : vector<16x1xf32> to vector<16x16xf32>
    %409 = arith.mulf %404, %408 : vector<16x16xf32>
    %cst_135 = arith.constant dense<0.000000e+00> : vector<16x8xf32>
    %410 = tpu.matmul %409, %394, %cst_135 {dimension_numbers = #tpu.dot_dimension_numbers<[1], [0], [0], [1], [0, 0, 1, 1], [], []>} : vector<16x16xf32>, vector<16x8xf32>, vector<16x8xf32> -> vector<16x8xf32>
    %c24_136 = arith.constant 24 : index
    %c672_137 = arith.constant 672 : index
    %411 = vector.load %arg3[%c24_136, %c672_137] : memref<32x768xf32, #tpu.memory_space<vmem>>, vector<8x32xf32>
    %cst_138 = arith.constant dense<0.000000e+00> : vector<16x32xf32>
    %412 = tpu.matmul %410, %411, %cst_138 {dimension_numbers = #tpu.dot_dimension_numbers<[1], [0], [0], [1], [0, 0, 1, 1], [], []>} : vector<16x8xf32>, vector<8x32xf32>, vector<16x32xf32> -> vector<16x32xf32>
    %413 = arith.addf %391, %412 : vector<16x32xf32>
    %414 = arith.addf %295, %413 : vector<16x32xf32>
    %c14 = arith.constant 14 : index
    %c0_139 = arith.constant 0 : index
    %415 = vector.load %arg5[%c14, %c0_139] : memref<32x128xf32, #tpu.memory_space<vmem>>, vector<1x32xf32>
    %416 = vector.broadcast %415 : vector<1x32xf32> to vector<16x32xf32>
    %417 = arith.addf %414, %416 : vector<16x32xf32>
    %c15 = arith.constant 15 : index
    %c0_140 = arith.constant 0 : index
    %418 = vector.load %arg5[%c15, %c0_140] : memref<32x128xf32, #tpu.memory_space<vmem>>, vector<1x32xf32>
    %c16_141 = arith.constant 16 : index
    %c0_142 = arith.constant 0 : index
    %419 = vector.load %arg5[%c16_141, %c0_142] : memref<32x128xf32, #tpu.memory_space<vmem>>, vector<1x32xf32>
    %cst_143 = arith.constant dense<0.000000e+00> : vector<16xf32>
    %420 = vector.multi_reduction <add>, %417, %cst_143 [1] : vector<16x32xf32> to vector<16xf32>
    %421 = vector.shape_cast %420 : vector<16xf32> to vector<16x1xf32>
    %cst_144 = arith.constant 3.200000e+01 : f32
    %422 = vector.broadcast %cst_144 : f32 to vector<16x1xf32>
    %423 = arith.divf %421, %422 : vector<16x1xf32>
    %424 = vector.broadcast %423 : vector<16x1xf32> to vector<16x32xf32>
    %425 = arith.subf %417, %424 : vector<16x32xf32>
    %426 = arith.mulf %425, %425 : vector<16x32xf32>
    %cst_145 = arith.constant dense<0.000000e+00> : vector<16xf32>
    %427 = vector.multi_reduction <add>, %426, %cst_145 [1] : vector<16x32xf32> to vector<16xf32>
    %428 = vector.shape_cast %427 : vector<16xf32> to vector<16x1xf32>
    %cst_146 = arith.constant 3.100000e+01 : f32
    %429 = vector.broadcast %cst_146 : f32 to vector<16x1xf32>
    %430 = arith.divf %428, %429 : vector<16x1xf32>
    %431 = vector.broadcast %423 : vector<16x1xf32> to vector<16x32xf32>
    %432 = arith.subf %417, %431 : vector<16x32xf32>
    %433 = vector.broadcast %418 : vector<1x32xf32> to vector<16x32xf32>
    %434 = arith.mulf %433, %432 : vector<16x32xf32>
    %435 = math.sqrt %430 : vector<16x1xf32>
    %cst_147 = arith.constant 9.99999997E-7 : f32
    %436 = vector.broadcast %cst_147 : f32 to vector<16x1xf32>
    %437 = arith.addf %435, %436 : vector<16x1xf32>
    %438 = vector.broadcast %437 : vector<16x1xf32> to vector<16x32xf32>
    %439 = arith.divf %434, %438 : vector<16x32xf32>
    %440 = vector.broadcast %419 : vector<1x32xf32> to vector<16x32xf32>
    %441 = arith.addf %439, %440 : vector<16x32xf32>
    %c0_148 = arith.constant 0 : index
    %c704 = arith.constant 704 : index
    %442 = vector.load %arg3[%c0_148, %c704] : memref<32x768xf32, #tpu.memory_space<vmem>>, vector<32x64xf32>
    %cst_149 = arith.constant dense<0.000000e+00> : vector<16x64xf32>
    %443 = tpu.matmul %441, %442, %cst_149 {dimension_numbers = #tpu.dot_dimension_numbers<[1], [0], [0], [1], [0, 0, 1, 1], [], []>} : vector<16x32xf32>, vector<32x64xf32>, vector<16x64xf32> -> vector<16x64xf32>
    %c17 = arith.constant 17 : index
    %c0_150 = arith.constant 0 : index
    %444 = vector.load %arg5[%c17, %c0_150] : memref<32x128xf32, #tpu.memory_space<vmem>>, vector<1x64xf32>
    %445 = vector.broadcast %444 : vector<1x64xf32> to vector<16x64xf32>
    %446 = arith.addf %443, %445 : vector<16x64xf32>
    %cst_151 = arith.constant 0.000000e+00 : f32
    %447 = vector.broadcast %cst_151 : f32 to vector<16x64xf32>
    %448 = arith.maximumf %446, %447 : vector<16x64xf32>
    %c128 = arith.constant 128 : index
    %c0_152 = arith.constant 0 : index
    %449 = vector.load %arg4[%c128, %c0_152] : memref<192x32xf32, #tpu.memory_space<vmem>>, vector<64x32xf32>
    %cst_153 = arith.constant dense<0.000000e+00> : vector<16x32xf32>
    %450 = tpu.matmul %448, %449, %cst_153 {dimension_numbers = #tpu.dot_dimension_numbers<[1], [0], [0], [1], [0, 0, 1, 1], [], []>} : vector<16x64xf32>, vector<64x32xf32>, vector<16x32xf32> -> vector<16x32xf32>
    %c18 = arith.constant 18 : index
    %c0_154 = arith.constant 0 : index
    %451 = vector.load %arg5[%c18, %c0_154] : memref<32x128xf32, #tpu.memory_space<vmem>>, vector<1x32xf32>
    %452 = vector.broadcast %451 : vector<1x32xf32> to vector<16x32xf32>
    %453 = arith.addf %450, %452 : vector<16x32xf32>
    %454 = arith.addf %417, %453 : vector<16x32xf32>
    %c0_155 = arith.constant 0 : index
    %c0_156 = arith.constant 0 : index
    %455 = vector.load %arg6[%c0_155, %c0_156] : memref<16x32xf32, #tpu.memory_space<vmem>>, vector<16x32xf32>
    tpu.vector_store %arg6[%c0_155, %c0_156], %454 {strides = array<i32>} : memref<16x32xf32, #tpu.memory_space<vmem>>, vector<16x32xf32>,
    return
  }
}

</mosaic_0001>

<llo_original>
// kernel: tpu_custom_call.1
$region0: #{tpu_custom_call.1}
  #allocation0 [shape = 'u32[]', space=smem, size = 0x4, offset = 0x4, fixed_abs, tag = 'smem constant byte address 0x4 - core index']
  #allocation1 [shape = 'u32[144,128]{1,0:T(1,128)}', space=vmem, size = 0x12000, scoped, tag = 'internal scratch']
  %s0 = inlined_call_operand.vmem [shape: f32[16,32], index: 0, kind: input, shape index: {}]
  %s1 = inlined_call_operand.vmem [shape: f32[16,1], index: 1, kind: input, shape index: {}]
  %s2 = inlined_call_operand.vmem [shape: f32[16,16], index: 2, kind: input, shape index: {}]
  %s3 = inlined_call_operand.vmem [shape: f32[32,768], index: 3, kind: input, shape index: {}]
  %s4 = inlined_call_operand.vmem [shape: f32[192,32], index: 4, kind: input, shape index: {}]
  %s5 = inlined_call_operand.vmem [shape: f32[32,128], index: 5, kind: input, shape index: {}]
  %s6 = inlined_call_operand.hbm [shape: f32[16,32], index: 6, kind: output, shape index: {}]
  %s7 = sld [smem:[#allocation0]]
  $region34: #{tpu_custom_call.1} parent=0
    _
  %s9 = ssub.s32 1, %s7
  %s10 = scalar_select 0, %s9, %s7
  $region1: #{tpu_custom_call.1} parent=0
    #allocation2 [shape = 'u8[8192]{0}', space=vmem, size = 0x2000, scoped, tag = 'output window, operand 0, single buffered']
    #allocation3 [shape = 's32[1]{0}', space=sflag, size = 0x4, scoped, tag = 'scoped memory for tpu_custom_call.1']
    %11 = vsyncpa [#allocation3], 0
    // Predicated region
    $region2: #{tpu_custom_call.1} parent=1 // pred_check
      _
    $region3: #{tpu_custom_call.1} parent=1 // pred_check_branch
      %13 = sbr.rel (0) target = $region5
    $region4: #{tpu_custom_call.1} parent=1 // pred_region
      _
    $region5: #{tpu_custom_call.1} parent=1 // pred_fallthru
      _
    // Predicated region
    $region6: #{tpu_custom_call.1} parent=1 // pred_check
      _
    $region7: #{tpu_custom_call.1} parent=1 // pred_check_branch
      %15 = sbr.rel (0) target = $region9
    $region8: #{tpu_custom_call.1} parent=1 // pred_region
      _
    $region9: #{tpu_custom_call.1} parent=1 // pred_fallthru
      _
    // Predicated region
    $region10: #{tpu_custom_call.1} parent=1 // pred_check
      _
    $region11: #{tpu_custom_call.1} parent=1 // pred_check_branch
      %17 = sbr.rel (0) target = $region13
    $region12: #{tpu_custom_call.1} parent=1 // pred_region
      _
    $region13: #{tpu_custom_call.1} parent=1 // pred_fallthru
      _
    // Predicated region
    $region14: #{tpu_custom_call.1} parent=1 // pred_check
      _
    $region15: #{tpu_custom_call.1} parent=1 // pred_check_branch
      %19 = sbr.rel (0) target = $region17
    $region16: #{tpu_custom_call.1} parent=1 // pred_region
      _
    $region17: #{tpu_custom_call.1} parent=1 // pred_fallthru
      _
    // Predicated region
    $region18: #{tpu_custom_call.1} parent=1 // pred_check
      _
    $region19: #{tpu_custom_call.1} parent=1 // pred_check_branch
      %21 = sbr.rel (0) target = $region21
    $region20: #{tpu_custom_call.1} parent=1 // pred_region
      _
    $region21: #{tpu_custom_call.1} parent=1 // pred_fallthru
      _
    // Predicated region
    $region22: #{tpu_custom_call.1} parent=1 // pred_check
      _
    $region23: #{tpu_custom_call.1} parent=1 // pred_check_branch
      %23 = sbr.rel (0) target = $region25
    $region24: #{tpu_custom_call.1} parent=1 // pred_region
      _
    $region25: #{tpu_custom_call.1} parent=1 // pred_fallthru
      _
    %v24 = vld [vmem:[%s0] sm:$0xff]
    %v25 = vld [vmem:[%s0 + $0x8] sm:$0xff]
    %v26 = vld [vmem:[%s1] sm:$0xff]
    %v27 = vld [vmem:[%s1 + $0x8] sm:$0xff]
    %v28 = vld [vmem:[%s2] sm:$0xff]
    %v29 = vld [vmem:[%s2 + $0x8] sm:$0xff]
    %v30 = vlaneseq
    %v31 = vshrl.u32 %v30, 7
    %v32 = vadd.s32 %v31, 8
    %v33 = vand.u32 %v31, 7
    %v34 = vand.u32 %v32, 7
    %v35 = vld [vmem:[%s5] sm:$0x1]
    %v36 = vld [vmem:[%s5 + $0x1] sm:$0x1]
    %vm37 = vcmask 261120
    %v38 = vsel %vm37, %v24, 0.0
    %39 = vadd.xlane.f32.xlu0 %v38
    %v40 = vpop.xlane.xlu0 %39
    %v41 = vsel %vm37, %v25, 0.0
    %42 = vadd.xlane.f32.xlu0 %v41
    %v43 = vpop.xlane.xlu0 %42
    %v44 = vrcp.pop 32.0
    %v45 = vmul.f32 %v40, %v44
    %v46 = vmul.f32 %v43, %v44
    %v47 = vsub.f32 %v24, %v45
    %v48 = vsub.f32 %v25, %v46
    %v49 = vmul.f32 %v47, %v47
    %v50 = vmul.f32 %v48, %v48
    %v51 = vsel %vm37, %v49, 0.0
    %52 = vadd.xlane.f32.xlu0 %v51
    %v53 = vpop.xlane.xlu0 %52
    %v54 = vsel %vm37, %v50, 0.0
    %55 = vadd.xlane.f32.xlu0 %v54
    %v56 = vpop.xlane.xlu0 %55
    %v57 = vrcp.pop 31.0
    %v58 = vmul.f32 %v53, %v57
    %v59 = vmul.f32 %v56, %v57
    %v60 = vlaneseq
    %v61 = vshrl.u32 %v60, 7
    %v62 = vsub.s32 0, %v61
    %v63 = vrot.slane %v35, %v62
    %v64 = vmul.f32 %v63, %v47
    %v65 = vmul.f32 %v63, %v48
    %v66 = vrsqrt.pop %v58
    %v67 = vmul.f32 %v58, %v66
    %vm68 = vcmp.eq.f32.partialorder %v58, inf
    %v69 = vsel %vm68, %v58, %v67
    %vm70 = vcmp.eq.f32.partialorder %v58, 0.0
    %v71 = vand.u32 %v58, 2147483648
    %v72 = vsel %vm70, %v71, %v69
    %v73 = vrsqrt.pop %v59
    %v74 = vmul.f32 %v59, %v73
    %vm75 = vcmp.eq.f32.partialorder %v59, inf
    %v76 = vsel %vm75, %v59, %v74
    %vm77 = vcmp.eq.f32.partialorder %v59, 0.0
    %v78 = vand.u32 %v59, 2147483648
    %v79 = vsel %vm77, %v78, %v76
    %v80 = vadd.f32 %v72, 1e-06
    %v81 = vadd.f32 %v79, 1e-06
    %v82 = vrcp.pop %v80
    %v83 = vmul.f32 %v64, %v82
    %v84 = vrcp.pop %v81
    %v85 = vmul.f32 %v65, %v84
    %v86 = vlaneseq
    %v87 = vshrl.u32 %v86, 7
    %v88 = vsub.s32 0, %v87
    %v89 = vrot.slane %v36, %v88
    %v90 = vadd.f32 %v83, %v89
    %v91 = vadd.f32 %v85, %v89
    %v92 = vld [vmem:[%s3] sm:$0xff]
    %v93 = vld [vmem:[%s3 + $0x30] sm:$0xff]
    %v94 = vld [vmem:[%s3 + $0x60] sm:$0xff]
    %v95 = vld [vmem:[%s3 + $0x90] sm:$0xff]
    %v96 = vld [vmem:[%s5 + $0x2] sm:$0x1]
    %v97 = vlaneseq
    %v98 = vshrl.u32 %v97, 7
    %v99 = vsub.s32 0, %v98
    %v100 = vrot.slane %v96, %v99
    %v102 = vsel %vm37, %v90, 0
    %v105 = vsel %vm37, %v91, 0
    %107 = vmatprep.subr.mxu0 0.0
    %108 = vmatpush1.msra.mxu0 0.0
    %109 = vmatprep.subr.mxu0 0.0
    %110 = vmatpush1.msra.mxu0 0.0
    %111 = vmatprep.subr.mxu0 0.0
    %112 = vmatpush1.msra.mxu0 0.0
    %113 = vmatprep.subr.mxu0 0.0
    %114 = vmatpush1.msra.mxu0 0.0
    %115 = vmatprep.subr.mxu0 0.0
    %116 = vmatpush1.msra.mxu0 0.0
    %117 = vmatprep.subr.mxu0 0.0
    %118 = vmatpush1.msra.mxu0 0.0
    %119 = vmatprep.subr.mxu0 0.0
    %120 = vmatpush1.msra.mxu0 0.0
    %121 = vmatprep.subr.mxu0 0.0
    %122 = vmatpush1.msra.mxu0 0.0
    %123 = vmatprep.subr.mxu0 0.0
    %124 = vmatpush1.msra.mxu0 0.0
    %125 = vmatprep.subr.mxu0 0.0
    %126 = vmatpush1.msra.mxu0 0.0
    %127 = vmatprep.subr.mxu0 0.0
    %128 = vmatpush1.msra.mxu0 0.0
    %129 = vmatprep.subr.mxu0 0.0
    %130 = vmatpush1.msra.mxu0 0.0
    %131 = vmatprep.subr.mxu0 0.0
    %132 = vmatpush1.msra.mxu0 %v95
    %133 = vmatprep.subr.mxu0 0.0
    %134 = vmatpush1.msra.mxu0 %v94
    %135 = vmatprep.subr.mxu0 0.0
    %136 = vmatpush1.msra.mxu0 %v93
    %137 = vmatprep.subr.mxu0 0.0
    %138 = vmatpush1.msra.mxu0 %v92
    %139 = vmatprep.subr.mxu0 0.0
    %140 = vmatpush2.msra.mxu0 0.0
    %141 = vmatprep.subr.mxu0 0.0
    %142 = vmatpush2.msra.mxu0 0.0
    %143 = vmatprep.subr.mxu0 0.0
    %144 = vmatpush2.msra.mxu0 0.0
    %145 = vmatprep.subr.mxu0 0.0
    %146 = vmatpush2.msra.mxu0 0.0
    %147 = vmatprep.subr.mxu0 0.0
    %148 = vmatpush2.msra.mxu0 0.0
    %149 = vmatprep.subr.mxu0 0.0
    %150 = vmatpush2.msra.mxu0 0.0
    %151 = vmatprep.subr.mxu0 0.0
    %152 = vmatpush2.msra.mxu0 0.0
    %153 = vmatprep.subr.mxu0 0.0
    %154 = vmatpush2.msra.mxu0 0.0
    %155 = vmatprep.subr.mxu0 0.0
    %156 = vmatpush2.msra.mxu0 0.0
    %157 = vmatprep.subr.mxu0 0.0
    %158 = vmatpush2.msra.mxu0 0.0
    %159 = vmatprep.subr.mxu0 0.0
    %160 = vmatpush2.msra.mxu0 0.0
    %161 = vmatprep.subr.mxu0 0.0
    %162 = vmatpush2.msra.mxu0 0.0
    %163 = vmatprep.subr.mxu0 0.0
    %164 = vmatpush2.msra.mxu0 0.0
    %165 = vmatprep.subr.mxu0 0.0
    %166 = vmatpush2.msra.mxu0 0.0
    %167 = vmatprep.subr.mxu0 0.0
    %168 = vmatpush2.msra.mxu0 0.0
    %169 = vmatprep.subr.mxu0 0.0
    %170 = vmatpush2.msra.mxu0 0.0
    %171 = vmatprep.mubr.f32.mxu0 0.0
    %172 = vmatmul.mubr.f32.gmra.mxu0 %v102
    %v173 = vpop.f32.mrf.mxu0
    %v174 = vadd.f32 %v100, %v173
    %v175 = vpop.f32.mrf.mxu0
    %176 = vmatprep.mubr.f32.mxu0 0.0
    %177 = vmatmul.mubr.f32.gmra.mxu0 %v105
    %v178 = vpop.f32.mrf.mxu0
    %v179 = vadd.f32 %v100, %v178
    %v180 = vpop.f32.mrf.mxu0
    %181 = vdwg.mxu0
    %v182 = vxor.u32 %v174, 2147483648
    %v183 = vxor.u32 %v179, 2147483648
    %v184 = vmul.f32 %v182, 1.442695
    %v185 = vpow.pop %v184
    %v186 = vmul.f32 %v183, 1.442695
    %v187 = vpow.pop %v186
    %v188 = vadd.f32 %v185, 1.0
    %v189 = vadd.f32 %v187, 1.0
    %v190 = vrcp.pop %v188
    %v191 = vmul.f32 1.0, %v190
    %v192 = vrcp.pop %v189
    %v193 = vmul.f32 1.0, %v192
    %196 = vrot.lane.b32.xlu0 %v191, 96
    %v197 = vpop.permute.xlu0 %196
    %198 = vrot.lane.b32.xlu0 %v193, 96
    %v199 = vpop.permute.xlu0 %198
    %v202 = vmul.f32 %v174, %v197
    %v203 = vmul.f32 %v179, %v199
    %v204 = vadd.f32 %v24, %v202
    %v205 = vadd.f32 %v25, %v203
    %v206 = vld [vmem:[%s5 + $0x3] sm:$0x1]
    %v207 = vld [vmem:[%s5 + $0x4] sm:$0x1]
    %v208 = vsel %vm37, %v204, 0.0
    %209 = vadd.xlane.f32.xlu0 %v208
    %v210 = vpop.xlane.xlu0 %209
    %v211 = vsel %vm37, %v205, 0.0
    %212 = vadd.xlane.f32.xlu0 %v211
    %v213 = vpop.xlane.xlu0 %212
    %v214 = vmul.f32 %v210, %v44
    %v215 = vmul.f32 %v213, %v44
    %v216 = vsub.f32 %v204, %v214
    %v217 = vsub.f32 %v205, %v215
    %v218 = vmul.f32 %v216, %v216
    %v219 = vmul.f32 %v217, %v217
    %v220 = vsel %vm37, %v218, 0.0
    %221 = vadd.xlane.f32.xlu0 %v220
    %v222 = vpop.xlane.xlu0 %221
    %v223 = vsel %vm37, %v219, 0.0
    %224 = vadd.xlane.f32.xlu0 %v223
    %v225 = vpop.xlane.xlu0 %224
    %v226 = vmul.f32 %v222, %v57
    %v227 = vmul.f32 %v225, %v57
    %v228 = vlaneseq
    %v229 = vshrl.u32 %v228, 7
    %v230 = vsub.s32 0, %v229
    %v231 = vrot.slane %v206, %v230
    %v232 = vmul.f32 %v231, %v216
    %v233 = vmul.f32 %v231, %v217
    %v234 = vrsqrt.pop %v226
    %v235 = vmul.f32 %v226, %v234
    %vm236 = vcmp.eq.f32.partialorder %v226, inf
    %v237 = vsel %vm236, %v226, %v235
    %vm238 = vcmp.eq.f32.partialorder %v226, 0.0
    %v239 = vand.u32 %v226, 2147483648
    %v240 = vsel %vm238, %v239, %v237
    %v241 = vrsqrt.pop %v227
    %v242 = vmul.f32 %v227, %v241
    %vm243 = vcmp.eq.f32.partialorder %v227, inf
    %v244 = vsel %vm243, %v227, %v242
    %vm245 = vcmp.eq.f32.partialorder %v227, 0.0
    %v246 = vand.u32 %v227, 2147483648
    %v247 = vsel %vm245, %v246, %v244
    %v248 = vadd.f32 %v240, 1e-06
    %v249 = vadd.f32 %v247, 1e-06
    %v250 = vrcp.pop %v248
    %v251 = vmul.f32 %v232, %v250
    %v252 = vrcp.pop %v249
    %v253 = vmul.f32 %v233, %v252
    %v254 = vlaneseq
    %v255 = vshrl.u32 %v254, 7
    %v256 = vsub.s32 0, %v255
    %v257 = vrot.slane %v207, %v256
    %v258 = vadd.f32 %v251, %v257
    %v259 = vadd.f32 %v253, %v257
    %vm260 = vcmp.eq.f32.partialorder %v26, 0.0
    %vm261 = vcmp.eq.f32.partialorder %v27, 0.0
    %v262 = vsel %vm260, 1, 0
    %v263 = vsel %vm261, 1, 0
    %264 = vset.pattern.permute.xlu0 0
    %265 = vperm.xlu0 %264, %v262
    %v266 = vpop.permute.xlu0 %265
    %267 = vset.pattern.permute.xlu0 0
    %268 = vperm.xlu0 %267, %v263
    %v269 = vpop.permute.xlu0 %268
    %vm270 = vcmp.eq.s32.totalorder %v266, 1
    %vm271 = vcmp.eq.s32.totalorder %v269, 1
    %v272 = vsel %vm270, 0.0, %v258
    %v273 = vsel %vm271, 0.0, %v259
    %v274 = vld [vmem:[%s3] sm:$0xff]
    %v275 = vld [vmem:[%s3 + $0x8] sm:$0xff]
    %v276 = vld [vmem:[%s3 + $0x30] sm:$0xff]
    %v277 = vld [vmem:[%s3 + $0x38] sm:$0xff]
    %v278 = vld [vmem:[%s3 + $0x60] sm:$0xff]
    %v279 = vld [vmem:[%s3 + $0x68] sm:$0xff]
    %v280 = vld [vmem:[%s3 + $0x90] sm:$0xff]
    %v281 = vld [vmem:[%s3 + $0x98] sm:$0xff]
    %v282 = vld [vmem:[%s5 + $0x5] sm:$0x1]
    %v283 = vlaneseq
    %v284 = vshrl.u32 %v283, 7
    %v285 = vsub.s32 0, %v284
    %v286 = vrot.slane %v282, %v285
    %295 = vrot.lane.b32.xlu0 %v274, 64
    %v296 = vpop.permute.xlu0 %295
    %297 = vrot.lane.b32.xlu0 %v275, 64
    %v298 = vpop.permute.xlu0 %297
    %299 = vrot.lane.b32.xlu0 %v276, 64
    %v300 = vpop.permute.xlu0 %299
    %301 = vrot.lane.b32.xlu0 %v277, 64
    %v302 = vpop.permute.xlu0 %301
    %303 = vrot.lane.b32.xlu0 %v278, 64
    %v304 = vpop.permute.xlu0 %303
    %305 = vrot.lane.b32.xlu0 %v279, 64
    %v306 = vpop.permute.xlu0 %305
    %307 = vrot.lane.b32.xlu0 %v280, 64
    %v308 = vpop.permute.xlu0 %307
    %309 = vrot.lane.b32.xlu0 %v281, 64
    %v310 = vpop.permute.xlu0 %309
    %vm311 = vcmask 523264
    %v312 = vsel %vm311, %v296, %v298
    %v313 = vsel %vm311, %v300, %v302
    %v314 = vsel %vm311, %v304, %v306
    %v315 = vsel %vm311, %v308, %v310
    %v321 = vsel %vm37, %v272, 0
    %v324 = vsel %vm37, %v273, 0
    %326 = vmatprep.subr.mxu0 0.0
    %327 = vmatpush1.msra.mxu0 0.0
    %328 = vmatprep.subr.mxu0 0.0
    %329 = vmatpush1.msra.mxu0 0.0
    %330 = vmatprep.subr.mxu0 0.0
    %331 = vmatpush1.msra.mxu0 0.0
    %332 = vmatprep.subr.mxu0 0.0
    %333 = vmatpush1.msra.mxu0 0.0
    %334 = vmatprep.subr.mxu0 0.0
    %335 = vmatpush1.msra.mxu0 0.0
    %336 = vmatprep.subr.mxu0 0.0
    %337 = vmatpush1.msra.mxu0 0.0
    %338 = vmatprep.subr.mxu0 0.0
    %339 = vmatpush1.msra.mxu0 0.0
    %340 = vmatprep.subr.mxu0 0.0
    %341 = vmatpush1.msra.mxu0 0.0
    %342 = vmatprep.subr.mxu0 0.0
    %343 = vmatpush1.msra.mxu0 0.0
    %344 = vmatprep.subr.mxu0 0.0
    %345 = vmatpush1.msra.mxu0 0.0
    %346 = vmatprep.subr.mxu0 0.0
    %347 = vmatpush1.msra.mxu0 0.0
    %348 = vmatprep.subr.mxu0 0.0
    %349 = vmatpush1.msra.mxu0 0.0
    %350 = vmatprep.subr.mxu0 0.0
    %351 = vmatpush1.msra.mxu0 %v315
    %352 = vmatprep.subr.mxu0 0.0
    %353 = vmatpush1.msra.mxu0 %v314
    %354 = vmatprep.subr.mxu0 0.0
    %355 = vmatpush1.msra.mxu0 %v313
    %356 = vmatprep.subr.mxu0 0.0
    %357 = vmatpush1.msra.mxu0 %v312
    %358 = vmatprep.subr.mxu0 0.0
    %359 = vmatpush2.msra.mxu0 0.0
    %360 = vmatprep.subr.mxu0 0.0
    %361 = vmatpush2.msra.mxu0 0.0
    %362 = vmatprep.subr.mxu0 0.0
    %363 = vmatpush2.msra.mxu0 0.0
    %364 = vmatprep.subr.mxu0 0.0
    %365 = vmatpush2.msra.mxu0 0.0
    %366 = vmatprep.subr.mxu0 0.0
    %367 = vmatpush2.msra.mxu0 0.0
    %368 = vmatprep.subr.mxu0 0.0
    %369 = vmatpush2.msra.mxu0 0.0
    %370 = vmatprep.subr.mxu0 0.0
    %371 = vmatpush2.msra.mxu0 0.0
    %372 = vmatprep.subr.mxu0 0.0
    %373 = vmatpush2.msra.mxu0 0.0
    %374 = vmatprep.subr.mxu0 0.0
    %375 = vmatpush2.msra.mxu0 0.0
    %376 = vmatprep.subr.mxu0 0.0
    %377 = vmatpush2.msra.mxu0 0.0
    %378 = vmatprep.subr.mxu0 0.0
    %379 = vmatpush2.msra.mxu0 0.0
    %380 = vmatprep.subr.mxu0 0.0
    %381 = vmatpush2.msra.mxu0 0.0
    %382 = vmatprep.subr.mxu0 0.0
    %383 = vmatpush2.msra.mxu0 0.0
    %384 = vmatprep.subr.mxu0 0.0
    %385 = vmatpush2.msra.mxu0 0.0
    %386 = vmatprep.subr.mxu0 0.0
    %387 = vmatpush2.msra.mxu0 0.0
    %388 = vmatprep.subr.mxu0 0.0
    %389 = vmatpush2.msra.mxu0 0.0
    %390 = vmatprep.mubr.f32.mxu0 0.0
    %391 = vmatmul.mubr.f32.gmra.mxu0 %v321
    %v392 = vpop.f32.mrf.mxu0
    %v393 = vadd.f32 %v286, %v392
    %v394 = vpop.f32.mrf.mxu0
    %395 = vmatprep.mubr.f32.mxu0 0.0
    %396 = vmatmul.mubr.f32.gmra.mxu0 %v324
    %v397 = vpop.f32.mrf.mxu0
    %v398 = vadd.f32 %v286, %v397
    %v399 = vpop.f32.mrf.mxu0
    %400 = vdwg.mxu0
    %v401 = vmax.f32 %v393, 0.0
    %v402 = vmax.f32 %v398, 0.0
    %v403 = vld [vmem:[%s3 + $0x8] sm:$0xff]
    %v404 = vld [vmem:[%s3 + $0x10] sm:$0xff]
    %v405 = vld [vmem:[%s3 + $0x18] sm:$0xff]
    %v406 = vld [vmem:[%s3 + $0x20] sm:$0xff]
    %v407 = vld [vmem:[%s3 + $0x38] sm:$0xff]
    %v408 = vld [vmem:[%s3 + $0x40] sm:$0xff]
    %v409 = vld [vmem:[%s3 + $0x48] sm:$0xff]
    %v410 = vld [vmem:[%s3 + $0x50] sm:$0xff]
    %v411 = vld [vmem:[%s3 + $0x68] sm:$0xff]
    %v412 = vld [vmem:[%s3 + $0x70] sm:$0xff]
    %v413 = vld [vmem:[%s3 + $0x78] sm:$0xff]
    %v414 = vld [vmem:[%s3 + $0x80] sm:$0xff]
    %v415 = vld [vmem:[%s3 + $0x98] sm:$0xff]
    %v416 = vld [vmem:[%s3 + $0xa0] sm:$0xff]
    %v417 = vld [vmem:[%s3 + $0xa8] sm:$0xff]
    %v418 = vld [vmem:[%s3 + $0xb0] sm:$0xff]
    %435 = vrot.lane.b32.xlu0 %v403, 64
    %v436 = vpop.permute.xlu0 %435
    %437 = vrot.lane.b32.xlu0 %v404, 64
    %v438 = vpop.permute.xlu0 %437
    %439 = vrot.lane.b32.xlu0 %v405, 64
    %v440 = vpop.permute.xlu0 %439
    %441 = vrot.lane.b32.xlu0 %v406, 64
    %v442 = vpop.permute.xlu0 %441
    %443 = vrot.lane.b32.xlu0 %v407, 64
    %v444 = vpop.permute.xlu0 %443
    %445 = vrot.lane.b32.xlu0 %v408, 64
    %v446 = vpop.permute.xlu0 %445
    %447 = vrot.lane.b32.xlu0 %v409, 64
    %v448 = vpop.permute.xlu0 %447
    %449 = vrot.lane.b32.xlu0 %v410, 64
    %v450 = vpop.permute.xlu0 %449
    %451 = vrot.lane.b32.xlu0 %v411, 64
    %v452 = vpop.permute.xlu0 %451
    %453 = vrot.lane.b32.xlu0 %v412, 64
    %v454 = vpop.permute.xlu0 %453
    %455 = vrot.lane.b32.xlu0 %v413, 64
    %v456 = vpop.permute.xlu0 %455
    %457 = vrot.lane.b32.xlu0 %v414, 64
    %v458 = vpop.permute.xlu0 %457
    %459 = vrot.lane.b32.xlu0 %v415, 64
    %v460 = vpop.permute.xlu0 %459
    %461 = vrot.lane.b32.xlu0 %v416, 64
    %v462 = vpop.permute.xlu0 %461
    %463 = vrot.lane.b32.xlu0 %v417, 64
    %v464 = vpop.permute.xlu0 %463
    %465 = vrot.lane.b32.xlu0 %v418, 64
    %v466 = vpop.permute.xlu0 %465
    %v467 = vsel %vm311, %v436, %v438
    %v468 = vsel %vm311, %v438, %v440
    %v469 = vsel %vm311, %v440, %v442
    %v470 = vsel %vm311, %v444, %v446
    %v471 = vsel %vm311, %v446, %v448
    %v472 = vsel %vm311, %v448, %v450
    %v473 = vsel %vm311, %v452, %v454
    %v474 = vsel %vm311, %v454, %v456
    %v475 = vsel %vm311, %v456, %v458
    %v476 = vsel %vm311, %v460, %v462
    %v477 = vsel %vm311, %v462, %v464
    %v478 = vsel %vm311, %v464, %v466
    %491 = vmatprep.subr.mxu0 0.0
    %492 = vmatpush1.msra.mxu0 0.0
    %493 = vmatprep.subr.mxu0 0.0
    %494 = vmatpush1.msra.mxu0 0.0
    %495 = vmatprep.subr.mxu0 0.0
    %496 = vmatpush1.msra.mxu0 0.0
    %497 = vmatprep.subr.mxu0 0.0
    %498 = vmatpush1.msra.mxu0 0.0
    %499 = vmatprep.subr.mxu0 0.0
    %500 = vmatpush1.msra.mxu0 0.0
    %501 = vmatprep.subr.mxu0 0.0
    %502 = vmatpush1.msra.mxu0 0.0
    %503 = vmatprep.subr.mxu0 0.0
    %504 = vmatpush1.msra.mxu0 0.0
    %505 = vmatprep.subr.mxu0 0.0
    %506 = vmatpush1.msra.mxu0 0.0
    %507 = vmatprep.subr.mxu0 0.0
    %508 = vmatpush1.msra.mxu0 0.0
    %509 = vmatprep.subr.mxu0 0.0
    %510 = vmatpush1.msra.mxu0 0.0
    %511 = vmatprep.subr.mxu0 0.0
    %512 = vmatpush1.msra.mxu0 0.0
    %513 = vmatprep.subr.mxu0 0.0
    %514 = vmatpush1.msra.mxu0 0.0
    %515 = vmatprep.subr.mxu0 %v477
    %516 = vmatpush1.msra.mxu0 %v476
    %517 = vmatprep.subr.mxu0 %v474
    %518 = vmatpush1.msra.mxu0 %v473
    %519 = vmatprep.subr.mxu0 %v471
    %520 = vmatpush1.msra.mxu0 %v470
    %521 = vmatprep.subr.mxu0 %v468
    %522 = vmatpush1.msra.mxu0 %v467
    %523 = vmatprep.subr.mxu0 0.0
    %524 = vmatpush2.msra.mxu0 0.0
    %525 = vmatprep.subr.mxu0 0.0
    %526 = vmatpush2.msra.mxu0 0.0
    %527 = vmatprep.subr.mxu0 0.0
    %528 = vmatpush2.msra.mxu0 0.0
    %529 = vmatprep.subr.mxu0 0.0
    %530 = vmatpush2.msra.mxu0 0.0
    %531 = vmatprep.subr.mxu0 0.0
    %532 = vmatpush2.msra.mxu0 0.0
    %533 = vmatprep.subr.mxu0 0.0
    %534 = vmatpush2.msra.mxu0 0.0
    %535 = vmatprep.subr.mxu0 0.0
    %536 = vmatpush2.msra.mxu0 0.0
    %537 = vmatprep.subr.mxu0 0.0
    %538 = vmatpush2.msra.mxu0 0.0
    %539 = vmatprep.subr.mxu0 0.0
    %540 = vmatpush2.msra.mxu0 0.0
    %541 = vmatprep.subr.mxu0 0.0
    %542 = vmatpush2.msra.mxu0 0.0
    %543 = vmatprep.subr.mxu0 0.0
    %544 = vmatpush2.msra.mxu0 0.0
    %545 = vmatprep.subr.mxu0 0.0
    %546 = vmatpush2.msra.mxu0 0.0
    %547 = vmatprep.subr.mxu0 0.0
    %548 = vmatpush2.msra.mxu0 0.0
    %549 = vmatprep.subr.mxu0 0.0
    %550 = vmatpush2.msra.mxu0 0.0
    %551 = vmatprep.subr.mxu0 0.0
    %552 = vmatpush2.msra.mxu0 0.0
    %553 = vmatprep.subr.mxu0 0.0
    %554 = vmatpush2.msra.mxu0 0.0
    %555 = vmatprep.mubr.f32.mxu0 0.0
    %556 = vmatmul.mubr.f32.gmra.mxu0 %v321
    %v557 = vpop.f32.mrf.mxu0
    %v558 = vadd.f32 0.0, %v557
    %v559 = vpop.f32.mrf.mxu0
    %v560 = vadd.f32 0.0, %v559
    %561 = vmatprep.mubr.f32.mxu0 0.0
    %562 = vmatmul.mubr.f32.gmra.mxu0 %v324
    %v563 = vpop.f32.mrf.mxu0
    %v564 = vadd.f32 0.0, %v563
    %v565 = vpop.f32.mrf.mxu0
    %v566 = vadd.f32 0.0, %v565
    %567 = vdwg.mxu0
    %568 = vmatprep.subr.mxu0 0.0
    %569 = vmatpush1.msra.mxu0 0.0
    %570 = vmatprep.subr.mxu0 0.0
    %571 = vmatpush1.msra.mxu0 0.0
    %572 = vmatprep.subr.mxu0 0.0
    %573 = vmatpush1.msra.mxu0 0.0
    %574 = vmatprep.subr.mxu0 0.0
    %575 = vmatpush1.msra.mxu0 0.0
    %576 = vmatprep.subr.mxu0 0.0
    %577 = vmatpush1.msra.mxu0 0.0
    %578 = vmatprep.subr.mxu0 0.0
    %579 = vmatpush1.msra.mxu0 0.0
    %580 = vmatprep.subr.mxu0 0.0
    %581 = vmatpush1.msra.mxu0 0.0
    %582 = vmatprep.subr.mxu0 0.0
    %583 = vmatpush1.msra.mxu0 0.0
    %584 = vmatprep.subr.mxu0 0.0
    %585 = vmatpush1.msra.mxu0 0.0
    %586 = vmatprep.subr.mxu0 0.0
    %587 = vmatpush1.msra.mxu0 0.0
    %588 = vmatprep.subr.mxu0 0.0
    %589 = vmatpush1.msra.mxu0 0.0
    %590 = vmatprep.subr.mxu0 0.0
    %591 = vmatpush1.msra.mxu0 0.0
    %592 = vmatprep.subr.mxu0 0.0
    %593 = vmatpush1.msra.mxu0 %v478
    %594 = vmatprep.subr.mxu0 0.0
    %595 = vmatpush1.msra.mxu0 %v475
    %596 = vmatprep.subr.mxu0 0.0
    %597 = vmatpush1.msra.mxu0 %v472
    %598 = vmatprep.subr.mxu0 0.0
    %599 = vmatpush1.msra.mxu0 %v469
    %600 = vmatprep.subr.mxu0 0.0
    %601 = vmatpush2.msra.mxu0 0.0
    %602 = vmatprep.subr.mxu0 0.0
    %603 = vmatpush2.msra.mxu0 0.0
    %604 = vmatprep.subr.mxu0 0.0
    %605 = vmatpush2.msra.mxu0 0.0
    %606 = vmatprep.subr.mxu0 0.0
    %607 = vmatpush2.msra.mxu0 0.0
    %608 = vmatprep.subr.mxu0 0.0
    %609 = vmatpush2.msra.mxu0 0.0
    %610 = vmatprep.subr.mxu0 0.0
    %611 = vmatpush2.msra.mxu0 0.0
    %612 = vmatprep.subr.mxu0 0.0
    %613 = vmatpush2.msra.mxu0 0.0
    %614 = vmatprep.subr.mxu0 0.0
    %615 = vmatpush2.msra.mxu0 0.0
    %616 = vmatprep.subr.mxu0 0.0
    %617 = vmatpush2.msra.mxu0 0.0
    %618 = vmatprep.subr.mxu0 0.0
    %619 = vmatpush2.msra.mxu0 0.0
    %620 = vmatprep.subr.mxu0 0.0
    %621 = vmatpush2.msra.mxu0 0.0
    %622 = vmatprep.subr.mxu0 0.0
    %623 = vmatpush2.msra.mxu0 0.0
    %624 = vmatprep.subr.mxu0 0.0
    %625 = vmatpush2.msra.mxu0 0.0
    %626 = vmatprep.subr.mxu0 0.0
    %627 = vmatpush2.msra.mxu0 0.0
    %628 = vmatprep.subr.mxu0 0.0
    %629 = vmatpush2.msra.mxu0 0.0
    %630 = vmatprep.subr.mxu0 0.0
    %631 = vmatpush2.msra.mxu0 0.0
    %632 = vmatprep.mubr.f32.mxu0 0.0
    %633 = vmatmul.mubr.f32.gmra.mxu0 %v321
    %v634 = vpop.f32.mrf.mxu0
    %v635 = vadd.f32 0.0, %v634
    %v636 = vpop.f32.mrf.mxu0
    %637 = vmatprep.mubr.f32.mxu0 0.0
    %638 = vmatmul.mubr.f32.gmra.mxu0 %v324
    %v639 = vpop.f32.mrf.mxu0
    %v640 = vadd.f32 0.0, %v639
    %v641 = vpop.f32.mrf.mxu0
    %642 = vdwg.mxu0
    %v643 = vrot.slane %v558, 7
    %v644 = vrot.slane %v564, 7
    %vm645 = vcmp.lt.s32.totalorder %v31, 1
    %v646 = vsel %vm645, %v643, %v644
    %v647 = vsel %vm645, %v644, %v643
    %v648 = vrot.slane %v635, 1
    %v649 = vrot.slane %v640, 1
    %vm650 = vcmp.lt.s32.totalorder %v31, 7
    %v651 = vsel %vm650, %v648, %v649
    %v652 = vsel %vm650, %v649, %v648
    %vm653 = vcmp.gt.s32.totalorder %v33, 0
    %vm654 = vcmp.gt.s32.totalorder %v34, 0
    %v655 = vsel %vm653, 1, 0
    %v656 = vsel %vm654, 1, 0
    %vm657 = vcmp.eq.s32.totalorder %v655, 1
    %vm658 = vcmp.eq.s32.totalorder %v656, 1
    %v659 = vsel %vm657, %v647, 0.0
    %v660 = vsel %vm658, %v646, 0.0
    %v661 = vadd.f32 %v659, %v560
    %v662 = vadd.f32 %v660, %v566
    %vm663 = vcmp.lt.s32.totalorder %v33, 7
    %vm664 = vcmp.lt.s32.totalorder %v34, 7
    %v665 = vsel %vm663, 1, 0
    %v666 = vsel %vm664, 1, 0
    %vm667 = vcmp.eq.s32.totalorder %v665, 1
    %vm668 = vcmp.eq.s32.totalorder %v666, 1
    %v669 = vsel %vm667, %v651, 0.0
    %v670 = vsel %vm668, %v652, 0.0
    %v671 = vadd.f32 %v661, %v669
    %v672 = vadd.f32 %v662, %v670
    %v673 = vld [vmem:[%s5 + $0x6] sm:$0x1]
    %v674 = vlaneseq
    %v675 = vshrl.u32 %v674, 7
    %v676 = vsub.s32 0, %v675
    %v677 = vrot.slane %v673, %v676
    %v678 = vadd.f32 %v671, %v677
    %v679 = vadd.f32 %v672, %v677
    %v680 = vmax.f32 %v678, 0.0
    %v681 = vmax.f32 %v679, 0.0
    %v682 = vadd.f32 %v401, %v680
    %v683 = vadd.f32 %v402, %v681
    %v684 = vld [vmem:[%s5 + $0x7] sm:$0x1]
    %v685 = vld [vmem:[%s5 + $0x8] sm:$0x1]
    %686 = vadd.xlane.f32.xlu0 %v682
    %v687 = vpop.xlane.xlu0 %686
    %688 = vadd.xlane.f32.xlu0 %v683
    %v689 = vpop.xlane.xlu0 %688
    %v690 = vrcp.pop 128.0
    %v691 = vmul.f32 %v687, %v690
    %v692 = vmul.f32 %v689, %v690
    %v693 = vsub.f32 %v682, %v691
    %v694 = vsub.f32 %v683, %v692
    %v695 = vmul.f32 %v693, %v693
    %v696 = vmul.f32 %v694, %v694
    %697 = vadd.xlane.f32.xlu0 %v695
    %v698 = vpop.xlane.xlu0 %697
    %699 = vadd.xlane.f32.xlu0 %v696
    %v700 = vpop.xlane.xlu0 %699
    %v701 = vrcp.pop 127.0
    %v702 = vmul.f32 %v698, %v701
    %v703 = vmul.f32 %v700, %v701
    %v704 = vlaneseq
    %v705 = vshrl.u32 %v704, 7
    %v706 = vsub.s32 0, %v705
    %v707 = vrot.slane %v684, %v706
    %v708 = vmul.f32 %v707, %v693
    %v709 = vmul.f32 %v707, %v694
    %v710 = vrsqrt.pop %v702
    %v711 = vmul.f32 %v702, %v710
    %vm712 = vcmp.eq.f32.partialorder %v702, inf
    %v713 = vsel %vm712, %v702, %v711
    %vm714 = vcmp.eq.f32.partialorder %v702, 0.0
    %v715 = vand.u32 %v702, 2147483648
    %v716 = vsel %vm714, %v715, %v713
    %v717 = vrsqrt.pop %v703
    %v718 = vmul.f32 %v703, %v717
    %vm719 = vcmp.eq.f32.partialorder %v703, inf
    %v720 = vsel %vm719, %v703, %v718
    %vm721 = vcmp.eq.f32.partialorder %v703, 0.0
    %v722 = vand.u32 %v703, 2147483648
    %v723 = vsel %vm721, %v722, %v720
    %v724 = vadd.f32 %v716, 1e-06
    %v725 = vadd.f32 %v723, 1e-06
    %v726 = vrcp.pop %v724
    %v727 = vmul.f32 %v708, %v726
    %v728 = vrcp.pop %v725
    %v729 = vmul.f32 %v709, %v728
    %v730 = vlaneseq
    %v731 = vshrl.u32 %v730, 7
    %v732 = vsub.s32 0, %v731
    %v733 = vrot.slane %v685, %v732
    %v734 = vadd.f32 %v727, %v733
    %v735 = vadd.f32 %v729, %v733
    %v736 = vsel %vm270, 0.0, %v734
    %v737 = vsel %vm271, 0.0, %v735
    %v738 = vld [vmem:[%s5 + $0x13] sm:$0x1]
    %v739 = vrot.slane %v736, 4
    %v740 = vrot.slane %v737, 4
    %vm741 = vcmp.lt.s32.totalorder %v31, 4
    %v742 = vsel %vm741, %v739, %v740
    %v743 = vsel %vm741, %v740, %v739
    %v744 = vadd.s32 %v33, 4294967292
    %v745 = vadd.s32 %v34, 4294967292
    %vm746 = vcmp.ge.s32.totalorder %v744, 0
    %vm747 = vcmp.ge.s32.totalorder %v745, 0
    %vm748 = vcmp.lt.s32.totalorder %v744, 8
    %vm749 = vcmp.lt.s32.totalorder %v745, 8
    %vm750 = vmand %vm746, %vm748
    %vm751 = vmand %vm747, %vm749
    %v752 = vsel %vm750, 1, 0
    %v753 = vsel %vm751, 1, 0
    %vm754 = vcmp.eq.s32.totalorder %v752, 1
    %vm755 = vcmp.eq.s32.totalorder %v753, 1
    %v756 = vsel %vm754, %v743, 0.0
    %v757 = vsel %vm755, %v742, 0.0
    %v758 = vlaneseq
    %v759 = vshrl.u32 %v758, 7
    %v760 = vsub.s32 0, %v759
    %v761 = vrot.slane %v738, %v760
    %v762 = vmul.f32 %v756, %v761
    %v763 = vmul.f32 %v757, %v761
    %v764 = vadd.f32 %v762, 0.0
    %v765 = vadd.f32 %v763, 0.0
    %v766 = vld [vmem:[%s5 + $0x14] sm:$0x1]
    %v767 = vrot.slane %v736, 5
    %v768 = vrot.slane %v737, 5
    %vm769 = vcmp.lt.s32.totalorder %v31, 3
    %v770 = vsel %vm769, %v767, %v768
    %v771 = vsel %vm769, %v768, %v767
    %v772 = vadd.s32 %v33, 4294967293
    %v773 = vadd.s32 %v34, 4294967293
    %vm774 = vcmp.ge.s32.totalorder %v772, 0
    %vm775 = vcmp.ge.s32.totalorder %v773, 0
    %vm776 = vcmp.lt.s32.totalorder %v772, 8
    %vm777 = vcmp.lt.s32.totalorder %v773, 8
    %vm778 = vmand %vm774, %vm776
    %vm779 = vmand %vm775, %vm777
    %v780 = vsel %vm778, 1, 0
    %v781 = vsel %vm779, 1, 0
    %vm782 = vcmp.eq.s32.totalorder %v780, 1
    %vm783 = vcmp.eq.s32.totalorder %v781, 1
    %v784 = vsel %vm782, %v771, 0.0
    %v785 = vsel %vm783, %v770, 0.0
    %v786 = vlaneseq
    %v787 = vshrl.u32 %v786, 7
    %v788 = vsub.s32 0, %v787
    %v789 = vrot.slane %v766, %v788
    %v790 = vmul.f32 %v784, %v789
    %v791 = vmul.f32 %v785, %v789
    %v792 = vadd.f32 %v764, %v790
    %v793 = vadd.f32 %v765, %v791
    %v794 = vld [vmem:[%s5 + $0x15] sm:$0x1]
    %v795 = vrot.slane %v736, 6
    %v796 = vrot.slane %v737, 6
    %vm797 = vcmp.lt.s32.totalorder %v31, 2
    %v798 = vsel %vm797, %v795, %v796
    %v799 = vsel %vm797, %v796, %v795
    %v800 = vadd.s32 %v33, 4294967294
    %v801 = vadd.s32 %v34, 4294967294
    %vm802 = vcmp.ge.s32.totalorder %v800, 0
    %vm803 = vcmp.ge.s32.totalorder %v801, 0
    %vm804 = vcmp.lt.s32.totalorder %v800, 8
    %vm805 = vcmp.lt.s32.totalorder %v801, 8
    %vm806 = vmand %vm802, %vm804
    %vm807 = vmand %vm803, %vm805
    %v808 = vsel %vm806, 1, 0
    %v809 = vsel %vm807, 1, 0
    %vm810 = vcmp.eq.s32.totalorder %v808, 1
    %vm811 = vcmp.eq.s32.totalorder %v809, 1
    %v812 = vsel %vm810, %v799, 0.0
    %v813 = vsel %vm811, %v798, 0.0
    %v814 = vlaneseq
    %v815 = vshrl.u32 %v814, 7
    %v816 = vsub.s32 0, %v815
    %v817 = vrot.slane %v794, %v816
    %v818 = vmul.f32 %v812, %v817
    %v819 = vmul.f32 %v813, %v817
    %v820 = vadd.f32 %v792, %v818
    %v821 = vadd.f32 %v793, %v819
    %v822 = vld [vmem:[%s5 + $0x16] sm:$0x1]
    %v823 = vrot.slane %v736, 7
    %v824 = vrot.slane %v737, 7
    %v825 = vsel %vm645, %v823, %v824
    %v826 = vsel %vm645, %v824, %v823
    %v827 = vadd.s32 %v33, 4294967295
    %v828 = vadd.s32 %v34, 4294967295
    %vm829 = vcmp.ge.s32.totalorder %v827, 0
    %vm830 = vcmp.ge.s32.totalorder %v828, 0
    %vm831 = vcmp.lt.s32.totalorder %v827, 8
    %vm832 = vcmp.lt.s32.totalorder %v828, 8
    %vm833 = vmand %vm829, %vm831
    %vm834 = vmand %vm830, %vm832
    %v835 = vsel %vm833, 1, 0
    %v836 = vsel %vm834, 1, 0
    %vm837 = vcmp.eq.s32.totalorder %v835, 1
    %vm838 = vcmp.eq.s32.totalorder %v836, 1
    %v839 = vsel %vm837, %v826, 0.0
    %v840 = vsel %vm838, %v825, 0.0
    %v841 = vlaneseq
    %v842 = vshrl.u32 %v841, 7
    %v843 = vsub.s32 0, %v842
    %v844 = vrot.slane %v822, %v843
    %v845 = vmul.f32 %v839, %v844
    %v846 = vmul.f32 %v840, %v844
    %v847 = vadd.f32 %v820, %v845
    %v848 = vadd.f32 %v821, %v846
    %v849 = vld [vmem:[%s5 + $0x17] sm:$0x1]
    %v850 = vlaneseq
    %v851 = vshrl.u32 %v850, 7
    %v852 = vsub.s32 0, %v851
    %v853 = vrot.slane %v849, %v852
    %v854 = vmul.f32 %v736, %v853
    %v855 = vmul.f32 %v737, %v853
    %v856 = vadd.f32 %v847, %v854
    %v857 = vadd.f32 %v848, %v855
    %v858 = vld [vmem:[%s5 + $0x18] sm:$0x1]
    %v859 = vrot.slane %v736, 1
    %v860 = vrot.slane %v737, 1
    %v861 = vsel %vm650, %v859, %v860
    %v862 = vsel %vm650, %v860, %v859
    %v863 = vadd.s32 %v33, 1
    %v864 = vadd.s32 %v34, 1
    %vm865 = vcmp.ge.s32.totalorder %v863, 0
    %vm866 = vcmp.ge.s32.totalorder %v864, 0
    %vm867 = vcmp.lt.s32.totalorder %v863, 8
    %vm868 = vcmp.lt.s32.totalorder %v864, 8
    %vm869 = vmand %vm865, %vm867
    %vm870 = vmand %vm866, %vm868
    %v871 = vsel %vm869, 1, 0
    %v872 = vsel %vm870, 1, 0
    %vm873 = vcmp.eq.s32.totalorder %v871, 1
    %vm874 = vcmp.eq.s32.totalorder %v872, 1
    %v875 = vsel %vm873, %v861, 0.0
    %v876 = vsel %vm874, %v862, 0.0
    %v877 = vlaneseq
    %v878 = vshrl.u32 %v877, 7
    %v879 = vsub.s32 0, %v878
    %v880 = vrot.slane %v858, %v879
    %v881 = vmul.f32 %v875, %v880
    %v882 = vmul.f32 %v876, %v880
    %v883 = vadd.f32 %v856, %v881
    %v884 = vadd.f32 %v857, %v882
    %v885 = vld [vmem:[%s5 + $0x19] sm:$0x1]
    %v886 = vrot.slane %v736, 2
    %v887 = vrot.slane %v737, 2
    %vm888 = vcmp.lt.s32.totalorder %v31, 6
    %v889 = vsel %vm888, %v886, %v887
    %v890 = vsel %vm888, %v887, %v886
    %v891 = vadd.s32 %v33, 2
    %v892 = vadd.s32 %v34, 2
    %vm893 = vcmp.ge.s32.totalorder %v891, 0
    %vm894 = vcmp.ge.s32.totalorder %v892, 0
    %vm895 = vcmp.lt.s32.totalorder %v891, 8
    %vm896 = vcmp.lt.s32.totalorder %v892, 8
    %vm897 = vmand %vm893, %vm895
    %vm898 = vmand %vm894, %vm896
    %v899 = vsel %vm897, 1, 0
    %v900 = vsel %vm898, 1, 0
    %vm901 = vcmp.eq.s32.totalorder %v899, 1
    %vm902 = vcmp.eq.s32.totalorder %v900, 1
    %v903 = vsel %vm901, %v889, 0.0
    %v904 = vsel %vm902, %v890, 0.0
    %v905 = vlaneseq
    %v906 = vshrl.u32 %v905, 7
    %v907 = vsub.s32 0, %v906
    %v908 = vrot.slane %v885, %v907
    %v909 = vmul.f32 %v903, %v908
    %v910 = vmul.f32 %v904, %v908
    %v911 = vadd.f32 %v883, %v909
    %v912 = vadd.f32 %v884, %v910
    %v913 = vld [vmem:[%s5 + $0x1a] sm:$0x1]
    %v914 = vrot.slane %v736, 3
    %v915 = vrot.slane %v737, 3
    %vm916 = vcmp.lt.s32.totalorder %v31, 5
    %v917 = vsel %vm916, %v914, %v915
    %v918 = vsel %vm916, %v915, %v914
    %v919 = vadd.s32 %v33, 3
    %v920 = vadd.s32 %v34, 3
    %vm921 = vcmp.ge.s32.totalorder %v919, 0
    %vm922 = vcmp.ge.s32.totalorder %v920, 0
    %vm923 = vcmp.lt.s32.totalorder %v919, 8
    %vm924 = vcmp.lt.s32.totalorder %v920, 8
    %vm925 = vmand %vm921, %vm923
    %vm926 = vmand %vm922, %vm924
    %v927 = vsel %vm925, 1, 0
    %v928 = vsel %vm926, 1, 0
    %vm929 = vcmp.eq.s32.totalorder %v927, 1
    %vm930 = vcmp.eq.s32.totalorder %v928, 1
    %v931 = vsel %vm929, %v917, 0.0
    %v932 = vsel %vm930, %v918, 0.0
    %v933 = vlaneseq
    %v934 = vshrl.u32 %v933, 7
    %v935 = vsub.s32 0, %v934
    %v936 = vrot.slane %v913, %v935
    %v937 = vmul.f32 %v931, %v936
    %v938 = vmul.f32 %v932, %v936
    %v939 = vadd.f32 %v911, %v937
    %v940 = vadd.f32 %v912, %v938
    %v941 = vld [vmem:[%s5 + $0x1b] sm:$0x1]
    %v942 = vadd.s32 %v33, 4
    %v943 = vadd.s32 %v34, 4
    %vm944 = vcmp.ge.s32.totalorder %v942, 0
    %vm945 = vcmp.ge.s32.totalorder %v943, 0
    %vm946 = vcmp.lt.s32.totalorder %v942, 8
    %vm947 = vcmp.lt.s32.totalorder %v943, 8
    %vm948 = vmand %vm944, %vm946
    %vm949 = vmand %vm945, %vm947
    %v950 = vsel %vm948, 1, 0
    %v951 = vsel %vm949, 1, 0
    %vm952 = vcmp.eq.s32.totalorder %v950, 1
    %vm953 = vcmp.eq.s32.totalorder %v951, 1
    %v954 = vsel %vm952, %v742, 0.0
    %v955 = vsel %vm953, %v743, 0.0
    %v956 = vlaneseq
    %v957 = vshrl.u32 %v956, 7
    %v958 = vsub.s32 0, %v957
    %v959 = vrot.slane %v941, %v958
    %v960 = vmul.f32 %v954, %v959
    %v961 = vmul.f32 %v955, %v959
    %v962 = vadd.f32 %v939, %v960
    %v963 = vadd.f32 %v940, %v961
    %v964 = vld [vmem:[%s5 + $0x9] sm:$0x1]
    %v965 = vlaneseq
    %v966 = vshrl.u32 %v965, 7
    %v967 = vsub.s32 0, %v966
    %v968 = vrot.slane %v964, %v967
    %v969 = vadd.f32 %v962, %v968
    %v970 = vadd.f32 %v963, %v968
    %v971 = vld [vmem:[%s4] sm:$0xff]
    %v972 = vld [vmem:[%s4 + $0x8] sm:$0xff]
    %v973 = vld [vmem:[%s4 + $0x10] sm:$0xff]
    %v974 = vld [vmem:[%s4 + $0x18] sm:$0xff]
    %v975 = vld [vmem:[%s4 + $0x20] sm:$0xff]
    %v976 = vld [vmem:[%s4 + $0x28] sm:$0xff]
    %v977 = vld [vmem:[%s4 + $0x30] sm:$0xff]
    %v978 = vld [vmem:[%s4 + $0x38] sm:$0xff]
    %v979 = vld [vmem:[%s4 + $0x40] sm:$0xff]
    %v980 = vld [vmem:[%s4 + $0x48] sm:$0xff]
    %v981 = vld [vmem:[%s4 + $0x50] sm:$0xff]
    %v982 = vld [vmem:[%s4 + $0x58] sm:$0xff]
    %v983 = vld [vmem:[%s4 + $0x60] sm:$0xff]
    %v984 = vld [vmem:[%s4 + $0x68] sm:$0xff]
    %v985 = vld [vmem:[%s4 + $0x70] sm:$0xff]
    %v986 = vld [vmem:[%s4 + $0x78] sm:$0xff]
    %v987 = vld [vmem:[%s5 + $0xa] sm:$0x1]
    %v988 = vlaneseq
    %v989 = vshrl.u32 %v988, 7
    %v990 = vsub.s32 0, %v989
    %v991 = vrot.slane %v987, %v990
    %992 = vmatprep.subr.mxu0 0.0
    %993 = vmatpush1.msra.mxu0 %v986
    %994 = vmatprep.subr.mxu0 0.0
    %995 = vmatpush1.msra.mxu0 %v985
    %996 = vmatprep.subr.mxu0 0.0
    %997 = vmatpush1.msra.mxu0 %v984
    %998 = vmatprep.subr.mxu0 0.0
    %999 = vmatpush1.msra.mxu0 %v983
    %1000 = vmatprep.subr.mxu0 0.0
    %1001 = vmatpush1.msra.mxu0 %v982
    %1002 = vmatprep.subr.mxu0 0.0
    %1003 = vmatpush1.msra.mxu0 %v981
    %1004 = vmatprep.subr.mxu0 0.0
    %1005 = vmatpush1.msra.mxu0 %v980
    %1006 = vmatprep.subr.mxu0 0.0
    %1007 = vmatpush1.msra.mxu0 %v979
    %1008 = vmatprep.subr.mxu0 0.0
    %1009 = vmatpush1.msra.mxu0 %v978
    %1010 = vmatprep.subr.mxu0 0.0
    %1011 = vmatpush1.msra.mxu0 %v977
    %1012 = vmatprep.subr.mxu0 0.0
    %1013 = vmatpush1.msra.mxu0 %v976
    %1014 = vmatprep.subr.mxu0 0.0
    %1015 = vmatpush1.msra.mxu0 %v975
    %1016 = vmatprep.subr.mxu0 0.0
    %1017 = vmatpush1.msra.mxu0 %v974
    %1018 = vmatprep.subr.mxu0 0.0
    %1019 = vmatpush1.msra.mxu0 %v973
    %1020 = vmatprep.subr.mxu0 0.0
    %1021 = vmatpush1.msra.mxu0 %v972
    %1022 = vmatprep.subr.mxu0 0.0
    %1023 = vmatpush1.msra.mxu0 %v971
    %1024 = vmatprep.subr.mxu0 0.0
    %1025 = vmatpush2.msra.mxu0 0.0
    %1026 = vmatprep.subr.mxu0 0.0
    %1027 = vmatpush2.msra.mxu0 0.0
    %1028 = vmatprep.subr.mxu0 0.0
    %1029 = vmatpush2.msra.mxu0 0.0
    %1030 = vmatprep.subr.mxu0 0.0
    %1031 = vmatpush2.msra.mxu0 0.0
    %1032 = vmatprep.subr.mxu0 0.0
    %1033 = vmatpush2.msra.mxu0 0.0
    %1034 = vmatprep.subr.mxu0 0.0
    %1035 = vmatpush2.msra.mxu0 0.0
    %1036 = vmatprep.subr.mxu0 0.0
    %1037 = vmatpush2.msra.mxu0 0.0
    %1038 = vmatprep.subr.mxu0 0.0
    %1039 = vmatpush2.msra.mxu0 0.0
    %1040 = vmatprep.subr.mxu0 0.0
    %1041 = vmatpush2.msra.mxu0 0.0
    %1042 = vmatprep.subr.mxu0 0.0
    %1043 = vmatpush2.msra.mxu0 0.0
    %1044 = vmatprep.subr.mxu0 0.0
    %1045 = vmatpush2.msra.mxu0 0.0
    %1046 = vmatprep.subr.mxu0 0.0
    %1047 = vmatpush2.msra.mxu0 0.0
    %1048 = vmatprep.subr.mxu0 0.0
    %1049 = vmatpush2.msra.mxu0 0.0
    %1050 = vmatprep.subr.mxu0 0.0
    %1051 = vmatpush2.msra.mxu0 0.0
    %1052 = vmatprep.subr.mxu0 0.0
    %1053 = vmatpush2.msra.mxu0 0.0
    %1054 = vmatprep.subr.mxu0 0.0
    %1055 = vmatpush2.msra.mxu0 0.0
    %1056 = vmatprep.mubr.f32.mxu0 0.0
    %1057 = vmatmul.mubr.f32.gmra.mxu0 %v969
    %v1058 = vpop.f32.mrf.mxu0
    %v1059 = vadd.f32 %v991, %v1058
    %v1060 = vpop.f32.mrf.mxu0
    %1061 = vmatprep.mubr.f32.mxu0 0.0
    %1062 = vmatmul.mubr.f32.gmra.mxu0 %v970
    %v1063 = vpop.f32.mrf.mxu0
    %v1064 = vadd.f32 %v991, %v1063
    %v1065 = vpop.f32.mrf.mxu0
    %1066 = vdwg.mxu0
    %v1067 = vadd.f32 %v204, %v1059
    %v1068 = vadd.f32 %v205, %v1064
    %v1069 = vld [vmem:[%s5 + $0xb] sm:$0x1]
    %v1070 = vld [vmem:[%s5 + $0xc] sm:$0x1]
    %v1071 = vsel %vm37, %v1067, 0.0
    %1072 = vadd.xlane.f32.xlu0 %v1071
    %v1073 = vpop.xlane.xlu0 %1072
    %v1074 = vsel %vm37, %v1068, 0.0
    %1075 = vadd.xlane.f32.xlu0 %v1074
    %v1076 = vpop.xlane.xlu0 %1075
    %v1077 = vmul.f32 %v1073, %v44
    %v1078 = vmul.f32 %v1076, %v44
    %v1079 = vsub.f32 %v1067, %v1077
    %v1080 = vsub.f32 %v1068, %v1078
    %v1081 = vmul.f32 %v1079, %v1079
    %v1082 = vmul.f32 %v1080, %v1080
    %v1083 = vsel %vm37, %v1081, 0.0
    %1084 = vadd.xlane.f32.xlu0 %v1083
    %v1085 = vpop.xlane.xlu0 %1084
    %v1086 = vsel %vm37, %v1082, 0.0
    %1087 = vadd.xlane.f32.xlu0 %v1086
    %v1088 = vpop.xlane.xlu0 %1087
    %v1089 = vmul.f32 %v1085, %v57
    %v1090 = vmul.f32 %v1088, %v57
    %v1091 = vlaneseq
    %v1092 = vshrl.u32 %v1091, 7
    %v1093 = vsub.s32 0, %v1092
    %v1094 = vrot.slane %v1069, %v1093
    %v1095 = vmul.f32 %v1094, %v1079
    %v1096 = vmul.f32 %v1094, %v1080
    %v1097 = vrsqrt.pop %v1089
    %v1098 = vmul.f32 %v1089, %v1097
    %vm1099 = vcmp.eq.f32.partialorder %v1089, inf
    %v1100 = vsel %vm1099, %v1089, %v1098
    %vm1101 = vcmp.eq.f32.partialorder %v1089, 0.0
    %v1102 = vand.u32 %v1089, 2147483648
    %v1103 = vsel %vm1101, %v1102, %v1100
    %v1104 = vrsqrt.pop %v1090
    %v1105 = vmul.f32 %v1090, %v1104
    %vm1106 = vcmp.eq.f32.partialorder %v1090, inf
    %v1107 = vsel %vm1106, %v1090, %v1105
    %vm1108 = vcmp.eq.f32.partialorder %v1090, 0.0
    %v1109 = vand.u32 %v1090, 2147483648
    %v1110 = vsel %vm1108, %v1109, %v1107
    %v1111 = vadd.f32 %v1103, 1e-06
    %v1112 = vadd.f32 %v1110, 1e-06
    %v1113 = vrcp.pop %v1111
    %v1114 = vmul.f32 %v1095, %v1113
    %v1115 = vrcp.pop %v1112
    %v1116 = vmul.f32 %v1096, %v1115
    %v1117 = vlaneseq
    %v1118 = vshrl.u32 %v1117, 7
    %v1119 = vsub.s32 0, %v1118
    %v1120 = vrot.slane %v1070, %v1119
    %v1121 = vadd.f32 %v1114, %v1120
    %v1122 = vadd.f32 %v1116, %v1120
    %v1123 = vld [vmem:[%s3 + $0x20] sm:$0xff]
    %v1124 = vld [vmem:[%s3 + $0x28] sm:$0xff]
    %v1125 = vld [vmem:[%s3 + $0x50] sm:$0xff]
    %v1126 = vld [vmem:[%s3 + $0x58] sm:$0xff]
    %v1127 = vld [vmem:[%s3 + $0x80] sm:$0xff]
    %v1128 = vld [vmem:[%s3 + $0x88] sm:$0xff]
    %v1129 = vld [vmem:[%s3 + $0xb0] sm:$0xff]
    %v1130 = vld [vmem:[%s3 + $0xb8] sm:$0xff]
    %v1131 = vld [vmem:[%s5 + $0xd] sm:$0x1]
    %v1132 = vlaneseq
    %v1133 = vshrl.u32 %v1132, 7
    %v1134 = vsub.s32 0, %v1133
    %v1135 = vrot.slane %v1131, %v1134
    %1144 = vrot.lane.b32.xlu0 %v1123, 64
    %v1145 = vpop.permute.xlu0 %1144
    %1146 = vrot.lane.b32.xlu0 %v1124, 64
    %v1147 = vpop.permute.xlu0 %1146
    %1148 = vrot.lane.b32.xlu0 %v1125, 64
    %v1149 = vpop.permute.xlu0 %1148
    %1150 = vrot.lane.b32.xlu0 %v1126, 64
    %v1151 = vpop.permute.xlu0 %1150
    %1152 = vrot.lane.b32.xlu0 %v1127, 64
    %v1153 = vpop.permute.xlu0 %1152
    %1154 = vrot.lane.b32.xlu0 %v1128, 64
    %v1155 = vpop.permute.xlu0 %1154
    %1156 = vrot.lane.b32.xlu0 %v1129, 64
    %v1157 = vpop.permute.xlu0 %1156
    %1158 = vrot.lane.b32.xlu0 %v1130, 64
    %v1159 = vpop.permute.xlu0 %1158
    %v1160 = vsel %vm311, %v1145, %v1147
    %v1161 = vsel %vm311, %v1149, %v1151
    %v1162 = vsel %vm311, %v1153, %v1155
    %v1163 = vsel %vm311, %v1157, %v1159
    %v1169 = vsel %vm37, %v1121, 0
    %v1172 = vsel %vm37, %v1122, 0
    %1174 = vmatprep.subr.mxu0 0.0
    %1175 = vmatpush1.msra.mxu0 0.0
    %1176 = vmatprep.subr.mxu0 0.0
    %1177 = vmatpush1.msra.mxu0 0.0
    %1178 = vmatprep.subr.mxu0 0.0
    %1179 = vmatpush1.msra.mxu0 0.0
    %1180 = vmatprep.subr.mxu0 0.0
    %1181 = vmatpush1.msra.mxu0 0.0
    %1182 = vmatprep.subr.mxu0 0.0
    %1183 = vmatpush1.msra.mxu0 0.0
    %1184 = vmatprep.subr.mxu0 0.0
    %1185 = vmatpush1.msra.mxu0 0.0
    %1186 = vmatprep.subr.mxu0 0.0
    %1187 = vmatpush1.msra.mxu0 0.0
    %1188 = vmatprep.subr.mxu0 0.0
    %1189 = vmatpush1.msra.mxu0 0.0
    %1190 = vmatprep.subr.mxu0 0.0
    %1191 = vmatpush1.msra.mxu0 0.0
    %1192 = vmatprep.subr.mxu0 0.0
    %1193 = vmatpush1.msra.mxu0 0.0
    %1194 = vmatprep.subr.mxu0 0.0
    %1195 = vmatpush1.msra.mxu0 0.0
    %1196 = vmatprep.subr.mxu0 0.0
    %1197 = vmatpush1.msra.mxu0 0.0
    %1198 = vmatprep.subr.mxu0 0.0
    %1199 = vmatpush1.msra.mxu0 %v1163
    %1200 = vmatprep.subr.mxu0 0.0
    %1201 = vmatpush1.msra.mxu0 %v1162
    %1202 = vmatprep.subr.mxu0 0.0
    %1203 = vmatpush1.msra.mxu0 %v1161
    %1204 = vmatprep.subr.mxu0 0.0
    %1205 = vmatpush1.msra.mxu0 %v1160
    %1206 = vmatprep.subr.mxu0 0.0
    %1207 = vmatpush2.msra.mxu0 0.0
    %1208 = vmatprep.subr.mxu0 0.0
    %1209 = vmatpush2.msra.mxu0 0.0
    %1210 = vmatprep.subr.mxu0 0.0
    %1211 = vmatpush2.msra.mxu0 0.0
    %1212 = vmatprep.subr.mxu0 0.0
    %1213 = vmatpush2.msra.mxu0 0.0
    %1214 = vmatprep.subr.mxu0 0.0
    %1215 = vmatpush2.msra.mxu0 0.0
    %1216 = vmatprep.subr.mxu0 0.0
    %1217 = vmatpush2.msra.mxu0 0.0
    %1218 = vmatprep.subr.mxu0 0.0
    %1219 = vmatpush2.msra.mxu0 0.0
    %1220 = vmatprep.subr.mxu0 0.0
    %1221 = vmatpush2.msra.mxu0 0.0
    %1222 = vmatprep.subr.mxu0 0.0
    %1223 = vmatpush2.msra.mxu0 0.0
    %1224 = vmatprep.subr.mxu0 0.0
    %1225 = vmatpush2.msra.mxu0 0.0
    %1226 = vmatprep.subr.mxu0 0.0
    %1227 = vmatpush2.msra.mxu0 0.0
    %1228 = vmatprep.subr.mxu0 0.0
    %1229 = vmatpush2.msra.mxu0 0.0
    %1230 = vmatprep.subr.mxu0 0.0
    %1231 = vmatpush2.msra.mxu0 0.0
    %1232 = vmatprep.subr.mxu0 0.0
    %1233 = vmatpush2.msra.mxu0 0.0
    %1234 = vmatprep.subr.mxu0 0.0
    %1235 = vmatpush2.msra.mxu0 0.0
    %1236 = vmatprep.subr.mxu0 0.0
    %1237 = vmatpush2.msra.mxu0 0.0
    %1238 = vmatprep.mubr.f32.mxu0 0.0
    %1239 = vmatmul.mubr.f32.gmra.mxu0 %v1169
    %v1240 = vpop.f32.mrf.mxu0
    %v1241 = vadd.f32 %v1135, %v1240
    %v1242 = vpop.f32.mrf.mxu0
    %1243 = vmatprep.mubr.f32.mxu0 0.0
    %1244 = vmatmul.mubr.f32.gmra.mxu0 %v1172
    %v1245 = vpop.f32.mrf.mxu0
    %v1246 = vadd.f32 %v1135, %v1245
    %v1247 = vpop.f32.mrf.mxu0
    %1248 = vdwg.mxu0
    %1251 = vrot.lane.b32.xlu0 %v1241, 96
    %v1252 = vpop.permute.xlu0 %1251
    %1253 = vrot.lane.b32.xlu0 %v1246, 96
    %v1254 = vpop.permute.xlu0 %1253
    %vm1255 = vcmask 64512
    %v1256 = vsel %vm1255, %v1241, 0
    %v1258 = vsel %vm1255, %v1246, 0
    %v1260 = vsel %vm1255, %v1252, 0
    %v1262 = vsel %vm1255, %v1254, 0
    %1264 = vmatprep.subr.mxu0 0.0
    %1265 = vmatpush1.xpose.msra.mxu0 0.0
    %1266 = vmatprep.subr.mxu0 0.0
    %1267 = vmatpush1.xpose.msra.mxu0 0.0
    %1268 = vmatprep.subr.mxu0 0.0
    %1269 = vmatpush1.xpose.msra.mxu0 0.0
    %1270 = vmatprep.subr.mxu0 0.0
    %1271 = vmatpush1.xpose.msra.mxu0 0.0
    %1272 = vmatprep.subr.mxu0 0.0
    %1273 = vmatpush1.xpose.msra.mxu0 0.0
    %1274 = vmatprep.subr.mxu0 0.0
    %1275 = vmatpush1.xpose.msra.mxu0 0.0
    %1276 = vmatprep.subr.mxu0 0.0
    %1277 = vmatpush1.xpose.msra.mxu0 0.0
    %1278 = vmatprep.subr.mxu0 0.0
    %1279 = vmatpush1.xpose.msra.mxu0 0.0
    %1280 = vmatprep.subr.mxu0 0.0
    %1281 = vmatpush1.xpose.msra.mxu0 0.0
    %1282 = vmatprep.subr.mxu0 0.0
    %1283 = vmatpush1.xpose.msra.mxu0 0.0
    %1284 = vmatprep.subr.mxu0 0.0
    %1285 = vmatpush1.xpose.msra.mxu0 0.0
    %1286 = vmatprep.subr.mxu0 0.0
    %1287 = vmatpush1.xpose.msra.mxu0 0.0
    %1288 = vmatprep.subr.mxu0 0.0
    %1289 = vmatpush1.xpose.msra.mxu0 0.0
    %1290 = vmatprep.subr.mxu0 0.0
    %1291 = vmatpush1.xpose.msra.mxu0 0.0
    %1292 = vmatprep.subr.mxu0 0.0
    %1293 = vmatpush1.xpose.msra.mxu0 %v1262
    %1294 = vmatprep.subr.mxu0 0.0
    %1295 = vmatpush1.xpose.msra.mxu0 %v1260
    %1296 = vmatprep.subr.mxu0 0.0
    %1297 = vmatpush2.xpose.msra.mxu0 0.0
    %1298 = vmatprep.subr.mxu0 0.0
    %1299 = vmatpush2.xpose.msra.mxu0 0.0
    %1300 = vmatprep.subr.mxu0 0.0
    %1301 = vmatpush2.xpose.msra.mxu0 0.0
    %1302 = vmatprep.subr.mxu0 0.0
    %1303 = vmatpush2.xpose.msra.mxu0 0.0
    %1304 = vmatprep.subr.mxu0 0.0
    %1305 = vmatpush2.xpose.msra.mxu0 0.0
    %1306 = vmatprep.subr.mxu0 0.0
    %1307 = vmatpush2.xpose.msra.mxu0 0.0
    %1308 = vmatprep.subr.mxu0 0.0
    %1309 = vmatpush2.xpose.msra.mxu0 0.0
    %1310 = vmatprep.subr.mxu0 0.0
    %1311 = vmatpush2.xpose.msra.mxu0 0.0
    %1312 = vmatprep.subr.mxu0 0.0
    %1313 = vmatpush2.xpose.msra.mxu0 0.0
    %1314 = vmatprep.subr.mxu0 0.0
    %1315 = vmatpush2.xpose.msra.mxu0 0.0
    %1316 = vmatprep.subr.mxu0 0.0
    %1317 = vmatpush2.xpose.msra.mxu0 0.0
    %1318 = vmatprep.subr.mxu0 0.0
    %1319 = vmatpush2.xpose.msra.mxu0 0.0
    %1320 = vmatprep.subr.mxu0 0.0
    %1321 = vmatpush2.xpose.msra.mxu0 0.0
    %1322 = vmatprep.subr.mxu0 0.0
    %1323 = vmatpush2.xpose.msra.mxu0 0.0
    %1324 = vmatprep.subr.mxu0 0.0
    %1325 = vmatpush2.xpose.msra.mxu0 0.0
    %1326 = vmatprep.subr.mxu0 0.0
    %1327 = vmatpush2.xpose.msra.mxu0 0.0
    %1328 = vmatprep.mubr.f32.mxu0 0.0
    %1329 = vmatmul.mubr.f32.gmra.mxu0 %v1256
    %v1330 = vpop.f32.mrf.mxu0
    %v1331 = vadd.f32 0.0, %v1330
    %v1332 = vpop.f32.mrf.mxu0
    %1333 = vmatprep.mubr.f32.mxu0 0.0
    %1334 = vmatmul.mubr.f32.gmra.mxu0 %v1258
    %v1335 = vpop.f32.mrf.mxu0
    %v1336 = vadd.f32 0.0, %v1335
    %v1337 = vpop.f32.mrf.mxu0
    %1338 = vdwg.mxu0
    %v1339 = vmul.f32 %v1331, 0.35355338
    %v1340 = vmul.f32 %v1336, 0.35355338
    %v1341 = vadd.f32 %v1339, %v28
    %v1342 = vadd.f32 %v1340, %v29
    %vm1343 = vcmask 130048
    %v1344 = vsel %vm1343, %v1341, -inf
    %1345 = vmax.xlane.f32.xlu0 %v1344
    %v1346 = vpop.xlane.xlu0 %1345
    %v1347 = vsel %vm1343, %v1342, -inf
    %1348 = vmax.xlane.f32.xlu0 %v1347
    %v1349 = vpop.xlane.xlu0 %1348
    %v1350 = vsub.f32 %v1341, %v1346
    %v1351 = vsub.f32 %v1342, %v1349
    %v1352 = vmul.f32 %v1350, 1.442695
    %v1353 = vpow.pop %v1352
    %v1354 = vmul.f32 %v1351, 1.442695
    %v1355 = vpow.pop %v1354
    %v1356 = vsel %vm1343, %v1353, 0.0
    %1357 = vadd.xlane.f32.xlu0 %v1356
    %v1358 = vpop.xlane.xlu0 %1357
    %v1359 = vsel %vm1343, %v1355, 0.0
    %1360 = vadd.xlane.f32.xlu0 %v1359
    %v1361 = vpop.xlane.xlu0 %1360
    %v1362 = vrcp.pop %v1358
    %v1363 = vrcp.pop %v1361
    %v1364 = vmul.f32 %v1353, %v1362
    %v1365 = vmul.f32 %v1355, %v1363
    %1366 = vrot.lane.b32.xlu0 %v1241, 64
    %v1367 = vpop.permute.xlu0 %1366
    %1368 = vrot.lane.b32.xlu0 %v1246, 64
    %v1369 = vpop.permute.xlu0 %1368
    %v1373 = vsel %vm1343, %v1364, 0
    %v1376 = vsel %vm1343, %v1365, 0
    %1378 = vmatprep.subr.mxu0 0.0
    %1379 = vmatpush1.msra.mxu0 0.0
    %1380 = vmatprep.subr.mxu0 0.0
    %1381 = vmatpush1.msra.mxu0 0.0
    %1382 = vmatprep.subr.mxu0 0.0
    %1383 = vmatpush1.msra.mxu0 0.0
    %1384 = vmatprep.subr.mxu0 0.0
    %1385 = vmatpush1.msra.mxu0 0.0
    %1386 = vmatprep.subr.mxu0 0.0
    %1387 = vmatpush1.msra.mxu0 0.0
    %1388 = vmatprep.subr.mxu0 0.0
    %1389 = vmatpush1.msra.mxu0 0.0
    %1390 = vmatprep.subr.mxu0 0.0
    %1391 = vmatpush1.msra.mxu0 0.0
    %1392 = vmatprep.subr.mxu0 0.0
    %1393 = vmatpush1.msra.mxu0 0.0
    %1394 = vmatprep.subr.mxu0 0.0
    %1395 = vmatpush1.msra.mxu0 0.0
    %1396 = vmatprep.subr.mxu0 0.0
    %1397 = vmatpush1.msra.mxu0 0.0
    %1398 = vmatprep.subr.mxu0 0.0
    %1399 = vmatpush1.msra.mxu0 0.0
    %1400 = vmatprep.subr.mxu0 0.0
    %1401 = vmatpush1.msra.mxu0 0.0
    %1402 = vmatprep.subr.mxu0 0.0
    %1403 = vmatpush1.msra.mxu0 0.0
    %1404 = vmatprep.subr.mxu0 0.0
    %1405 = vmatpush1.msra.mxu0 0.0
    %1406 = vmatprep.subr.mxu0 0.0
    %1407 = vmatpush1.msra.mxu0 %v1369
    %1408 = vmatprep.subr.mxu0 0.0
    %1409 = vmatpush1.msra.mxu0 %v1367
    %1410 = vmatprep.subr.mxu0 0.0
    %1411 = vmatpush2.msra.mxu0 0.0
    %1412 = vmatprep.subr.mxu0 0.0
    %1413 = vmatpush2.msra.mxu0 0.0
    %1414 = vmatprep.subr.mxu0 0.0
    %1415 = vmatpush2.msra.mxu0 0.0
    %1416 = vmatprep.subr.mxu0 0.0
    %1417 = vmatpush2.msra.mxu0 0.0
    %1418 = vmatprep.subr.mxu0 0.0
    %1419 = vmatpush2.msra.mxu0 0.0
    %1420 = vmatprep.subr.mxu0 0.0
    %1421 = vmatpush2.msra.mxu0 0.0
    %1422 = vmatprep.subr.mxu0 0.0
    %1423 = vmatpush2.msra.mxu0 0.0
    %1424 = vmatprep.subr.mxu0 0.0
    %1425 = vmatpush2.msra.mxu0 0.0
    %1426 = vmatprep.subr.mxu0 0.0
    %1427 = vmatpush2.msra.mxu0 0.0
    %1428 = vmatprep.subr.mxu0 0.0
    %1429 = vmatpush2.msra.mxu0 0.0
    %1430 = vmatprep.subr.mxu0 0.0
    %1431 = vmatpush2.msra.mxu0 0.0
    %1432 = vmatprep.subr.mxu0 0.0
    %1433 = vmatpush2.msra.mxu0 0.0
    %1434 = vmatprep.subr.mxu0 0.0
    %1435 = vmatpush2.msra.mxu0 0.0
    %1436 = vmatprep.subr.mxu0 0.0
    %1437 = vmatpush2.msra.mxu0 0.0
    %1438 = vmatprep.subr.mxu0 0.0
    %1439 = vmatpush2.msra.mxu0 0.0
    %1440 = vmatprep.subr.mxu0 0.0
    %1441 = vmatpush2.msra.mxu0 0.0
    %1442 = vmatprep.mubr.f32.mxu0 0.0
    %1443 = vmatmul.mubr.f32.gmra.mxu0 %v1373
    %v1444 = vpop.f32.mrf.mxu0
    %v1445 = vadd.f32 0.0, %v1444
    %v1446 = vpop.f32.mrf.mxu0
    %1447 = vmatprep.mubr.f32.mxu0 0.0
    %1448 = vmatmul.mubr.f32.gmra.mxu0 %v1376
    %v1449 = vpop.f32.mrf.mxu0
    %v1450 = vadd.f32 0.0, %v1449
    %v1451 = vpop.f32.mrf.mxu0
    %1452 = vdwg.mxu0
    %v1453 = vld [vmem:[%s3 + $0x28] sm:$0xff]
    %1454 = vrot.lane.b32.xlu0 %v1241, 120
    %v1455 = vpop.permute.xlu0 %1454
    %1456 = vrot.lane.b32.xlu0 %v1246, 120
    %v1457 = vpop.permute.xlu0 %1456
    %1458 = vrot.lane.b32.xlu0 %v1241, 88
    %v1459 = vpop.permute.xlu0 %1458
    %1460 = vrot.lane.b32.xlu0 %v1246, 88
    %v1461 = vpop.permute.xlu0 %1460
    %v1462 = vsel %vm1255, %v1455, 0
    %v1464 = vsel %vm1255, %v1457, 0
    %v1466 = vsel %vm1255, %v1459, 0
    %v1468 = vsel %vm1255, %v1461, 0
    %1470 = vmatprep.subr.mxu0 0.0
    %1471 = vmatpush1.xpose.msra.mxu0 0.0
    %1472 = vmatprep.subr.mxu0 0.0
    %1473 = vmatpush1.xpose.msra.mxu0 0.0
    %1474 = vmatprep.subr.mxu0 0.0
    %1475 = vmatpush1.xpose.msra.mxu0 0.0
    %1476 = vmatprep.subr.mxu0 0.0
    %1477 = vmatpush1.xpose.msra.mxu0 0.0
    %1478 = vmatprep.subr.mxu0 0.0
    %1479 = vmatpush1.xpose.msra.mxu0 0.0
    %1480 = vmatprep.subr.mxu0 0.0
    %1481 = vmatpush1.xpose.msra.mxu0 0.0
    %1482 = vmatprep.subr.mxu0 0.0
    %1483 = vmatpush1.xpose.msra.mxu0 0.0
    %1484 = vmatprep.subr.mxu0 0.0
    %1485 = vmatpush1.xpose.msra.mxu0 0.0
    %1486 = vmatprep.subr.mxu0 0.0
    %1487 = vmatpush1.xpose.msra.mxu0 0.0
    %1488 = vmatprep.subr.mxu0 0.0
    %1489 = vmatpush1.xpose.msra.mxu0 0.0
    %1490 = vmatprep.subr.mxu0 0.0
    %1491 = vmatpush1.xpose.msra.mxu0 0.0
    %1492 = vmatprep.subr.mxu0 0.0
    %1493 = vmatpush1.xpose.msra.mxu0 0.0
    %1494 = vmatprep.subr.mxu0 0.0
    %1495 = vmatpush1.xpose.msra.mxu0 0.0
    %1496 = vmatprep.subr.mxu0 0.0
    %1497 = vmatpush1.xpose.msra.mxu0 0.0
    %1498 = vmatprep.subr.mxu0 0.0
    %1499 = vmatpush1.xpose.msra.mxu0 %v1468
    %1500 = vmatprep.subr.mxu0 0.0
    %1501 = vmatpush1.xpose.msra.mxu0 %v1466
    %1502 = vmatprep.subr.mxu0 0.0
    %1503 = vmatpush2.xpose.msra.mxu0 0.0
    %1504 = vmatprep.subr.mxu0 0.0
    %1505 = vmatpush2.xpose.msra.mxu0 0.0
    %1506 = vmatprep.subr.mxu0 0.0
    %1507 = vmatpush2.xpose.msra.mxu0 0.0
    %1508 = vmatprep.subr.mxu0 0.0
    %1509 = vmatpush2.xpose.msra.mxu0 0.0
    %1510 = vmatprep.subr.mxu0 0.0
    %1511 = vmatpush2.xpose.msra.mxu0 0.0
    %1512 = vmatprep.subr.mxu0 0.0
    %1513 = vmatpush2.xpose.msra.mxu0 0.0
    %1514 = vmatprep.subr.mxu0 0.0
    %1515 = vmatpush2.xpose.msra.mxu0 0.0
    %1516 = vmatprep.subr.mxu0 0.0
    %1517 = vmatpush2.xpose.msra.mxu0 0.0
    %1518 = vmatprep.subr.mxu0 0.0
    %1519 = vmatpush2.xpose.msra.mxu0 0.0
    %1520 = vmatprep.subr.mxu0 0.0
    %1521 = vmatpush2.xpose.msra.mxu0 0.0
    %1522 = vmatprep.subr.mxu0 0.0
    %1523 = vmatpush2.xpose.msra.mxu0 0.0
    %1524 = vmatprep.subr.mxu0 0.0
    %1525 = vmatpush2.xpose.msra.mxu0 0.0
    %1526 = vmatprep.subr.mxu0 0.0
    %1527 = vmatpush2.xpose.msra.mxu0 0.0
    %1528 = vmatprep.subr.mxu0 0.0
    %1529 = vmatpush2.xpose.msra.mxu0 0.0
    %1530 = vmatprep.subr.mxu0 0.0
    %1531 = vmatpush2.xpose.msra.mxu0 0.0
    %1532 = vmatprep.subr.mxu0 0.0
    %1533 = vmatpush2.xpose.msra.mxu0 0.0
    %1534 = vmatprep.mubr.f32.mxu0 0.0
    %1535 = vmatmul.mubr.f32.gmra.mxu0 %v1462
    %v1536 = vpop.f32.mrf.mxu0
    %v1537 = vadd.f32 0.0, %v1536
    %v1538 = vpop.f32.mrf.mxu0
    %1539 = vmatprep.mubr.f32.mxu0 0.0
    %1540 = vmatmul.mubr.f32.gmra.mxu0 %v1464
    %v1541 = vpop.f32.mrf.mxu0
    %v1542 = vadd.f32 0.0, %v1541
    %v1543 = vpop.f32.mrf.mxu0
    %1544 = vdwg.mxu0
    %v1545 = vmul.f32 %v1537, 0.35355338
    %v1546 = vmul.f32 %v1542, 0.35355338
    %v1547 = vadd.f32 %v1545, %v28
    %v1548 = vadd.f32 %v1546, %v29
    %v1549 = vsel %vm1343, %v1547, -inf
    %1550 = vmax.xlane.f32.xlu0 %v1549
    %v1551 = vpop.xlane.xlu0 %1550
    %v1552 = vsel %vm1343, %v1548, -inf
    %1553 = vmax.xlane.f32.xlu0 %v1552
    %v1554 = vpop.xlane.xlu0 %1553
    %v1555 = vsub.f32 %v1547, %v1551
    %v1556 = vsub.f32 %v1548, %v1554
    %v1557 = vmul.f32 %v1555, 1.442695
    %v1558 = vpow.pop %v1557
    %v1559 = vmul.f32 %v1556, 1.442695
    %v1560 = vpow.pop %v1559
    %v1561 = vsel %vm1343, %v1558, 0.0
    %1562 = vadd.xlane.f32.xlu0 %v1561
    %v1563 = vpop.xlane.xlu0 %1562
    %v1564 = vsel %vm1343, %v1560, 0.0
    %1565 = vadd.xlane.f32.xlu0 %v1564
    %v1566 = vpop.xlane.xlu0 %1565
    %v1567 = vrcp.pop %v1563
    %v1568 = vrcp.pop %v1566
    %v1569 = vmul.f32 %v1558, %v1567
    %v1570 = vmul.f32 %v1560, %v1568
    %1571 = vrot.lane.b32.xlu0 %v1241, 56
    %v1572 = vpop.permute.xlu0 %1571
    %1573 = vrot.lane.b32.xlu0 %v1246, 56
    %v1574 = vpop.permute.xlu0 %1573
    %v1578 = vsel %vm1343, %v1569, 0
    %v1581 = vsel %vm1343, %v1570, 0
    %1583 = vmatprep.subr.mxu0 0.0
    %1584 = vmatpush1.msra.mxu0 0.0
    %1585 = vmatprep.subr.mxu0 0.0
    %1586 = vmatpush1.msra.mxu0 0.0
    %1587 = vmatprep.subr.mxu0 0.0
    %1588 = vmatpush1.msra.mxu0 0.0
    %1589 = vmatprep.subr.mxu0 0.0
    %1590 = vmatpush1.msra.mxu0 0.0
    %1591 = vmatprep.subr.mxu0 0.0
    %1592 = vmatpush1.msra.mxu0 0.0
    %1593 = vmatprep.subr.mxu0 0.0
    %1594 = vmatpush1.msra.mxu0 0.0
    %1595 = vmatprep.subr.mxu0 0.0
    %1596 = vmatpush1.msra.mxu0 0.0
    %1597 = vmatprep.subr.mxu0 0.0
    %1598 = vmatpush1.msra.mxu0 0.0
    %1599 = vmatprep.subr.mxu0 0.0
    %1600 = vmatpush1.msra.mxu0 0.0
    %1601 = vmatprep.subr.mxu0 0.0
    %1602 = vmatpush1.msra.mxu0 0.0
    %1603 = vmatprep.subr.mxu0 0.0
    %1604 = vmatpush1.msra.mxu0 0.0
    %1605 = vmatprep.subr.mxu0 0.0
    %1606 = vmatpush1.msra.mxu0 0.0
    %1607 = vmatprep.subr.mxu0 0.0
    %1608 = vmatpush1.msra.mxu0 0.0
    %1609 = vmatprep.subr.mxu0 0.0
    %1610 = vmatpush1.msra.mxu0 0.0
    %1611 = vmatprep.subr.mxu0 0.0
    %1612 = vmatpush1.msra.mxu0 %v1574
    %1613 = vmatprep.subr.mxu0 0.0
    %1614 = vmatpush1.msra.mxu0 %v1572
    %1615 = vmatprep.subr.mxu0 0.0
    %1616 = vmatpush2.msra.mxu0 0.0
    %1617 = vmatprep.subr.mxu0 0.0
    %1618 = vmatpush2.msra.mxu0 0.0
    %1619 = vmatprep.subr.mxu0 0.0
    %1620 = vmatpush2.msra.mxu0 0.0
    %1621 = vmatprep.subr.mxu0 0.0
    %1622 = vmatpush2.msra.mxu0 0.0
    %1623 = vmatprep.subr.mxu0 0.0
    %1624 = vmatpush2.msra.mxu0 0.0
    %1625 = vmatprep.subr.mxu0 0.0
    %1626 = vmatpush2.msra.mxu0 0.0
    %1627 = vmatprep.subr.mxu0 0.0
    %1628 = vmatpush2.msra.mxu0 0.0
    %1629 = vmatprep.subr.mxu0 0.0
    %1630 = vmatpush2.msra.mxu0 0.0
    %1631 = vmatprep.subr.mxu0 0.0
    %1632 = vmatpush2.msra.mxu0 0.0
    %1633 = vmatprep.subr.mxu0 0.0
    %1634 = vmatpush2.msra.mxu0 0.0
    %1635 = vmatprep.subr.mxu0 0.0
    %1636 = vmatpush2.msra.mxu0 0.0
    %1637 = vmatprep.subr.mxu0 0.0
    %1638 = vmatpush2.msra.mxu0 0.0
    %1639 = vmatprep.subr.mxu0 0.0
    %1640 = vmatpush2.msra.mxu0 0.0
    %1641 = vmatprep.subr.mxu0 0.0
    %1642 = vmatpush2.msra.mxu0 0.0
    %1643 = vmatprep.subr.mxu0 0.0
    %1644 = vmatpush2.msra.mxu0 0.0
    %1645 = vmatprep.subr.mxu0 0.0
    %1646 = vmatpush2.msra.mxu0 0.0
    %1647 = vmatprep.mubr.f32.mxu0 0.0
    %1648 = vmatmul.mubr.f32.gmra.mxu0 %v1578
    %v1649 = vpop.f32.mrf.mxu0
    %v1650 = vadd.f32 0.0, %v1649
    %v1651 = vpop.f32.mrf.mxu0
    %1652 = vmatprep.mubr.f32.mxu0 0.0
    %1653 = vmatmul.mubr.f32.gmra.mxu0 %v1581
    %v1654 = vpop.f32.mrf.mxu0
    %v1655 = vadd.f32 0.0, %v1654
    %v1656 = vpop.f32.mrf.mxu0
    %1657 = vdwg.mxu0
    %v1658 = vld [vmem:[%s3 + $0x58] sm:$0xff]
    %1660 = vrot.lane.b32.xlu0 %v1658, 96
    %v1661 = vpop.permute.xlu0 %1660
    %v1664 = vsel %vm1255, %v1650, 0
    %v1667 = vsel %vm1255, %v1655, 0
    %1669 = vmatprep.subr.mxu0 0.0
    %1670 = vmatpush1.msra.mxu0 0.0
    %1671 = vmatprep.subr.mxu0 0.0
    %1672 = vmatpush1.msra.mxu0 0.0
    %1673 = vmatprep.subr.mxu0 0.0
    %1674 = vmatpush1.msra.mxu0 0.0
    %1675 = vmatprep.subr.mxu0 0.0
    %1676 = vmatpush1.msra.mxu0 0.0
    %1677 = vmatprep.subr.mxu0 0.0
    %1678 = vmatpush1.msra.mxu0 0.0
    %1679 = vmatprep.subr.mxu0 0.0
    %1680 = vmatpush1.msra.mxu0 0.0
    %1681 = vmatprep.subr.mxu0 0.0
    %1682 = vmatpush1.msra.mxu0 0.0
    %1683 = vmatprep.subr.mxu0 0.0
    %1684 = vmatpush1.msra.mxu0 0.0
    %1685 = vmatprep.subr.mxu0 0.0
    %1686 = vmatpush1.msra.mxu0 0.0
    %1687 = vmatprep.subr.mxu0 0.0
    %1688 = vmatpush1.msra.mxu0 0.0
    %1689 = vmatprep.subr.mxu0 0.0
    %1690 = vmatpush1.msra.mxu0 0.0
    %1691 = vmatprep.subr.mxu0 0.0
    %1692 = vmatpush1.msra.mxu0 0.0
    %1693 = vmatprep.subr.mxu0 0.0
    %1694 = vmatpush1.msra.mxu0 0.0
    %1695 = vmatprep.subr.mxu0 0.0
    %1696 = vmatpush1.msra.mxu0 0.0
    %1697 = vmatprep.subr.mxu0 0.0
    %1698 = vmatpush1.msra.mxu0 0.0
    %1699 = vmatprep.subr.mxu0 0.0
    %1700 = vmatpush1.msra.mxu0 %v1661
    %1701 = vmatprep.subr.mxu0 0.0
    %1702 = vmatpush2.msra.mxu0 0.0
    %1703 = vmatprep.subr.mxu0 0.0
    %1704 = vmatpush2.msra.mxu0 0.0
    %1705 = vmatprep.subr.mxu0 0.0
    %1706 = vmatpush2.msra.mxu0 0.0
    %1707 = vmatprep.subr.mxu0 0.0
    %1708 = vmatpush2.msra.mxu0 0.0
    %1709 = vmatprep.subr.mxu0 0.0
    %1710 = vmatpush2.msra.mxu0 0.0
    %1711 = vmatprep.subr.mxu0 0.0
    %1712 = vmatpush2.msra.mxu0 0.0
    %1713 = vmatprep.subr.mxu0 0.0
    %1714 = vmatpush2.msra.mxu0 0.0
    %1715 = vmatprep.subr.mxu0 0.0
    %1716 = vmatpush2.msra.mxu0 0.0
    %1717 = vmatprep.subr.mxu0 0.0
    %1718 = vmatpush2.msra.mxu0 0.0
    %1719 = vmatprep.subr.mxu0 0.0
    %1720 = vmatpush2.msra.mxu0 0.0
    %1721 = vmatprep.subr.mxu0 0.0
    %1722 = vmatpush2.msra.mxu0 0.0
    %1723 = vmatprep.subr.mxu0 0.0
    %1724 = vmatpush2.msra.mxu0 0.0
    %1725 = vmatprep.subr.mxu0 0.0
    %1726 = vmatpush2.msra.mxu0 0.0
    %1727 = vmatprep.subr.mxu0 0.0
    %1728 = vmatpush2.msra.mxu0 0.0
    %1729 = vmatprep.subr.mxu0 0.0
    %1730 = vmatpush2.msra.mxu0 0.0
    %1731 = vmatprep.subr.mxu0 0.0
    %1732 = vmatpush2.msra.mxu0 0.0
    %1733 = vmatprep.mubr.f32.mxu0 0.0
    %1734 = vmatmul.mubr.f32.gmra.mxu0 %v1664
    %v1735 = vpop.f32.mrf.mxu0
    %v1736 = vadd.f32 0.0, %v1735
    %v1737 = vpop.f32.mrf.mxu0
    %1738 = vmatprep.mubr.f32.mxu0 0.0
    %1739 = vmatmul.mubr.f32.gmra.mxu0 %v1667
    %v1740 = vpop.f32.mrf.mxu0
    %v1741 = vadd.f32 0.0, %v1740
    %v1742 = vpop.f32.mrf.mxu0
    %1743 = vdwg.mxu0
    %1745 = vrot.lane.b32.xlu0 %v1453, 96
    %v1746 = vpop.permute.xlu0 %1745
    %v1749 = vsel %vm1255, %v1445, 0
    %v1752 = vsel %vm1255, %v1450, 0
    %1754 = vmatprep.subr.mxu0 0.0
    %1755 = vmatpush1.msra.mxu0 0.0
    %1756 = vmatprep.subr.mxu0 0.0
    %1757 = vmatpush1.msra.mxu0 0.0
    %1758 = vmatprep.subr.mxu0 0.0
    %1759 = vmatpush1.msra.mxu0 0.0
    %1760 = vmatprep.subr.mxu0 0.0
    %1761 = vmatpush1.msra.mxu0 0.0
    %1762 = vmatprep.subr.mxu0 0.0
    %1763 = vmatpush1.msra.mxu0 0.0
    %1764 = vmatprep.subr.mxu0 0.0
    %1765 = vmatpush1.msra.mxu0 0.0
    %1766 = vmatprep.subr.mxu0 0.0
    %1767 = vmatpush1.msra.mxu0 0.0
    %1768 = vmatprep.subr.mxu0 0.0
    %1769 = vmatpush1.msra.mxu0 0.0
    %1770 = vmatprep.subr.mxu0 0.0
    %1771 = vmatpush1.msra.mxu0 0.0
    %1772 = vmatprep.subr.mxu0 0.0
    %1773 = vmatpush1.msra.mxu0 0.0
    %1774 = vmatprep.subr.mxu0 0.0
    %1775 = vmatpush1.msra.mxu0 0.0
    %1776 = vmatprep.subr.mxu0 0.0
    %1777 = vmatpush1.msra.mxu0 0.0
    %1778 = vmatprep.subr.mxu0 0.0
    %1779 = vmatpush1.msra.mxu0 0.0
    %1780 = vmatprep.subr.mxu0 0.0
    %1781 = vmatpush1.msra.mxu0 0.0
    %1782 = vmatprep.subr.mxu0 0.0
    %1783 = vmatpush1.msra.mxu0 0.0
    %1784 = vmatprep.subr.mxu0 0.0
    %1785 = vmatpush1.msra.mxu0 %v1746
    %1786 = vmatprep.subr.mxu0 0.0
    %1787 = vmatpush2.msra.mxu0 0.0
    %1788 = vmatprep.subr.mxu0 0.0
    %1789 = vmatpush2.msra.mxu0 0.0
    %1790 = vmatprep.subr.mxu0 0.0
    %1791 = vmatpush2.msra.mxu0 0.0
    %1792 = vmatprep.subr.mxu0 0.0
    %1793 = vmatpush2.msra.mxu0 0.0
    %1794 = vmatprep.subr.mxu0 0.0
    %1795 = vmatpush2.msra.mxu0 0.0
    %1796 = vmatprep.subr.mxu0 0.0
    %1797 = vmatpush2.msra.mxu0 0.0
    %1798 = vmatprep.subr.mxu0 0.0
    %1799 = vmatpush2.msra.mxu0 0.0
    %1800 = vmatprep.subr.mxu0 0.0
    %1801 = vmatpush2.msra.mxu0 0.0
    %1802 = vmatprep.subr.mxu0 0.0
    %1803 = vmatpush2.msra.mxu0 0.0
    %1804 = vmatprep.subr.mxu0 0.0
    %1805 = vmatpush2.msra.mxu0 0.0
    %1806 = vmatprep.subr.mxu0 0.0
    %1807 = vmatpush2.msra.mxu0 0.0
    %1808 = vmatprep.subr.mxu0 0.0
    %1809 = vmatpush2.msra.mxu0 0.0
    %1810 = vmatprep.subr.mxu0 0.0
    %1811 = vmatpush2.msra.mxu0 0.0
    %1812 = vmatprep.subr.mxu0 0.0
    %1813 = vmatpush2.msra.mxu0 0.0
    %1814 = vmatprep.subr.mxu0 0.0
    %1815 = vmatpush2.msra.mxu0 0.0
    %1816 = vmatprep.subr.mxu0 0.0
    %1817 = vmatpush2.msra.mxu0 0.0
    %1818 = vmatprep.mubr.f32.mxu0 0.0
    %1819 = vmatmul.mubr.f32.gmra.mxu0 %v1749
    %v1820 = vpop.f32.mrf.mxu0
    %v1821 = vadd.f32 %v1736, %v1820
    %v1822 = vpop.f32.mrf.mxu0
    %1823 = vmatprep.mubr.f32.mxu0 0.0
    %1824 = vmatmul.mubr.f32.gmra.mxu0 %v1752
    %v1825 = vpop.f32.mrf.mxu0
    %v1826 = vadd.f32 %v1741, %v1825
    %v1827 = vpop.f32.mrf.mxu0
    %1828 = vdwg.mxu0
    %1829 = vrot.lane.b32.xlu0 %v1241, 112
    %v1830 = vpop.permute.xlu0 %1829
    %1831 = vrot.lane.b32.xlu0 %v1246, 112
    %v1832 = vpop.permute.xlu0 %1831
    %1833 = vrot.lane.b32.xlu0 %v1241, 80
    %v1834 = vpop.permute.xlu0 %1833
    %1835 = vrot.lane.b32.xlu0 %v1246, 80
    %v1836 = vpop.permute.xlu0 %1835
    %v1837 = vsel %vm1255, %v1830, 0
    %v1839 = vsel %vm1255, %v1832, 0
    %v1841 = vsel %vm1255, %v1834, 0
    %v1843 = vsel %vm1255, %v1836, 0
    %1845 = vmatprep.subr.mxu0 0.0
    %1846 = vmatpush1.xpose.msra.mxu0 0.0
    %1847 = vmatprep.subr.mxu0 0.0
    %1848 = vmatpush1.xpose.msra.mxu0 0.0
    %1849 = vmatprep.subr.mxu0 0.0
    %1850 = vmatpush1.xpose.msra.mxu0 0.0
    %1851 = vmatprep.subr.mxu0 0.0
    %1852 = vmatpush1.xpose.msra.mxu0 0.0
    %1853 = vmatprep.subr.mxu0 0.0
    %1854 = vmatpush1.xpose.msra.mxu0 0.0
    %1855 = vmatprep.subr.mxu0 0.0
    %1856 = vmatpush1.xpose.msra.mxu0 0.0
    %1857 = vmatprep.subr.mxu0 0.0
    %1858 = vmatpush1.xpose.msra.mxu0 0.0
    %1859 = vmatprep.subr.mxu0 0.0
    %1860 = vmatpush1.xpose.msra.mxu0 0.0
    %1861 = vmatprep.subr.mxu0 0.0
    %1862 = vmatpush1.xpose.msra.mxu0 0.0
    %1863 = vmatprep.subr.mxu0 0.0
    %1864 = vmatpush1.xpose.msra.mxu0 0.0
    %1865 = vmatprep.subr.mxu0 0.0
    %1866 = vmatpush1.xpose.msra.mxu0 0.0
    %1867 = vmatprep.subr.mxu0 0.0
    %1868 = vmatpush1.xpose.msra.mxu0 0.0
    %1869 = vmatprep.subr.mxu0 0.0
    %1870 = vmatpush1.xpose.msra.mxu0 0.0
    %1871 = vmatprep.subr.mxu0 0.0
    %1872 = vmatpush1.xpose.msra.mxu0 0.0
    %1873 = vmatprep.subr.mxu0 0.0
    %1874 = vmatpush1.xpose.msra.mxu0 %v1843
    %1875 = vmatprep.subr.mxu0 0.0
    %1876 = vmatpush1.xpose.msra.mxu0 %v1841
    %1877 = vmatprep.subr.mxu0 0.0
    %1878 = vmatpush2.xpose.msra.mxu0 0.0
    %1879 = vmatprep.subr.mxu0 0.0
    %1880 = vmatpush2.xpose.msra.mxu0 0.0
    %1881 = vmatprep.subr.mxu0 0.0
    %1882 = vmatpush2.xpose.msra.mxu0 0.0
    %1883 = vmatprep.subr.mxu0 0.0
    %1884 = vmatpush2.xpose.msra.mxu0 0.0
    %1885 = vmatprep.subr.mxu0 0.0
    %1886 = vmatpush2.xpose.msra.mxu0 0.0
    %1887 = vmatprep.subr.mxu0 0.0
    %1888 = vmatpush2.xpose.msra.mxu0 0.0
    %1889 = vmatprep.subr.mxu0 0.0
    %1890 = vmatpush2.xpose.msra.mxu0 0.0
    %1891 = vmatprep.subr.mxu0 0.0
    %1892 = vmatpush2.xpose.msra.mxu0 0.0
    %1893 = vmatprep.subr.mxu0 0.0
    %1894 = vmatpush2.xpose.msra.mxu0 0.0
    %1895 = vmatprep.subr.mxu0 0.0
    %1896 = vmatpush2.xpose.msra.mxu0 0.0
    %1897 = vmatprep.subr.mxu0 0.0
    %1898 = vmatpush2.xpose.msra.mxu0 0.0
    %1899 = vmatprep.subr.mxu0 0.0
    %1900 = vmatpush2.xpose.msra.mxu0 0.0
    %1901 = vmatprep.subr.mxu0 0.0
    %1902 = vmatpush2.xpose.msra.mxu0 0.0
    %1903 = vmatprep.subr.mxu0 0.0
    %1904 = vmatpush2.xpose.msra.mxu0 0.0
    %1905 = vmatprep.subr.mxu0 0.0
    %1906 = vmatpush2.xpose.msra.mxu0 0.0
    %1907 = vmatprep.subr.mxu0 0.0
    %1908 = vmatpush2.xpose.msra.mxu0 0.0
    %1909 = vmatprep.mubr.f32.mxu0 0.0
    %1910 = vmatmul.mubr.f32.gmra.mxu0 %v1837
    %v1911 = vpop.f32.mrf.mxu0
    %v1912 = vadd.f32 0.0, %v1911
    %v1913 = vpop.f32.mrf.mxu0
    %1914 = vmatprep.mubr.f32.mxu0 0.0
    %1915 = vmatmul.mubr.f32.gmra.mxu0 %v1839
    %v1916 = vpop.f32.mrf.mxu0
    %v1917 = vadd.f32 0.0, %v1916
    %v1918 = vpop.f32.mrf.mxu0
    %1919 = vdwg.mxu0
    %v1920 = vmul.f32 %v1912, 0.35355338
    %v1921 = vmul.f32 %v1917, 0.35355338
    %v1922 = vadd.f32 %v1920, %v28
    %v1923 = vadd.f32 %v1921, %v29
    %v1924 = vsel %vm1343, %v1922, -inf
    %1925 = vmax.xlane.f32.xlu0 %v1924
    %v1926 = vpop.xlane.xlu0 %1925
    %v1927 = vsel %vm1343, %v1923, -inf
    %1928 = vmax.xlane.f32.xlu0 %v1927
    %v1929 = vpop.xlane.xlu0 %1928
    %v1930 = vsub.f32 %v1922, %v1926
    %v1931 = vsub.f32 %v1923, %v1929
    %v1932 = vmul.f32 %v1930, 1.442695
    %v1933 = vpow.pop %v1932
    %v1934 = vmul.f32 %v1931, 1.442695
    %v1935 = vpow.pop %v1934
    %v1936 = vsel %vm1343, %v1933, 0.0
    %1937 = vadd.xlane.f32.xlu0 %v1936
    %v1938 = vpop.xlane.xlu0 %1937
    %v1939 = vsel %vm1343, %v1935, 0.0
    %1940 = vadd.xlane.f32.xlu0 %v1939
    %v1941 = vpop.xlane.xlu0 %1940
    %v1942 = vrcp.pop %v1938
    %v1943 = vrcp.pop %v1941
    %v1944 = vmul.f32 %v1933, %v1942
    %v1945 = vmul.f32 %v1935, %v1943
    %1946 = vrot.lane.b32.xlu0 %v1241, 48
    %v1947 = vpop.permute.xlu0 %1946
    %1948 = vrot.lane.b32.xlu0 %v1246, 48
    %v1949 = vpop.permute.xlu0 %1948
    %v1953 = vsel %vm1343, %v1944, 0
    %v1956 = vsel %vm1343, %v1945, 0
    %1958 = vmatprep.subr.mxu0 0.0
    %1959 = vmatpush1.msra.mxu0 0.0
    %1960 = vmatprep.subr.mxu0 0.0
    %1961 = vmatpush1.msra.mxu0 0.0
    %1962 = vmatprep.subr.mxu0 0.0
    %1963 = vmatpush1.msra.mxu0 0.0
    %1964 = vmatprep.subr.mxu0 0.0
    %1965 = vmatpush1.msra.mxu0 0.0
    %1966 = vmatprep.subr.mxu0 0.0
    %1967 = vmatpush1.msra.mxu0 0.0
    %1968 = vmatprep.subr.mxu0 0.0
    %1969 = vmatpush1.msra.mxu0 0.0
    %1970 = vmatprep.subr.mxu0 0.0
    %1971 = vmatpush1.msra.mxu0 0.0
    %1972 = vmatprep.subr.mxu0 0.0
    %1973 = vmatpush1.msra.mxu0 0.0
    %1974 = vmatprep.subr.mxu0 0.0
    %1975 = vmatpush1.msra.mxu0 0.0
    %1976 = vmatprep.subr.mxu0 0.0
    %1977 = vmatpush1.msra.mxu0 0.0
    %1978 = vmatprep.subr.mxu0 0.0
    %1979 = vmatpush1.msra.mxu0 0.0
    %1980 = vmatprep.subr.mxu0 0.0
    %1981 = vmatpush1.msra.mxu0 0.0
    %1982 = vmatprep.subr.mxu0 0.0
    %1983 = vmatpush1.msra.mxu0 0.0
    %1984 = vmatprep.subr.mxu0 0.0
    %1985 = vmatpush1.msra.mxu0 0.0
    %1986 = vmatprep.subr.mxu0 0.0
    %1987 = vmatpush1.msra.mxu0 %v1949
    %1988 = vmatprep.subr.mxu0 0.0
    %1989 = vmatpush1.msra.mxu0 %v1947
    %1990 = vmatprep.subr.mxu0 0.0
    %1991 = vmatpush2.msra.mxu0 0.0
    %1992 = vmatprep.subr.mxu0 0.0
    %1993 = vmatpush2.msra.mxu0 0.0
    %1994 = vmatprep.subr.mxu0 0.0
    %1995 = vmatpush2.msra.mxu0 0.0
    %1996 = vmatprep.subr.mxu0 0.0
    %1997 = vmatpush2.msra.mxu0 0.0
    %1998 = vmatprep.subr.mxu0 0.0
    %1999 = vmatpush2.msra.mxu0 0.0
    %2000 = vmatprep.subr.mxu0 0.0
    %2001 = vmatpush2.msra.mxu0 0.0
    %2002 = vmatprep.subr.mxu0 0.0
    %2003 = vmatpush2.msra.mxu0 0.0
    %2004 = vmatprep.subr.mxu0 0.0
    %2005 = vmatpush2.msra.mxu0 0.0
    %2006 = vmatprep.subr.mxu0 0.0
    %2007 = vmatpush2.msra.mxu0 0.0
    %2008 = vmatprep.subr.mxu0 0.0
    %2009 = vmatpush2.msra.mxu0 0.0
    %2010 = vmatprep.subr.mxu0 0.0
    %2011 = vmatpush2.msra.mxu0 0.0
    %2012 = vmatprep.subr.mxu0 0.0
    %2013 = vmatpush2.msra.mxu0 0.0
    %2014 = vmatprep.subr.mxu0 0.0
    %2015 = vmatpush2.msra.mxu0 0.0
    %2016 = vmatprep.subr.mxu0 0.0
    %2017 = vmatpush2.msra.mxu0 0.0
    %2018 = vmatprep.subr.mxu0 0.0
    %2019 = vmatpush2.msra.mxu0 0.0
    %2020 = vmatprep.subr.mxu0 0.0
    %2021 = vmatpush2.msra.mxu0 0.0
    %2022 = vmatprep.mubr.f32.mxu0 0.0
    %2023 = vmatmul.mubr.f32.gmra.mxu0 %v1953
    %v2024 = vpop.f32.mrf.mxu0
    %v2025 = vadd.f32 0.0, %v2024
    %v2026 = vpop.f32.mrf.mxu0
    %2027 = vmatprep.mubr.f32.mxu0 0.0
    %2028 = vmatmul.mubr.f32.gmra.mxu0 %v1956
    %v2029 = vpop.f32.mrf.mxu0
    %v2030 = vadd.f32 0.0, %v2029
    %v2031 = vpop.f32.mrf.mxu0
    %2032 = vdwg.mxu0
    %v2033 = vld [vmem:[%s3 + $0x88] sm:$0xff]
    %2035 = vrot.lane.b32.xlu0 %v2033, 96
    %v2036 = vpop.permute.xlu0 %2035
    %v2039 = vsel %vm1255, %v2025, 0
    %v2042 = vsel %vm1255, %v2030, 0
    %2044 = vmatprep.subr.mxu0 0.0
    %2045 = vmatpush1.msra.mxu0 0.0
    %2046 = vmatprep.subr.mxu0 0.0
    %2047 = vmatpush1.msra.mxu0 0.0
    %2048 = vmatprep.subr.mxu0 0.0
    %2049 = vmatpush1.msra.mxu0 0.0
    %2050 = vmatprep.subr.mxu0 0.0
    %2051 = vmatpush1.msra.mxu0 0.0
    %2052 = vmatprep.subr.mxu0 0.0
    %2053 = vmatpush1.msra.mxu0 0.0
    %2054 = vmatprep.subr.mxu0 0.0
    %2055 = vmatpush1.msra.mxu0 0.0
    %2056 = vmatprep.subr.mxu0 0.0
    %2057 = vmatpush1.msra.mxu0 0.0
    %2058 = vmatprep.subr.mxu0 0.0
    %2059 = vmatpush1.msra.mxu0 0.0
    %2060 = vmatprep.subr.mxu0 0.0
    %2061 = vmatpush1.msra.mxu0 0.0
    %2062 = vmatprep.subr.mxu0 0.0
    %2063 = vmatpush1.msra.mxu0 0.0
    %2064 = vmatprep.subr.mxu0 0.0
    %2065 = vmatpush1.msra.mxu0 0.0
    %2066 = vmatprep.subr.mxu0 0.0
    %2067 = vmatpush1.msra.mxu0 0.0
    %2068 = vmatprep.subr.mxu0 0.0
    %2069 = vmatpush1.msra.mxu0 0.0
    %2070 = vmatprep.subr.mxu0 0.0
    %2071 = vmatpush1.msra.mxu0 0.0
    %2072 = vmatprep.subr.mxu0 0.0
    %2073 = vmatpush1.msra.mxu0 0.0
    %2074 = vmatprep.subr.mxu0 0.0
    %2075 = vmatpush1.msra.mxu0 %v2036
    %2076 = vmatprep.subr.mxu0 0.0
    %2077 = vmatpush2.msra.mxu0 0.0
    %2078 = vmatprep.subr.mxu0 0.0
    %2079 = vmatpush2.msra.mxu0 0.0
    %2080 = vmatprep.subr.mxu0 0.0
    %2081 = vmatpush2.msra.mxu0 0.0
    %2082 = vmatprep.subr.mxu0 0.0
    %2083 = vmatpush2.msra.mxu0 0.0
    %2084 = vmatprep.subr.mxu0 0.0
    %2085 = vmatpush2.msra.mxu0 0.0
    %2086 = vmatprep.subr.mxu0 0.0
    %2087 = vmatpush2.msra.mxu0 0.0
    %2088 = vmatprep.subr.mxu0 0.0
    %2089 = vmatpush2.msra.mxu0 0.0
    %2090 = vmatprep.subr.mxu0 0.0
    %2091 = vmatpush2.msra.mxu0 0.0
    %2092 = vmatprep.subr.mxu0 0.0
    %2093 = vmatpush2.msra.mxu0 0.0
    %2094 = vmatprep.subr.mxu0 0.0
    %2095 = vmatpush2.msra.mxu0 0.0
    %2096 = vmatprep.subr.mxu0 0.0
    %2097 = vmatpush2.msra.mxu0 0.0
    %2098 = vmatprep.subr.mxu0 0.0
    %2099 = vmatpush2.msra.mxu0 0.0
    %2100 = vmatprep.subr.mxu0 0.0
    %2101 = vmatpush2.msra.mxu0 0.0
    %2102 = vmatprep.subr.mxu0 0.0
    %2103 = vmatpush2.msra.mxu0 0.0
    %2104 = vmatprep.subr.mxu0 0.0
    %2105 = vmatpush2.msra.mxu0 0.0
    %2106 = vmatprep.subr.mxu0 0.0
    %2107 = vmatpush2.msra.mxu0 0.0
    %2108 = vmatprep.mubr.f32.mxu0 0.0
    %2109 = vmatmul.mubr.f32.gmra.mxu0 %v2039
    %v2110 = vpop.f32.mrf.mxu0
    %v2111 = vadd.f32 0.0, %v2110
    %v2112 = vpop.f32.mrf.mxu0
    %2113 = vmatprep.mubr.f32.mxu0 0.0
    %2114 = vmatmul.mubr.f32.gmra.mxu0 %v2042
    %v2115 = vpop.f32.mrf.mxu0
    %v2116 = vadd.f32 0.0, %v2115
    %v2117 = vpop.f32.mrf.mxu0
    %2118 = vdwg.mxu0
    %v2119 = vadd.f32 %v1821, %v2111
    %v2120 = vadd.f32 %v1826, %v2116
    %2121 = vrot.lane.b32.xlu0 %v1241, 104
    %v2122 = vpop.permute.xlu0 %2121
    %2123 = vrot.lane.b32.xlu0 %v1246, 104
    %v2124 = vpop.permute.xlu0 %2123
    %2125 = vrot.lane.b32.xlu0 %v1241, 72
    %v2126 = vpop.permute.xlu0 %2125
    %2127 = vrot.lane.b32.xlu0 %v1246, 72
    %v2128 = vpop.permute.xlu0 %2127
    %v2129 = vsel %vm1255, %v2122, 0
    %v2131 = vsel %vm1255, %v2124, 0
    %v2133 = vsel %vm1255, %v2126, 0
    %v2135 = vsel %vm1255, %v2128, 0
    %2137 = vmatprep.subr.mxu0 0.0
    %2138 = vmatpush1.xpose.msra.mxu0 0.0
    %2139 = vmatprep.subr.mxu0 0.0
    %2140 = vmatpush1.xpose.msra.mxu0 0.0
    %2141 = vmatprep.subr.mxu0 0.0
    %2142 = vmatpush1.xpose.msra.mxu0 0.0
    %2143 = vmatprep.subr.mxu0 0.0
    %2144 = vmatpush1.xpose.msra.mxu0 0.0
    %2145 = vmatprep.subr.mxu0 0.0
    %2146 = vmatpush1.xpose.msra.mxu0 0.0
    %2147 = vmatprep.subr.mxu0 0.0
    %2148 = vmatpush1.xpose.msra.mxu0 0.0
    %2149 = vmatprep.subr.mxu0 0.0
    %2150 = vmatpush1.xpose.msra.mxu0 0.0
    %2151 = vmatprep.subr.mxu0 0.0
    %2152 = vmatpush1.xpose.msra.mxu0 0.0
    %2153 = vmatprep.subr.mxu0 0.0
    %2154 = vmatpush1.xpose.msra.mxu0 0.0
    %2155 = vmatprep.subr.mxu0 0.0
    %2156 = vmatpush1.xpose.msra.mxu0 0.0
    %2157 = vmatprep.subr.mxu0 0.0
    %2158 = vmatpush1.xpose.msra.mxu0 0.0
    %2159 = vmatprep.subr.mxu0 0.0
    %2160 = vmatpush1.xpose.msra.mxu0 0.0
    %2161 = vmatprep.subr.mxu0 0.0
    %2162 = vmatpush1.xpose.msra.mxu0 0.0
    %2163 = vmatprep.subr.mxu0 0.0
    %2164 = vmatpush1.xpose.msra.mxu0 0.0
    %2165 = vmatprep.subr.mxu0 0.0
    %2166 = vmatpush1.xpose.msra.mxu0 %v2135
    %2167 = vmatprep.subr.mxu0 0.0
    %2168 = vmatpush1.xpose.msra.mxu0 %v2133
    %2169 = vmatprep.subr.mxu0 0.0
    %2170 = vmatpush2.xpose.msra.mxu0 0.0
    %2171 = vmatprep.subr.mxu0 0.0
    %2172 = vmatpush2.xpose.msra.mxu0 0.0
    %2173 = vmatprep.subr.mxu0 0.0
    %2174 = vmatpush2.xpose.msra.mxu0 0.0
    %2175 = vmatprep.subr.mxu0 0.0
    %2176 = vmatpush2.xpose.msra.mxu0 0.0
    %2177 = vmatprep.subr.mxu0 0.0
    %2178 = vmatpush2.xpose.msra.mxu0 0.0
    %2179 = vmatprep.subr.mxu0 0.0
    %2180 = vmatpush2.xpose.msra.mxu0 0.0
    %2181 = vmatprep.subr.mxu0 0.0
    %2182 = vmatpush2.xpose.msra.mxu0 0.0
    %2183 = vmatprep.subr.mxu0 0.0
    %2184 = vmatpush2.xpose.msra.mxu0 0.0
    %2185 = vmatprep.subr.mxu0 0.0
    %2186 = vmatpush2.xpose.msra.mxu0 0.0
    %2187 = vmatprep.subr.mxu0 0.0
    %2188 = vmatpush2.xpose.msra.mxu0 0.0
    %2189 = vmatprep.subr.mxu0 0.0
    %2190 = vmatpush2.xpose.msra.mxu0 0.0
    %2191 = vmatprep.subr.mxu0 0.0
    %2192 = vmatpush2.xpose.msra.mxu0 0.0
    %2193 = vmatprep.subr.mxu0 0.0
    %2194 = vmatpush2.xpose.msra.mxu0 0.0
    %2195 = vmatprep.subr.mxu0 0.0
    %2196 = vmatpush2.xpose.msra.mxu0 0.0
    %2197 = vmatprep.subr.mxu0 0.0
    %2198 = vmatpush2.xpose.msra.mxu0 0.0
    %2199 = vmatprep.subr.mxu0 0.0
    %2200 = vmatpush2.xpose.msra.mxu0 0.0
    %2201 = vmatprep.mubr.f32.mxu0 0.0
    %2202 = vmatmul.mubr.f32.gmra.mxu0 %v2129
    %v2203 = vpop.f32.mrf.mxu0
    %v2204 = vadd.f32 0.0, %v2203
    %v2205 = vpop.f32.mrf.mxu0
    %2206 = vmatprep.mubr.f32.mxu0 0.0
    %2207 = vmatmul.mubr.f32.gmra.mxu0 %v2131
    %v2208 = vpop.f32.mrf.mxu0
    %v2209 = vadd.f32 0.0, %v2208
    %v2210 = vpop.f32.mrf.mxu0
    %2211 = vdwg.mxu0
    %v2212 = vmul.f32 %v2204, 0.35355338
    %v2213 = vmul.f32 %v2209, 0.35355338
    %v2214 = vadd.f32 %v2212, %v28
    %v2215 = vadd.f32 %v2213, %v29
    %v2216 = vsel %vm1343, %v2214, -inf
    %2217 = vmax.xlane.f32.xlu0 %v2216
    %v2218 = vpop.xlane.xlu0 %2217
    %v2219 = vsel %vm1343, %v2215, -inf
    %2220 = vmax.xlane.f32.xlu0 %v2219
    %v2221 = vpop.xlane.xlu0 %2220
    %v2222 = vsub.f32 %v2214, %v2218
    %v2223 = vsub.f32 %v2215, %v2221
    %v2224 = vmul.f32 %v2222, 1.442695
    %v2225 = vpow.pop %v2224
    %v2226 = vmul.f32 %v2223, 1.442695
    %v2227 = vpow.pop %v2226
    %v2228 = vsel %vm1343, %v2225, 0.0
    %2229 = vadd.xlane.f32.xlu0 %v2228
    %v2230 = vpop.xlane.xlu0 %2229
    %v2231 = vsel %vm1343, %v2227, 0.0
    %2232 = vadd.xlane.f32.xlu0 %v2231
    %v2233 = vpop.xlane.xlu0 %2232
    %v2234 = vrcp.pop %v2230
    %v2235 = vrcp.pop %v2233
    %v2236 = vmul.f32 %v2225, %v2234
    %v2237 = vmul.f32 %v2227, %v2235
    %2238 = vrot.lane.b32.xlu0 %v1241, 40
    %v2239 = vpop.permute.xlu0 %2238
    %2240 = vrot.lane.b32.xlu0 %v1246, 40
    %v2241 = vpop.permute.xlu0 %2240
    %v2245 = vsel %vm1343, %v2236, 0
    %v2248 = vsel %vm1343, %v2237, 0
    %2250 = vmatprep.subr.mxu0 0.0
    %2251 = vmatpush1.msra.mxu0 0.0
    %2252 = vmatprep.subr.mxu0 0.0
    %2253 = vmatpush1.msra.mxu0 0.0
    %2254 = vmatprep.subr.mxu0 0.0
    %2255 = vmatpush1.msra.mxu0 0.0
    %2256 = vmatprep.subr.mxu0 0.0
    %2257 = vmatpush1.msra.mxu0 0.0
    %2258 = vmatprep.subr.mxu0 0.0
    %2259 = vmatpush1.msra.mxu0 0.0
    %2260 = vmatprep.subr.mxu0 0.0
    %2261 = vmatpush1.msra.mxu0 0.0
    %2262 = vmatprep.subr.mxu0 0.0
    %2263 = vmatpush1.msra.mxu0 0.0
    %2264 = vmatprep.subr.mxu0 0.0
    %2265 = vmatpush1.msra.mxu0 0.0
    %2266 = vmatprep.subr.mxu0 0.0
    %2267 = vmatpush1.msra.mxu0 0.0
    %2268 = vmatprep.subr.mxu0 0.0
    %2269 = vmatpush1.msra.mxu0 0.0
    %2270 = vmatprep.subr.mxu0 0.0
    %2271 = vmatpush1.msra.mxu0 0.0
    %2272 = vmatprep.subr.mxu0 0.0
    %2273 = vmatpush1.msra.mxu0 0.0
    %2274 = vmatprep.subr.mxu0 0.0
    %2275 = vmatpush1.msra.mxu0 0.0
    %2276 = vmatprep.subr.mxu0 0.0
    %2277 = vmatpush1.msra.mxu0 0.0
    %2278 = vmatprep.subr.mxu0 0.0
    %2279 = vmatpush1.msra.mxu0 %v2241
    %2280 = vmatprep.subr.mxu0 0.0
    %2281 = vmatpush1.msra.mxu0 %v2239
    %2282 = vmatprep.subr.mxu0 0.0
    %2283 = vmatpush2.msra.mxu0 0.0
    %2284 = vmatprep.subr.mxu0 0.0
    %2285 = vmatpush2.msra.mxu0 0.0
    %2286 = vmatprep.subr.mxu0 0.0
    %2287 = vmatpush2.msra.mxu0 0.0
    %2288 = vmatprep.subr.mxu0 0.0
    %2289 = vmatpush2.msra.mxu0 0.0
    %2290 = vmatprep.subr.mxu0 0.0
    %2291 = vmatpush2.msra.mxu0 0.0
    %2292 = vmatprep.subr.mxu0 0.0
    %2293 = vmatpush2.msra.mxu0 0.0
    %2294 = vmatprep.subr.mxu0 0.0
    %2295 = vmatpush2.msra.mxu0 0.0
    %2296 = vmatprep.subr.mxu0 0.0
    %2297 = vmatpush2.msra.mxu0 0.0
    %2298 = vmatprep.subr.mxu0 0.0
    %2299 = vmatpush2.msra.mxu0 0.0
    %2300 = vmatprep.subr.mxu0 0.0
    %2301 = vmatpush2.msra.mxu0 0.0
    %2302 = vmatprep.subr.mxu0 0.0
    %2303 = vmatpush2.msra.mxu0 0.0
    %2304 = vmatprep.subr.mxu0 0.0
    %2305 = vmatpush2.msra.mxu0 0.0
    %2306 = vmatprep.subr.mxu0 0.0
    %2307 = vmatpush2.msra.mxu0 0.0
    %2308 = vmatprep.subr.mxu0 0.0
    %2309 = vmatpush2.msra.mxu0 0.0
    %2310 = vmatprep.subr.mxu0 0.0
    %2311 = vmatpush2.msra.mxu0 0.0
    %2312 = vmatprep.subr.mxu0 0.0
    %2313 = vmatpush2.msra.mxu0 0.0
    %2314 = vmatprep.mubr.f32.mxu0 0.0
    %2315 = vmatmul.mubr.f32.gmra.mxu0 %v2245
    %v2316 = vpop.f32.mrf.mxu0
    %v2317 = vadd.f32 0.0, %v2316
    %v2318 = vpop.f32.mrf.mxu0
    %2319 = vmatprep.mubr.f32.mxu0 0.0
    %2320 = vmatmul.mubr.f32.gmra.mxu0 %v2248
    %v2321 = vpop.f32.mrf.mxu0
    %v2322 = vadd.f32 0.0, %v2321
    %v2323 = vpop.f32.mrf.mxu0
    %2324 = vdwg.mxu0
    %2325 = vrot.lane.b32.xlu0 %v1130, 96
    %v2326 = vpop.permute.xlu0 %2325
    %v2329 = vsel %vm1255, %v2317, 0
    %v2332 = vsel %vm1255, %v2322, 0
    %2334 = vmatprep.subr.mxu0 0.0
    %2335 = vmatpush1.msra.mxu0 0.0
    %2336 = vmatprep.subr.mxu0 0.0
    %2337 = vmatpush1.msra.mxu0 0.0
    %2338 = vmatprep.subr.mxu0 0.0
    %2339 = vmatpush1.msra.mxu0 0.0
    %2340 = vmatprep.subr.mxu0 0.0
    %2341 = vmatpush1.msra.mxu0 0.0
    %2342 = vmatprep.subr.mxu0 0.0
    %2343 = vmatpush1.msra.mxu0 0.0
    %2344 = vmatprep.subr.mxu0 0.0
    %2345 = vmatpush1.msra.mxu0 0.0
    %2346 = vmatprep.subr.mxu0 0.0
    %2347 = vmatpush1.msra.mxu0 0.0
    %2348 = vmatprep.subr.mxu0 0.0
    %2349 = vmatpush1.msra.mxu0 0.0
    %2350 = vmatprep.subr.mxu0 0.0
    %2351 = vmatpush1.msra.mxu0 0.0
    %2352 = vmatprep.subr.mxu0 0.0
    %2353 = vmatpush1.msra.mxu0 0.0
    %2354 = vmatprep.subr.mxu0 0.0
    %2355 = vmatpush1.msra.mxu0 0.0
    %2356 = vmatprep.subr.mxu0 0.0
    %2357 = vmatpush1.msra.mxu0 0.0
    %2358 = vmatprep.subr.mxu0 0.0
    %2359 = vmatpush1.msra.mxu0 0.0
    %2360 = vmatprep.subr.mxu0 0.0
    %2361 = vmatpush1.msra.mxu0 0.0
    %2362 = vmatprep.subr.mxu0 0.0
    %2363 = vmatpush1.msra.mxu0 0.0
    %2364 = vmatprep.subr.mxu0 0.0
    %2365 = vmatpush1.msra.mxu0 %v2326
    %2366 = vmatprep.subr.mxu0 0.0
    %2367 = vmatpush2.msra.mxu0 0.0
    %2368 = vmatprep.subr.mxu0 0.0
    %2369 = vmatpush2.msra.mxu0 0.0
    %2370 = vmatprep.subr.mxu0 0.0
    %2371 = vmatpush2.msra.mxu0 0.0
    %2372 = vmatprep.subr.mxu0 0.0
    %2373 = vmatpush2.msra.mxu0 0.0
    %2374 = vmatprep.subr.mxu0 0.0
    %2375 = vmatpush2.msra.mxu0 0.0
    %2376 = vmatprep.subr.mxu0 0.0
    %2377 = vmatpush2.msra.mxu0 0.0
    %2378 = vmatprep.subr.mxu0 0.0
    %2379 = vmatpush2.msra.mxu0 0.0
    %2380 = vmatprep.subr.mxu0 0.0
    %2381 = vmatpush2.msra.mxu0 0.0
    %2382 = vmatprep.subr.mxu0 0.0
    %2383 = vmatpush2.msra.mxu0 0.0
    %2384 = vmatprep.subr.mxu0 0.0
    %2385 = vmatpush2.msra.mxu0 0.0
    %2386 = vmatprep.subr.mxu0 0.0
    %2387 = vmatpush2.msra.mxu0 0.0
    %2388 = vmatprep.subr.mxu0 0.0
    %2389 = vmatpush2.msra.mxu0 0.0
    %2390 = vmatprep.subr.mxu0 0.0
    %2391 = vmatpush2.msra.mxu0 0.0
    %2392 = vmatprep.subr.mxu0 0.0
    %2393 = vmatpush2.msra.mxu0 0.0
    %2394 = vmatprep.subr.mxu0 0.0
    %2395 = vmatpush2.msra.mxu0 0.0
    %2396 = vmatprep.subr.mxu0 0.0
    %2397 = vmatpush2.msra.mxu0 0.0
    %2398 = vmatprep.mubr.f32.mxu0 0.0
    %2399 = vmatmul.mubr.f32.gmra.mxu0 %v2329
    %v2400 = vpop.f32.mrf.mxu0
    %v2401 = vadd.f32 0.0, %v2400
    %v2402 = vpop.f32.mrf.mxu0
    %2403 = vmatprep.mubr.f32.mxu0 0.0
    %2404 = vmatmul.mubr.f32.gmra.mxu0 %v2332
    %v2405 = vpop.f32.mrf.mxu0
    %v2406 = vadd.f32 0.0, %v2405
    %v2407 = vpop.f32.mrf.mxu0
    %2408 = vdwg.mxu0
    %v2409 = vadd.f32 %v2119, %v2401
    %v2410 = vadd.f32 %v2120, %v2406
    %v2411 = vadd.f32 %v1067, %v2409
    %v2412 = vadd.f32 %v1068, %v2410
    %v2413 = vld [vmem:[%s5 + $0xe] sm:$0x1]
    %v2414 = vlaneseq
    %v2415 = vshrl.u32 %v2414, 7
    %v2416 = vsub.s32 0, %v2415
    %v2417 = vrot.slane %v2413, %v2416
    %v2418 = vadd.f32 %v2411, %v2417
    %v2419 = vadd.f32 %v2412, %v2417
    %v2420 = vld [vmem:[%s5 + $0xf] sm:$0x1]
    %v2421 = vld [vmem:[%s5 + $0x10] sm:$0x1]
    %v2422 = vsel %vm37, %v2418, 0.0
    %2423 = vadd.xlane.f32.xlu0 %v2422
    %v2424 = vpop.xlane.xlu0 %2423
    %v2425 = vsel %vm37, %v2419, 0.0
    %2426 = vadd.xlane.f32.xlu0 %v2425
    %v2427 = vpop.xlane.xlu0 %2426
    %v2428 = vmul.f32 %v2424, %v44
    %v2429 = vmul.f32 %v2427, %v44
    %v2430 = vsub.f32 %v2418, %v2428
    %v2431 = vsub.f32 %v2419, %v2429
    %v2432 = vmul.f32 %v2430, %v2430
    %v2433 = vmul.f32 %v2431, %v2431
    %v2434 = vsel %vm37, %v2432, 0.0
    %2435 = vadd.xlane.f32.xlu0 %v2434
    %v2436 = vpop.xlane.xlu0 %2435
    %v2437 = vsel %vm37, %v2433, 0.0
    %2438 = vadd.xlane.f32.xlu0 %v2437
    %v2439 = vpop.xlane.xlu0 %2438
    %v2440 = vmul.f32 %v2436, %v57
    %v2441 = vmul.f32 %v2439, %v57
    %v2442 = vlaneseq
    %v2443 = vshrl.u32 %v2442, 7
    %v2444 = vsub.s32 0, %v2443
    %v2445 = vrot.slane %v2420, %v2444
    %v2446 = vmul.f32 %v2445, %v2430
    %v2447 = vmul.f32 %v2445, %v2431
    %v2448 = vrsqrt.pop %v2440
    %v2449 = vmul.f32 %v2440, %v2448
    %vm2450 = vcmp.eq.f32.partialorder %v2440, inf
    %v2451 = vsel %vm2450, %v2440, %v2449
    %vm2452 = vcmp.eq.f32.partialorder %v2440, 0.0
    %v2453 = vand.u32 %v2440, 2147483648
    %v2454 = vsel %vm2452, %v2453, %v2451
    %v2455 = vrsqrt.pop %v2441
    %v2456 = vmul.f32 %v2441, %v2455
    %vm2457 = vcmp.eq.f32.partialorder %v2441, inf
    %v2458 = vsel %vm2457, %v2441, %v2456
    %vm2459 = vcmp.eq.f32.partialorder %v2441, 0.0
    %v2460 = vand.u32 %v2441, 2147483648
    %v2461 = vsel %vm2459, %v2460, %v2458
    %v2462 = vadd.f32 %v2454, 1e-06
    %v2463 = vadd.f32 %v2461, 1e-06
    %v2464 = vrcp.pop %v2462
    %v2465 = vmul.f32 %v2446, %v2464
    %v2466 = vrcp.pop %v2463
    %v2467 = vmul.f32 %v2447, %v2466
    %v2468 = vlaneseq
    %v2469 = vshrl.u32 %v2468, 7
    %v2470 = vsub.s32 0, %v2469
    %v2471 = vrot.slane %v2421, %v2470
    %v2472 = vadd.f32 %v2465, %v2471
    %v2473 = vadd.f32 %v2467, %v2471
    %v2474 = vld [vmem:[%s5 + $0x11] sm:$0x1]
    %v2475 = vlaneseq
    %v2476 = vshrl.u32 %v2475, 7
    %v2477 = vsub.s32 0, %v2476
    %v2478 = vrot.slane %v2474, %v2477
    %v2484 = vsel %vm37, %v2472, 0
    %v2487 = vsel %vm37, %v2473, 0
    %2489 = vmatprep.subr.mxu0 0.0
    %2490 = vmatpush1.msra.mxu0 0.0
    %2491 = vmatprep.subr.mxu0 0.0
    %2492 = vmatpush1.msra.mxu0 0.0
    %2493 = vmatprep.subr.mxu0 0.0
    %2494 = vmatpush1.msra.mxu0 0.0
    %2495 = vmatprep.subr.mxu0 0.0
    %2496 = vmatpush1.msra.mxu0 0.0
    %2497 = vmatprep.subr.mxu0 0.0
    %2498 = vmatpush1.msra.mxu0 0.0
    %2499 = vmatprep.subr.mxu0 0.0
    %2500 = vmatpush1.msra.mxu0 0.0
    %2501 = vmatprep.subr.mxu0 0.0
    %2502 = vmatpush1.msra.mxu0 0.0
    %2503 = vmatprep.subr.mxu0 0.0
    %2504 = vmatpush1.msra.mxu0 0.0
    %2505 = vmatprep.subr.mxu0 0.0
    %2506 = vmatpush1.msra.mxu0 0.0
    %2507 = vmatprep.subr.mxu0 0.0
    %2508 = vmatpush1.msra.mxu0 0.0
    %2509 = vmatprep.subr.mxu0 0.0
    %2510 = vmatpush1.msra.mxu0 0.0
    %2511 = vmatprep.subr.mxu0 0.0
    %2512 = vmatpush1.msra.mxu0 0.0
    %2513 = vmatprep.subr.mxu0 0.0
    %2514 = vmatpush1.msra.mxu0 %v1159
    %2515 = vmatprep.subr.mxu0 0.0
    %2516 = vmatpush1.msra.mxu0 %v1155
    %2517 = vmatprep.subr.mxu0 0.0
    %2518 = vmatpush1.msra.mxu0 %v1151
    %2519 = vmatprep.subr.mxu0 0.0
    %2520 = vmatpush1.msra.mxu0 %v1147
    %2521 = vmatprep.subr.mxu0 0.0
    %2522 = vmatpush2.msra.mxu0 0.0
    %2523 = vmatprep.subr.mxu0 0.0
    %2524 = vmatpush2.msra.mxu0 0.0
    %2525 = vmatprep.subr.mxu0 0.0
    %2526 = vmatpush2.msra.mxu0 0.0
    %2527 = vmatprep.subr.mxu0 0.0
    %2528 = vmatpush2.msra.mxu0 0.0
    %2529 = vmatprep.subr.mxu0 0.0
    %2530 = vmatpush2.msra.mxu0 0.0
    %2531 = vmatprep.subr.mxu0 0.0
    %2532 = vmatpush2.msra.mxu0 0.0
    %2533 = vmatprep.subr.mxu0 0.0
    %2534 = vmatpush2.msra.mxu0 0.0
    %2535 = vmatprep.subr.mxu0 0.0
    %2536 = vmatpush2.msra.mxu0 0.0
    %2537 = vmatprep.subr.mxu0 0.0
    %2538 = vmatpush2.msra.mxu0 0.0
    %2539 = vmatprep.subr.mxu0 0.0
    %2540 = vmatpush2.msra.mxu0 0.0
    %2541 = vmatprep.subr.mxu0 0.0
    %2542 = vmatpush2.msra.mxu0 0.0
    %2543 = vmatprep.subr.mxu0 0.0
    %2544 = vmatpush2.msra.mxu0 0.0
    %2545 = vmatprep.subr.mxu0 0.0
    %2546 = vmatpush2.msra.mxu0 0.0
    %2547 = vmatprep.subr.mxu0 0.0
    %2548 = vmatpush2.msra.mxu0 0.0
    %2549 = vmatprep.subr.mxu0 0.0
    %2550 = vmatpush2.msra.mxu0 0.0
    %2551 = vmatprep.subr.mxu0 0.0
    %2552 = vmatpush2.msra.mxu0 0.0
    %2553 = vmatprep.mubr.f32.mxu0 0.0
    %2554 = vmatmul.mubr.f32.gmra.mxu0 %v2484
    %v2555 = vpop.f32.mrf.mxu0
    %v2556 = vadd.f32 %v2478, %v2555
    %v2557 = vpop.f32.mrf.mxu0
    %2558 = vmatprep.mubr.f32.mxu0 0.0
    %2559 = vmatmul.mubr.f32.gmra.mxu0 %v2487
    %v2560 = vpop.f32.mrf.mxu0
    %v2561 = vadd.f32 %v2478, %v2560
    %v2562 = vpop.f32.mrf.mxu0
    %2563 = vdwg.mxu0
    %v2564 = vmax.f32 %v2556, 0.0
    %v2565 = vmax.f32 %v2561, 0.0
    %v2566 = vld [vmem:[%s4 + $0x80] sm:$0xff]
    %v2567 = vld [vmem:[%s4 + $0x88] sm:$0xff]
    %v2568 = vld [vmem:[%s4 + $0x90] sm:$0xff]
    %v2569 = vld [vmem:[%s4 + $0x98] sm:$0xff]
    %v2570 = vld [vmem:[%s4 + $0xa0] sm:$0xff]
    %v2571 = vld [vmem:[%s4 + $0xa8] sm:$0xff]
    %v2572 = vld [vmem:[%s4 + $0xb0] sm:$0xff]
    %v2573 = vld [vmem:[%s4 + $0xb8] sm:$0xff]
    %v2574 = vld [vmem:[%s5 + $0x12] sm:$0x1]
    %v2575 = vlaneseq
    %v2576 = vshrl.u32 %v2575, 7
    %v2577 = vsub.s32 0, %v2576
    %v2578 = vrot.slane %v2574, %v2577
    %v2580 = vsel %vm311, %v2564, 0
    %v2583 = vsel %vm311, %v2565, 0
    %2585 = vmatprep.subr.mxu0 0.0
    %2586 = vmatpush1.msra.mxu0 0.0
    %2587 = vmatprep.subr.mxu0 0.0
    %2588 = vmatpush1.msra.mxu0 0.0
    %2589 = vmatprep.subr.mxu0 0.0
    %2590 = vmatpush1.msra.mxu0 0.0
    %2591 = vmatprep.subr.mxu0 0.0
    %2592 = vmatpush1.msra.mxu0 0.0
    %2593 = vmatprep.subr.mxu0 0.0
    %2594 = vmatpush1.msra.mxu0 0.0
    %2595 = vmatprep.subr.mxu0 0.0
    %2596 = vmatpush1.msra.mxu0 0.0
    %2597 = vmatprep.subr.mxu0 0.0
    %2598 = vmatpush1.msra.mxu0 0.0
    %2599 = vmatprep.subr.mxu0 0.0
    %2600 = vmatpush1.msra.mxu0 0.0
    %2601 = vmatprep.subr.mxu0 0.0
    %2602 = vmatpush1.msra.mxu0 %v2573
    %2603 = vmatprep.subr.mxu0 0.0
    %2604 = vmatpush1.msra.mxu0 %v2572
    %2605 = vmatprep.subr.mxu0 0.0
    %2606 = vmatpush1.msra.mxu0 %v2571
    %2607 = vmatprep.subr.mxu0 0.0
    %2608 = vmatpush1.msra.mxu0 %v2570
    %2609 = vmatprep.subr.mxu0 0.0
    %2610 = vmatpush1.msra.mxu0 %v2569
    %2611 = vmatprep.subr.mxu0 0.0
    %2612 = vmatpush1.msra.mxu0 %v2568
    %2613 = vmatprep.subr.mxu0 0.0
    %2614 = vmatpush1.msra.mxu0 %v2567
    %2615 = vmatprep.subr.mxu0 0.0
    %2616 = vmatpush1.msra.mxu0 %v2566
    %2617 = vmatprep.subr.mxu0 0.0
    %2618 = vmatpush2.msra.mxu0 0.0
    %2619 = vmatprep.subr.mxu0 0.0
    %2620 = vmatpush2.msra.mxu0 0.0
    %2621 = vmatprep.subr.mxu0 0.0
    %2622 = vmatpush2.msra.mxu0 0.0
    %2623 = vmatprep.subr.mxu0 0.0
    %2624 = vmatpush2.msra.mxu0 0.0
    %2625 = vmatprep.subr.mxu0 0.0
    %2626 = vmatpush2.msra.mxu0 0.0
    %2627 = vmatprep.subr.mxu0 0.0
    %2628 = vmatpush2.msra.mxu0 0.0
    %2629 = vmatprep.subr.mxu0 0.0
    %2630 = vmatpush2.msra.mxu0 0.0
    %2631 = vmatprep.subr.mxu0 0.0
    %2632 = vmatpush2.msra.mxu0 0.0
    %2633 = vmatprep.subr.mxu0 0.0
    %2634 = vmatpush2.msra.mxu0 0.0
    %2635 = vmatprep.subr.mxu0 0.0
    %2636 = vmatpush2.msra.mxu0 0.0
    %2637 = vmatprep.subr.mxu0 0.0
    %2638 = vmatpush2.msra.mxu0 0.0
    %2639 = vmatprep.subr.mxu0 0.0
    %2640 = vmatpush2.msra.mxu0 0.0
    %2641 = vmatprep.subr.mxu0 0.0
    %2642 = vmatpush2.msra.mxu0 0.0
    %2643 = vmatprep.subr.mxu0 0.0
    %2644 = vmatpush2.msra.mxu0 0.0
    %2645 = vmatprep.subr.mxu0 0.0
    %2646 = vmatpush2.msra.mxu0 0.0
    %2647 = vmatprep.subr.mxu0 0.0
    %2648 = vmatpush2.msra.mxu0 0.0
    %2649 = vmatprep.mubr.f32.mxu0 0.0
    %2650 = vmatmul.mubr.f32.gmra.mxu0 %v2580
    %v2651 = vpop.f32.mrf.mxu0
    %v2652 = vadd.f32 %v2578, %v2651
    %v2653 = vpop.f32.mrf.mxu0
    %2654 = vmatprep.mubr.f32.mxu0 0.0
    %2655 = vmatmul.mubr.f32.gmra.mxu0 %v2583
    %v2656 = vpop.f32.mrf.mxu0
    %v2657 = vadd.f32 %v2578, %v2656
    %v2658 = vpop.f32.mrf.mxu0
    %2659 = vdwg.mxu0
    %v2660 = vadd.f32 %v2418, %v2652
    %v2661 = vadd.f32 %v2419, %v2657
    %2662 = vst.msk [vmem:[#allocation2] sm:$0xff] %vm37, %v2660
    %2663 = vst.msk [vmem:[#allocation2 + $0x8] sm:$0xff] %vm37, %v2661
    // Predicated region
    $region26: #{tpu_custom_call.1} parent=1 // pred_check
      _
    $region27: #{tpu_custom_call.1} parent=1 // pred_check_branch
      %2665 = sbr.rel (0) target = $region29
    $region28: #{tpu_custom_call.1} parent=1 // pred_region
      %s2667 = ssub.s32 256, 256
      %2668 = vsyncadd [#allocation3], %s2667
      %s2669 = sshll.u32 [#allocation2], 4
      %s2670 = int_to_ptr.vmem [resolvable:$true] %s2669
      %2675 = dma.vmem_to_hbm [thread:$0]  %s2670, 256, %s6, [#allocation3], 128, 128, 8
    $region29: #{tpu_custom_call.1} parent=1 // pred_fallthru
      _
    // Predicated region
    $region30: #{tpu_custom_call.1} parent=1 // pred_check
      _
    $region31: #{tpu_custom_call.1} parent=1 // pred_check_branch
      %2677 = sbr.rel (0) target = $region33
    $region32: #{tpu_custom_call.1} parent=1 // pred_region
      %2678 = dma.done [#allocation3], 256
    $region33: #{tpu_custom_call.1} parent=1 // pred_fallthru
      _
    %2679 = vsyncpa [#allocation3], 1

</llo_original>
